<compile_context>
chip_gen: v6e
topology: v6e:2x2x1
jax: 0.10.0
libtpu: 0.0.40
codegen_flags: <defaults>
</compile_context>

<pallas_src>
from functools import partial

import jax
import jax.numpy as jnp
from jax.experimental import pallas as pl
from jax.experimental.pallas import tpu as pltpu

INPUT_SIZE = 784
HIDDEN_SIZE = 500
HIDDEN_SIZE2 = 300
NUM_CLASSES = 10

# Lane-dense (multiple-of-128) padded dims used inside the kernel.
IN_PAD = 896    # 784 -> 896
H1_PAD = 512    # 500 -> 512
H2_PAD = 384    # 300 -> 384
OUT_PAD = 128   # 10  -> 128


def _round_up(n, m):
    return ((n + m - 1) // m) * m


def mlp_kernel(x_ref, w1_ref, b1_ref, w2_ref, b2_ref, w3_ref, b3_ref, o_ref):
    # fc1 + ReLU  (bf16 operands, f32 accumulation on the MXU; bias added in f32)
    h1 = jnp.dot(x_ref[...], w1_ref[...], preferred_element_type=jnp.float32)
    h1 = jnp.maximum(h1 + b1_ref[...], 0.0).astype(jnp.bfloat16)
    # fc2 + ReLU
    h2 = jnp.dot(h1, w2_ref[...], preferred_element_type=jnp.float32)
    h2 = jnp.maximum(h2 + b2_ref[...], 0.0).astype(jnp.bfloat16)
    # fc3 (logits into a lane-dense 128-wide block; no activation)
    out = jnp.dot(h2, w3_ref[...], preferred_element_type=jnp.float32)
    o_ref[...] = (out + b3_ref[...]).astype(o_ref.dtype)


def init_params(key):
    """Deterministic init mimicking PyTorch nn.Linear (uniform +/- 1/sqrt(fan_in)).
    Weights are stored as (in_features, out_features) — i.e. already transposed."""
    ks = jax.random.split(key, 6)

    def linear(kw, kb, fan_in, fan_out):
        bound = 1.0 / jnp.sqrt(fan_in)
        w = jax.random.uniform(kw, (fan_in, fan_out), jnp.float32, -bound, bound)
        b = jax.random.uniform(kb, (1, fan_out), jnp.float32, -bound, bound)
        return w, b

    w1, b1 = linear(ks[0], ks[1], INPUT_SIZE, HIDDEN_SIZE)
    w2, b2 = linear(ks[2], ks[3], HIDDEN_SIZE, HIDDEN_SIZE2)
    w3, b3 = linear(ks[4], ks[5], HIDDEN_SIZE2, NUM_CLASSES)
    return (w1, b1, w2, b2, w3, b3)


def prepare_params(params):
    """Zero-pad to lane-dense dims and cast weights to bf16. Do this ONCE, reuse per call."""
    w1, b1, w2, b2, w3, b3 = params

    def pad2(a, rows, cols):
        return jnp.pad(a, ((0, rows - a.shape[0]), (0, cols - a.shape[1])))

    w1p = pad2(w1, IN_PAD, H1_PAD).astype(jnp.bfloat16)
    w2p = pad2(w2, H1_PAD, H2_PAD).astype(jnp.bfloat16)
    w3p = pad2(w3, H2_PAD, OUT_PAD).astype(jnp.bfloat16)
    # Biases stay f32 — they add directly into the f32 accumulators.
    b1p = pad2(b1, 1, H1_PAD).astype(jnp.float32)
    b2p = pad2(b2, 1, H2_PAD).astype(jnp.float32)
    b3p = pad2(b3, 1, OUT_PAD).astype(jnp.float32)
    return (w1p, b1p, w2p, b2p, w3p, b3p)


@partial(jax.jit, static_argnames=("tile_b",))
def neural_net_forward(x, padded_params, *, tile_b=128):
    """3-layer MLP forward in one Pallas kernel, tiled over the batch axis."""
    w1, b1, w2, b2, w3, b3 = padded_params
    B = x.shape[0]

    # Effective batch tile: sublane-aligned (multiple of 8), no larger than the padded batch.
    tile_b_eff = min(tile_b, _round_up(B, 8))
    B_pad = _round_up(B, tile_b_eff)

    # Pad batch/feature axes with zeros and cast activations to bf16 (fused under jit).
    x_pad = jnp.pad(x, ((0, B_pad - B), (0, IN_PAD - x.shape[1]))).astype(jnp.bfloat16)

    grid = (B_pad // tile_b_eff,)

    full = lambda shape: pl.BlockSpec(shape, lambda i: (0,) * len(shape))

    flops = 2 * B_pad * (IN_PAD * H1_PAD + H1_PAD * H2_PAD + H2_PAD * OUT_PAD)
    bytes_accessed = (
        x_pad.size * x_pad.dtype.itemsize
        + sum(p.size * p.dtype.itemsize for p in padded_params)
        + B_pad * OUT_PAD * 4
    )

    out_padded = pl.pallas_call(
        mlp_kernel,
        out_shape=jax.ShapeDtypeStruct((B_pad, OUT_PAD), jnp.float32),
        grid_spec=pl.GridSpec(
            grid=grid,
            in_specs=[
                pl.BlockSpec((tile_b_eff, IN_PAD), lambda i: (i, 0)),
                full(w1.shape), full(b1.shape),
                full(w2.shape), full(b2.shape),
                full(w3.shape), full(b3.shape),
            ],
            out_specs=pl.BlockSpec((tile_b_eff, OUT_PAD), lambda i: (i, 0)),
        ),
        compiler_params=pltpu.CompilerParams(
            dimension_semantics=("parallel",),
        ),
        cost_estimate=pl.CostEstimate(
            flops=flops, transcendentals=0, bytes_accessed=bytes_accessed),
    )(x_pad, w1, b1, w2, b2, w3, b3)

    # Slice back to the logical (B, NUM_CLASSES) logits.
    return out_padded[:B, :NUM_CLASSES]


def reference_forward(x, params):
    """Pure-JAX f32 reference with original (unpadded) params — PyTorch semantics."""
    w1, b1, w2, b2, w3, b3 = params
    h1 = jnp.maximum(x @ w1 + b1, 0.0)
    h2 = jnp.maximum(h1 @ w2 + b2, 0.0)
    return h2 @ w3 + b3


if __name__ == "__main__":
    key = jax.random.PRNGKey(0)
    k_params, k_x = jax.random.split(key)

    params = init_params(k_params)       # f32 PyTorch-style params
    padded = prepare_params(params)      # bf16 + lane-dense padding (done once)

    batch = 200                          # exercises batch padding (200 -> 256) and a 2-step grid
    x = jax.random.normal(k_x, (batch, INPUT_SIZE), jnp.float32)

    out = neural_net_forward(x, padded, tile_b=128)
    out = jax.block_until_ready(out)

    ref = reference_forward(x, params)
    assert out.shape == (batch, NUM_CLASSES)
    # bf16 matmul operands (f32 accumulation) vs f32 reference -> loosened tolerance.
    err = float(jnp.max(jnp.abs(out - ref)))
    assert jnp.allclose(out, ref, atol=5e-2, rtol=5e-2), f"max abs err = {err}"

    print("KERNEL_OK")
</pallas_src>

<mosaic_0001>
module attributes {stable_mosaic.version = 11 : i64} {
  func.func @mlp_kernel(%arg0: i32, %arg1: memref<128x896xbf16, #tpu.memory_space<vmem>>, %arg2: memref<896x512xbf16, #tpu.memory_space<vmem>>, %arg3: memref<1x512xf32, #tpu.memory_space<vmem>>, %arg4: memref<512x384xbf16, #tpu.memory_space<vmem>>, %arg5: memref<1x384xf32, #tpu.memory_space<vmem>>, %arg6: memref<384x128xbf16, #tpu.memory_space<vmem>>, %arg7: memref<1x128xf32, #tpu.memory_space<vmem>>, %arg8: memref<128x128xf32, #tpu.memory_space<vmem>>) attributes {dimension_semantics = [#tpu.dimension_semantics<parallel>], iteration_bounds = array<i64: 2>, scalar_prefetch = 0 : i64, scratch_operands = 0 : i64, tpu.core_type = #tpu.core_type<tc>, window_params = [{transform_indices = @transform_0, window_bounds = array<i64: 128, 896>}, {pipeline_mode = #tpu.pipeline_mode<synchronous>, transform_indices = @transform_1, window_bounds = array<i64: 896, 512>}, {pipeline_mode = #tpu.pipeline_mode<synchronous>, transform_indices = @transform_2, window_bounds = array<i64: 1, 512>}, {pipeline_mode = #tpu.pipeline_mode<synchronous>, transform_indices = @transform_3, window_bounds = array<i64: 512, 384>}, {pipeline_mode = #tpu.pipeline_mode<synchronous>, transform_indices = @transform_4, window_bounds = array<i64: 1, 384>}, {pipeline_mode = #tpu.pipeline_mode<synchronous>, transform_indices = @transform_5, window_bounds = array<i64: 384, 128>}, {pipeline_mode = #tpu.pipeline_mode<synchronous>, transform_indices = @transform_6, window_bounds = array<i64: 1, 128>}, {transform_indices = @transform_7, window_bounds = array<i64: 128, 128>}]} {
    %c0 = arith.constant 0 : index
    %c0_0 = arith.constant 0 : index
    %0 = vector.load %arg1[%c0, %c0_0] : memref<128x896xbf16, #tpu.memory_space<vmem>>, vector<128x896xbf16>
    %c0_1 = arith.constant 0 : index
    %c0_2 = arith.constant 0 : index
    %1 = vector.load %arg2[%c0_1, %c0_2] : memref<896x512xbf16, #tpu.memory_space<vmem>>, vector<896x512xbf16>
    %cst = arith.constant dense<0.000000e+00> : vector<128x512xf32>
    %2 = tpu.matmul %0, %1, %cst {dimension_numbers = #tpu.dot_dimension_numbers<[1], [0], [0], [1], [0, 0, 1, 1], [], []>} : vector<128x896xbf16>, vector<896x512xbf16>, vector<128x512xf32> -> vector<128x512xf32>
    %c0_3 = arith.constant 0 : index
    %c0_4 = arith.constant 0 : index
    %3 = vector.load %arg3[%c0_3, %c0_4] : memref<1x512xf32, #tpu.memory_space<vmem>>, vector<1x512xf32>
    %4 = vector.broadcast %3 : vector<1x512xf32> to vector<128x512xf32>
    %5 = arith.addf %2, %4 : vector<128x512xf32>
    %cst_5 = arith.constant 0.000000e+00 : f32
    %6 = vector.broadcast %cst_5 : f32 to vector<128x512xf32>
    %7 = arith.maximumf %5, %6 : vector<128x512xf32>
    %8 = arith.truncf %7 : vector<128x512xf32> to vector<128x512xbf16>
    %c0_6 = arith.constant 0 : index
    %c0_7 = arith.constant 0 : index
    %9 = vector.load %arg4[%c0_6, %c0_7] : memref<512x384xbf16, #tpu.memory_space<vmem>>, vector<512x384xbf16>
    %cst_8 = arith.constant dense<0.000000e+00> : vector<128x384xf32>
    %10 = tpu.matmul %8, %9, %cst_8 {dimension_numbers = #tpu.dot_dimension_numbers<[1], [0], [0], [1], [0, 0, 1, 1], [], []>} : vector<128x512xbf16>, vector<512x384xbf16>, vector<128x384xf32> -> vector<128x384xf32>
    %c0_9 = arith.constant 0 : index
    %c0_10 = arith.constant 0 : index
    %11 = vector.load %arg5[%c0_9, %c0_10] : memref<1x384xf32, #tpu.memory_space<vmem>>, vector<1x384xf32>
    %12 = vector.broadcast %11 : vector<1x384xf32> to vector<128x384xf32>
    %13 = arith.addf %10, %12 : vector<128x384xf32>
    %cst_11 = arith.constant 0.000000e+00 : f32
    %14 = vector.broadcast %cst_11 : f32 to vector<128x384xf32>
    %15 = arith.maximumf %13, %14 : vector<128x384xf32>
    %16 = arith.truncf %15 : vector<128x384xf32> to vector<128x384xbf16>
    %c0_12 = arith.constant 0 : index
    %c0_13 = arith.constant 0 : index
    %17 = vector.load %arg6[%c0_12, %c0_13] : memref<384x128xbf16, #tpu.memory_space<vmem>>, vector<384x128xbf16>
    %cst_14 = arith.constant dense<0.000000e+00> : vector<128x128xf32>
    %18 = tpu.matmul %16, %17, %cst_14 {dimension_numbers = #tpu.dot_dimension_numbers<[1], [0], [0], [1], [0, 0, 1, 1], [], []>} : vector<128x384xbf16>, vector<384x128xbf16>, vector<128x128xf32> -> vector<128x128xf32>
    %c0_15 = arith.constant 0 : index
    %c0_16 = arith.constant 0 : index
    %19 = vector.load %arg7[%c0_15, %c0_16] : memref<1x128xf32, #tpu.memory_space<vmem>>, vector<1x128xf32>
    %20 = vector.broadcast %19 : vector<1x128xf32> to vector<128x128xf32>
    %21 = arith.addf %18, %20 : vector<128x128xf32>
    %c0_17 = arith.constant 0 : index
    %c0_18 = arith.constant 0 : index
    %22 = vector.load %arg8[%c0_17, %c0_18] : memref<128x128xf32, #tpu.memory_space<vmem>>, vector<128x128xf32>
    tpu.vector_store %arg8[%c0_17, %c0_18], %21 {strides = array<i32>} : memref<128x128xf32, #tpu.memory_space<vmem>>, vector<128x128xf32>,
    return
  }
  func.func @transform_0(%arg0: i32) -> (i32, i32) {
    %c0_i32 = arith.constant 0 : i32
    %c0_i32_0 = arith.constant 0 : i32
    return %arg0, %c0_i32 : i32, i32
  }
  func.func @transform_1(%arg0: i32) -> (i32, i32) {
    %c0_i32 = arith.constant 0 : i32
    %c0_i32_0 = arith.constant 0 : i32
    %c0_i32_1 = arith.constant 0 : i32
    return %c0_i32, %c0_i32_0 : i32, i32
  }
  func.func @transform_2(%arg0: i32) -> (i32, i32) {
    %c0_i32 = arith.constant 0 : i32
    %c0_i32_0 = arith.constant 0 : i32
    %c0_i32_1 = arith.constant 0 : i32
    return %c0_i32, %c0_i32_0 : i32, i32
  }
  func.func @transform_3(%arg0: i32) -> (i32, i32) {
    %c0_i32 = arith.constant 0 : i32
    %c0_i32_0 = arith.constant 0 : i32
    %c0_i32_1 = arith.constant 0 : i32
    return %c0_i32, %c0_i32_0 : i32, i32
  }
  func.func @transform_4(%arg0: i32) -> (i32, i32) {
    %c0_i32 = arith.constant 0 : i32
    %c0_i32_0 = arith.constant 0 : i32
    %c0_i32_1 = arith.constant 0 : i32
    return %c0_i32, %c0_i32_0 : i32, i32
  }
  func.func @transform_5(%arg0: i32) -> (i32, i32) {
    %c0_i32 = arith.constant 0 : i32
    %c0_i32_0 = arith.constant 0 : i32
    %c0_i32_1 = arith.constant 0 : i32
    return %c0_i32, %c0_i32_0 : i32, i32
  }
  func.func @transform_6(%arg0: i32) -> (i32, i32) {
    %c0_i32 = arith.constant 0 : i32
    %c0_i32_0 = arith.constant 0 : i32
    %c0_i32_1 = arith.constant 0 : i32
    return %c0_i32, %c0_i32_0 : i32, i32
  }
  func.func @transform_7(%arg0: i32) -> (i32, i32) {
    %c0_i32 = arith.constant 0 : i32
    %c0_i32_0 = arith.constant 0 : i32
    return %arg0, %c0_i32 : i32, i32
  }
}

</mosaic_0001>

<llo_original>
// kernel: neural_net_forward.1
$region0: #{neural_net_forward.1}
  #allocation0 [shape = 'u32[]', space=smem, size = 0x4, offset = 0x4, fixed_abs, tag = 'smem constant byte address 0x4 - core index']
  #allocation1 [shape = 'u32[144,128]{1,0:T(1,128)}', space=vmem, size = 0x12000, scoped, tag = 'internal scratch']
  %s0 = inlined_call_operand.vmem [shape: bf16[256,896], index: 0, kind: input, shape index: {}]
  %s1 = inlined_call_operand.vmem [shape: bf16[896,512], index: 1, kind: input, shape index: {}]
  %s2 = inlined_call_operand.vmem [shape: f32[1,512], index: 2, kind: input, shape index: {}]
  %s3 = inlined_call_operand.vmem [shape: bf16[512,384], index: 3, kind: input, shape index: {}]
  %s4 = inlined_call_operand.vmem [shape: f32[1,384], index: 4, kind: input, shape index: {}]
  %s5 = inlined_call_operand.vmem [shape: bf16[384,128], index: 5, kind: input, shape index: {}]
  %s6 = inlined_call_operand.vmem [shape: f32[1,128], index: 6, kind: input, shape index: {}]
  %s7 = inlined_call_operand.vmem [shape: f32[256,128], index: 7, kind: output, shape index: {}]
  %s8 = sld [smem:[#allocation0]]
  $region61: #{neural_net_forward.1} parent=0
    _
  %s10 = ssub.s32 1, %s8
  %s11 = scalar_select 0, %s10, %s8
  loop: start=0, step=1, limit=4
  $region2: #{neural_net_forward.1} parent=0 // loop_pre_header
    _
  $region3: #{neural_net_forward.1} parent=0 // loop_header
    %s13 = sphi 0, %s17
    %p14 = scmp.ge.s32.totalorder %s13, 4
    %s23 = sphi 0, %s25
    %s26 = sphi 0, %s23
    %s27 = sphi 0, %s26
    %s43 = sphi 0, %s27
    %s47 = sphi 0, %s47
    %s49 = sphi 0, %s47
    %s50 = sphi 0, %s49
    %s64 = sphi 0, %s50
    %s68 = sphi 0, %s68
    %s70 = sphi 0, %s68
    %s71 = sphi 0, %s70
    %s85 = sphi 0, %s71
    %s89 = sphi 0, %s89
    %s91 = sphi 0, %s89
    %s92 = sphi 0, %s91
    %s106 = sphi 0, %s92
    %s110 = sphi 0, %s110
    %s112 = sphi 0, %s110
    %s113 = sphi 0, %s112
    %s127 = sphi 0, %s113
    %s131 = sphi 0, %s131
    %s133 = sphi 0, %s131
    %s134 = sphi 0, %s133
    %s148 = sphi 0, %s134
    %s152 = sphi 0, %s152
    %s154 = sphi 0, %s152
    %s155 = sphi 0, %s154
    %s169 = sphi 0, %s155
    %s175 = sphi 0, %s177
    %s178 = sphi 0, %s175
    %s179 = sphi 0, %s178
    %s195 = sphi 0, %s179
  $region4: #{neural_net_forward.1} parent=0 // loop_header_branch
    %16 = sbr.rel (%p14) target = $region8
  $region5: #{neural_net_forward.1} parent=0 // loop_body
    %s18 = ssub.s32 %s13, 1
    %s19 = ssub.s32 %s13, 2
    %s20 = sadd.s32 %s13, 1
    %s21 = ssub.s32 %s13, %s20
    %p22 = scmp.eq.s32.totalorder %s21, 0
    %s24 = sadd.s32 %s23, 1
    %s25 = scalar_select %p22, %s23, %s24
    %p28 = pneg %p22
    %p29 = scmp.eq.s32.totalorder %s13, 1
    %p30 = por %p28, %p29
    %p31 = scmp.ne.s32.totalorder %s23, %s26
    %p32 = scmp.eq.s32.totalorder %s13, 0
    %p33 = por %p31, %p32
    %p34 = scmp.ne.s32.totalorder %s23, %s26
    %p35 = scmp.eq.s32.totalorder %s18, 1
    %p36 = por %p34, %p35
    %p37 = scmp.ne.s32.totalorder %s26, %s27
    %p38 = scmp.eq.s32.totalorder %s18, 0
    %p39 = por %p37, %p38
    %p40 = scmp.ne.s32.totalorder %s26, %s27
    %p41 = scmp.eq.s32.totalorder %s19, 1
    %p42 = por %p40, %p41
    %p44 = scmp.ne.s32.totalorder %s27, %s43
    %p45 = scmp.eq.s32.totalorder %s19, 0
    %p46 = por %p44, %p45
    %s48 = sadd.s32 %s47, 1
    %p51 = scmp.eq.s32.totalorder %s13, 1
    %p52 = scmp.ne.s32.totalorder %s47, %s49
    %p53 = scmp.eq.s32.totalorder %s13, 0
    %p54 = por %p52, %p53
    %p55 = scmp.ne.s32.totalorder %s47, %s49
    %p56 = scmp.eq.s32.totalorder %s18, 1
    %p57 = por %p55, %p56
    %p58 = scmp.ne.s32.totalorder %s49, %s50
    %p59 = scmp.eq.s32.totalorder %s18, 0
    %p60 = por %p58, %p59
    %p61 = scmp.ne.s32.totalorder %s49, %s50
    %p62 = scmp.eq.s32.totalorder %s19, 1
    %p63 = por %p61, %p62
    %p65 = scmp.ne.s32.totalorder %s50, %s64
    %p66 = scmp.eq.s32.totalorder %s19, 0
    %p67 = por %p65, %p66
    %s69 = sadd.s32 %s68, 1
    %p72 = scmp.eq.s32.totalorder %s13, 1
    %p73 = scmp.ne.s32.totalorder %s68, %s70
    %p74 = scmp.eq.s32.totalorder %s13, 0
    %p75 = por %p73, %p74
    %p76 = scmp.ne.s32.totalorder %s68, %s70
    %p77 = scmp.eq.s32.totalorder %s18, 1
    %p78 = por %p76, %p77
    %p79 = scmp.ne.s32.totalorder %s70, %s71
    %p80 = scmp.eq.s32.totalorder %s18, 0
    %p81 = por %p79, %p80
    %p82 = scmp.ne.s32.totalorder %s70, %s71
    %p83 = scmp.eq.s32.totalorder %s19, 1
    %p84 = por %p82, %p83
    %p86 = scmp.ne.s32.totalorder %s71, %s85
    %p87 = scmp.eq.s32.totalorder %s19, 0
    %p88 = por %p86, %p87
    %s90 = sadd.s32 %s89, 1
    %p93 = scmp.eq.s32.totalorder %s13, 1
    %p94 = scmp.ne.s32.totalorder %s89, %s91
    %p95 = scmp.eq.s32.totalorder %s13, 0
    %p96 = por %p94, %p95
    %p97 = scmp.ne.s32.totalorder %s89, %s91
    %p98 = scmp.eq.s32.totalorder %s18, 1
    %p99 = por %p97, %p98
    %p100 = scmp.ne.s32.totalorder %s91, %s92
    %p101 = scmp.eq.s32.totalorder %s18, 0
    %p102 = por %p100, %p101
    %p103 = scmp.ne.s32.totalorder %s91, %s92
    %p104 = scmp.eq.s32.totalorder %s19, 1
    %p105 = por %p103, %p104
    %p107 = scmp.ne.s32.totalorder %s92, %s106
    %p108 = scmp.eq.s32.totalorder %s19, 0
    %p109 = por %p107, %p108
    %s111 = sadd.s32 %s110, 1
    %p114 = scmp.eq.s32.totalorder %s13, 1
    %p115 = scmp.ne.s32.totalorder %s110, %s112
    %p116 = scmp.eq.s32.totalorder %s13, 0
    %p117 = por %p115, %p116
    %p118 = scmp.ne.s32.totalorder %s110, %s112
    %p119 = scmp.eq.s32.totalorder %s18, 1
    %p120 = por %p118, %p119
    %p121 = scmp.ne.s32.totalorder %s112, %s113
    %p122 = scmp.eq.s32.totalorder %s18, 0
    %p123 = por %p121, %p122
    %p124 = scmp.ne.s32.totalorder %s112, %s113
    %p125 = scmp.eq.s32.totalorder %s19, 1
    %p126 = por %p124, %p125
    %p128 = scmp.ne.s32.totalorder %s113, %s127
    %p129 = scmp.eq.s32.totalorder %s19, 0
    %p130 = por %p128, %p129
    %s132 = sadd.s32 %s131, 1
    %p135 = scmp.eq.s32.totalorder %s13, 1
    %p136 = scmp.ne.s32.totalorder %s131, %s133
    %p137 = scmp.eq.s32.totalorder %s13, 0
    %p138 = por %p136, %p137
    %p139 = scmp.ne.s32.totalorder %s131, %s133
    %p140 = scmp.eq.s32.totalorder %s18, 1
    %p141 = por %p139, %p140
    %p142 = scmp.ne.s32.totalorder %s133, %s134
    %p143 = scmp.eq.s32.totalorder %s18, 0
    %p144 = por %p142, %p143
    %p145 = scmp.ne.s32.totalorder %s133, %s134
    %p146 = scmp.eq.s32.totalorder %s19, 1
    %p147 = por %p145, %p146
    %p149 = scmp.ne.s32.totalorder %s134, %s148
    %p150 = scmp.eq.s32.totalorder %s19, 0
    %p151 = por %p149, %p150
    %s153 = sadd.s32 %s152, 1
    %p156 = scmp.eq.s32.totalorder %s13, 1
    %p157 = scmp.ne.s32.totalorder %s152, %s154
    %p158 = scmp.eq.s32.totalorder %s13, 0
    %p159 = por %p157, %p158
    %p160 = scmp.ne.s32.totalorder %s152, %s154
    %p161 = scmp.eq.s32.totalorder %s18, 1
    %p162 = por %p160, %p161
    %p163 = scmp.ne.s32.totalorder %s154, %s155
    %p164 = scmp.eq.s32.totalorder %s18, 0
    %p165 = por %p163, %p164
    %p166 = scmp.ne.s32.totalorder %s154, %s155
    %p167 = scmp.eq.s32.totalorder %s19, 1
    %p168 = por %p166, %p167
    %p170 = scmp.ne.s32.totalorder %s155, %s169
    %p171 = scmp.eq.s32.totalorder %s19, 0
    %p172 = por %p170, %p171
    %s173 = ssub.s32 %s13, %s20
    %p174 = scmp.eq.s32.totalorder %s173, 0
    %s176 = sadd.s32 %s175, 1
    %s177 = scalar_select %p174, %s175, %s176
    %p180 = pneg %p174
    %p181 = scmp.eq.s32.totalorder %s13, 1
    %p182 = por %p180, %p181
    %p183 = scmp.ne.s32.totalorder %s175, %s178
    %p184 = scmp.eq.s32.totalorder %s13, 0
    %p185 = por %p183, %p184
    %p186 = scmp.ne.s32.totalorder %s175, %s178
    %p187 = scmp.eq.s32.totalorder %s18, 1
    %p188 = por %p186, %p187
    %p189 = scmp.ne.s32.totalorder %s178, %s179
    %p190 = scmp.eq.s32.totalorder %s18, 0
    %p191 = por %p189, %p190
    %p192 = scmp.ne.s32.totalorder %s178, %s179
    %p193 = scmp.eq.s32.totalorder %s19, 1
    %p194 = por %p192, %p193
    %p196 = scmp.ne.s32.totalorder %s179, %s195
    %p197 = scmp.eq.s32.totalorder %s19, 0
    %p198 = por %p196, %p197
    %p199 = scmp.le.s32.totalorder 1, %s13
    %p200 = scmp.lt.s32.totalorder %s13, 3
    %p201 = pnand %p199, %p200
    %p202 = pneg %p201
    // Predicated region
    $region9: #{neural_net_forward.1} parent=5 // pred_check
      _
    $region10: #{neural_net_forward.1} parent=5 // pred_check_branch
      %204 = sbr.rel (%p201) target = $region12
    $region11: #{neural_net_forward.1} parent=5 // pred_region
      %s205 = ssub.s32 %s13, 1
      // Predicated region
      $region13: #{neural_net_forward.1} parent=11 // pred_check
        %p206 = pneg %p60
      $region14: #{neural_net_forward.1} parent=11 // pred_check_branch
        %208 = sbr.rel (%p206) target = $region16
      $region15: #{neural_net_forward.1} parent=11 // pred_region
        _
      $region16: #{neural_net_forward.1} parent=11 // pred_fallthru
        _
      // Predicated region
      $region17: #{neural_net_forward.1} parent=11 // pred_check
        %p209 = pneg %p81
      $region18: #{neural_net_forward.1} parent=11 // pred_check_branch
        %211 = sbr.rel (%p209) target = $region20
      $region19: #{neural_net_forward.1} parent=11 // pred_region
        _
      $region20: #{neural_net_forward.1} parent=11 // pred_fallthru
        _
      // Predicated region
      $region21: #{neural_net_forward.1} parent=11 // pred_check
        %p212 = pneg %p102
      $region22: #{neural_net_forward.1} parent=11 // pred_check_branch
        %214 = sbr.rel (%p212) target = $region24
      $region23: #{neural_net_forward.1} parent=11 // pred_region
        _
      $region24: #{neural_net_forward.1} parent=11 // pred_fallthru
        _
      // Predicated region
      $region25: #{neural_net_forward.1} parent=11 // pred_check
        %p215 = pneg %p123
      $region26: #{neural_net_forward.1} parent=11 // pred_check_branch
        %217 = sbr.rel (%p215) target = $region28
      $region27: #{neural_net_forward.1} parent=11 // pred_region
        _
      $region28: #{neural_net_forward.1} parent=11 // pred_fallthru
        _
      // Predicated region
      $region29: #{neural_net_forward.1} parent=11 // pred_check
        %p218 = pneg %p144
      $region30: #{neural_net_forward.1} parent=11 // pred_check_branch
        %220 = sbr.rel (%p218) target = $region32
      $region31: #{neural_net_forward.1} parent=11 // pred_region
        _
      $region32: #{neural_net_forward.1} parent=11 // pred_fallthru
        _
      // Predicated region
      $region33: #{neural_net_forward.1} parent=11 // pred_check
        %p221 = pneg %p165
      $region34: #{neural_net_forward.1} parent=11 // pred_check_branch
        %223 = sbr.rel (%p221) target = $region36
      $region35: #{neural_net_forward.1} parent=11 // pred_region
        _
      $region36: #{neural_net_forward.1} parent=11 // pred_fallthru
        _
    $region12: #{neural_net_forward.1} parent=5 // pred_fallthru
      _
    %p224 = scmp.lt.s32.totalorder %s13, 2
    // Predicated region
    $region37: #{neural_net_forward.1} parent=5 // pred_check
      %p225 = pneg %p224
    $region38: #{neural_net_forward.1} parent=5 // pred_check_branch
      %227 = sbr.rel (%p225) target = $region40
    $region39: #{neural_net_forward.1} parent=5 // pred_region
      // Predicated region
      $region41: #{neural_net_forward.1} parent=39 // pred_check
        %p228 = pneg %p33
      $region42: #{neural_net_forward.1} parent=39 // pred_check_branch
        %230 = sbr.rel (%p228) target = $region44
      $region43: #{neural_net_forward.1} parent=39 // pred_region
        %s231 = smul.u32 16, %s13
        %p232 = scmp.lt.s32.totalorder %s231, 31
        %s233 = scalar_select %p232, %s231, 31
        %s234 = smul.addr %s233, 7
        %s235 = smul.addr %s234, 4
        %s236 = scalar_lea.vmem %s0, %s235
        %s237 = smul.u32 16, %s13
      $region44: #{neural_net_forward.1} parent=39 // pred_fallthru
        _
    $region40: #{neural_net_forward.1} parent=5 // pred_fallthru
      _
    %p238 = scmp.le.s32.totalorder 1, %s13
    %p239 = scmp.lt.s32.totalorder %s13, 3
    %p240 = pnand %p238, %p239
    %p241 = pneg %p240
    // Predicated region
    $region45: #{neural_net_forward.1} parent=5 // pred_check
      _
    $region46: #{neural_net_forward.1} parent=5 // pred_check_branch
      %243 = sbr.rel (%p240) target = $region48
    $region47: #{neural_net_forward.1} parent=5 // pred_region
      %s244 = ssub.s32 %s13, 1
      %s245 = smul.u32 16, %s18
      %p246 = scmp.lt.s32.totalorder %s245, 31
      %s247 = scalar_select %p246, %s245, 31
      %s248 = smul.addr %s247, 7
      %s249 = smul.addr %s248, 4
      %s250 = scalar_lea.vmem %s0, %s249
      %p251 = pneg %p39
      %p252 = pneg %p36
      %p253 = pneg %p60
      %p254 = pneg %p57
      %p255 = pneg %p81
      %p256 = pneg %p78
      %p257 = pneg %p102
      %p258 = pneg %p99
      %p259 = pneg %p123
      %p260 = pneg %p120
      %p261 = pneg %p144
      %p262 = pneg %p141
      %p263 = pneg %p165
      %p264 = pneg %p162
      %p265 = pneg %p191
      %p266 = pneg %p188
      %s267 = smul.u32 16, %s18
      %p268 = scmp.lt.s32.totalorder %s267, 31
      %s269 = scalar_select %p268, %s267, 31
      %s270 = smul.addr %s269, 8
      %s271 = scalar_lea.vmem %s7, %s270
      %s272 = smul.u32 16, %s18
      %p273 = scmp.lt.s32.totalorder %s272, 31
      %s274 = scalar_select %p273, %s272, 31
      %s275 = smul.addr %s274, 7
      %s276 = smul.addr %s275, 4
      %s277 = scalar_lea.vmem %s0, %s276
      %s278 = smul.u32 16, %s18
      %s279 = smul.u32 16, %s18
      %p280 = scmp.lt.s32.totalorder %s279, 31
      %s281 = scalar_select %p280, %s279, 31
      %s282 = smul.addr %s281, 8
      %s283 = scalar_lea.vmem %s7, %s282
      %s284 = smul.u32 16, %s18
      %v286 = vld [vmem:[%s277] sm:$0xff]
      %v287 = vld [vmem:[%s277 + $0x8] sm:$0xff]
      %v288 = vld [vmem:[%s277 + $0x10] sm:$0xff]
      %v289 = vld [vmem:[%s277 + $0x18] sm:$0xf]
      %v290 = vld [vmem:[%s277 + $0x1c] sm:$0xff]
      %v291 = vld [vmem:[%s277 + $0x24] sm:$0xff]
      %v292 = vld [vmem:[%s277 + $0x2c] sm:$0xff]
      %v293 = vld [vmem:[%s277 + $0x34] sm:$0xf]
      %v294 = vld [vmem:[%s277 + $0x38] sm:$0xff]
      %v295 = vld [vmem:[%s277 + $0x40] sm:$0xff]
      %v296 = vld [vmem:[%s277 + $0x48] sm:$0xff]
      %v297 = vld [vmem:[%s277 + $0x50] sm:$0xf]
      %v298 = vld [vmem:[%s277 + $0x54] sm:$0xff]
      %v299 = vld [vmem:[%s277 + $0x5c] sm:$0xff]
      %v300 = vld [vmem:[%s277 + $0x64] sm:$0xff]
      %v301 = vld [vmem:[%s277 + $0x6c] sm:$0xf]
      %v302 = vld [vmem:[%s277 + $0x70] sm:$0xff]
      %v303 = vld [vmem:[%s277 + $0x78] sm:$0xff]
      %v304 = vld [vmem:[%s277 + $0x80] sm:$0xff]
      %v305 = vld [vmem:[%s277 + $0x88] sm:$0xf]
      %v306 = vld [vmem:[%s277 + $0x8c] sm:$0xff]
      %v307 = vld [vmem:[%s277 + $0x94] sm:$0xff]
      %v308 = vld [vmem:[%s277 + $0x9c] sm:$0xff]
      %v309 = vld [vmem:[%s277 + $0xa4] sm:$0xf]
      %v310 = vld [vmem:[%s277 + $0xa8] sm:$0xff]
      %v311 = vld [vmem:[%s277 + $0xb0] sm:$0xff]
      %v312 = vld [vmem:[%s277 + $0xb8] sm:$0xff]
      %v313 = vld [vmem:[%s277 + $0xc0] sm:$0xf]
      %v314 = vld [vmem:[%s277 + $0xc4] sm:$0xff]
      %v315 = vld [vmem:[%s277 + $0xcc] sm:$0xff]
      %v316 = vld [vmem:[%s277 + $0xd4] sm:$0xff]
      %v317 = vld [vmem:[%s277 + $0xdc] sm:$0xf]
      %v318 = vld [vmem:[%s277 + $0xe0] sm:$0xff]
      %v319 = vld [vmem:[%s277 + $0xe8] sm:$0xff]
      %v320 = vld [vmem:[%s277 + $0xf0] sm:$0xff]
      %v321 = vld [vmem:[%s277 + $0xf8] sm:$0xf]
      %v322 = vld [vmem:[%s277 + $0xfc] sm:$0xff]
      %v323 = vld [vmem:[%s277 + $0x104] sm:$0xff]
      %v324 = vld [vmem:[%s277 + $0x10c] sm:$0xff]
      %v325 = vld [vmem:[%s277 + $0x114] sm:$0xf]
      %v326 = vld [vmem:[%s277 + $0x118] sm:$0xff]
      %v327 = vld [vmem:[%s277 + $0x120] sm:$0xff]
      %v328 = vld [vmem:[%s277 + $0x128] sm:$0xff]
      %v329 = vld [vmem:[%s277 + $0x130] sm:$0xf]
      %v330 = vld [vmem:[%s277 + $0x134] sm:$0xff]
      %v331 = vld [vmem:[%s277 + $0x13c] sm:$0xff]
      %v332 = vld [vmem:[%s277 + $0x144] sm:$0xff]
      %v333 = vld [vmem:[%s277 + $0x14c] sm:$0xf]
      %v334 = vld [vmem:[%s277 + $0x150] sm:$0xff]
      %v335 = vld [vmem:[%s277 + $0x158] sm:$0xff]
      %v336 = vld [vmem:[%s277 + $0x160] sm:$0xff]
      %v337 = vld [vmem:[%s277 + $0x168] sm:$0xf]
      %v338 = vld [vmem:[%s277 + $0x16c] sm:$0xff]
      %v339 = vld [vmem:[%s277 + $0x174] sm:$0xff]
      %v340 = vld [vmem:[%s277 + $0x17c] sm:$0xff]
      %v341 = vld [vmem:[%s277 + $0x184] sm:$0xf]
      %v342 = vld [vmem:[%s277 + $0x188] sm:$0xff]
      %v343 = vld [vmem:[%s277 + $0x190] sm:$0xff]
      %v344 = vld [vmem:[%s277 + $0x198] sm:$0xff]
      %v345 = vld [vmem:[%s277 + $0x1a0] sm:$0xf]
      %v346 = vld [vmem:[%s277 + $0x1a4] sm:$0xff]
      %v347 = vld [vmem:[%s277 + $0x1ac] sm:$0xff]
      %v348 = vld [vmem:[%s277 + $0x1b4] sm:$0xff]
      %v349 = vld [vmem:[%s277 + $0x1bc] sm:$0xf]
      %v350 = vld [vmem:[%s1] sm:$0xff]
      %v351 = vld [vmem:[%s1 + $0x8] sm:$0xff]
      %v352 = vld [vmem:[%s1 + $0x10] sm:$0xff]
      %v353 = vld [vmem:[%s1 + $0x18] sm:$0xff]
      %v354 = vld [vmem:[%s1 + $0x20] sm:$0xff]
      %v355 = vld [vmem:[%s1 + $0x28] sm:$0xff]
      %v356 = vld [vmem:[%s1 + $0x30] sm:$0xff]
      %v357 = vld [vmem:[%s1 + $0x38] sm:$0xff]
      %v358 = vld [vmem:[%s1 + $0x40] sm:$0xff]
      %v359 = vld [vmem:[%s1 + $0x48] sm:$0xff]
      %v360 = vld [vmem:[%s1 + $0x50] sm:$0xff]
      %v361 = vld [vmem:[%s1 + $0x58] sm:$0xff]
      %v362 = vld [vmem:[%s1 + $0x60] sm:$0xff]
      %v363 = vld [vmem:[%s1 + $0x68] sm:$0xff]
      %v364 = vld [vmem:[%s1 + $0x70] sm:$0xff]
      %v365 = vld [vmem:[%s1 + $0x78] sm:$0xff]
      %v366 = vld [vmem:[%s1 + $0x80] sm:$0xff]
      %v367 = vld [vmem:[%s1 + $0x88] sm:$0xff]
      %v368 = vld [vmem:[%s1 + $0x90] sm:$0xff]
      %v369 = vld [vmem:[%s1 + $0x98] sm:$0xff]
      %v370 = vld [vmem:[%s1 + $0xa0] sm:$0xff]
      %v371 = vld [vmem:[%s1 + $0xa8] sm:$0xff]
      %v372 = vld [vmem:[%s1 + $0xb0] sm:$0xff]
      %v373 = vld [vmem:[%s1 + $0xb8] sm:$0xff]
      %v374 = vld [vmem:[%s1 + $0xc0] sm:$0xff]
      %v375 = vld [vmem:[%s1 + $0xc8] sm:$0xff]
      %v376 = vld [vmem:[%s1 + $0xd0] sm:$0xff]
      %v377 = vld [vmem:[%s1 + $0xd8] sm:$0xff]
      %v378 = vld [vmem:[%s1 + $0xe0] sm:$0xff]
      %v379 = vld [vmem:[%s1 + $0xe8] sm:$0xff]
      %v380 = vld [vmem:[%s1 + $0xf0] sm:$0xff]
      %v381 = vld [vmem:[%s1 + $0xf8] sm:$0xff]
      %v382 = vld [vmem:[%s1 + $0x100] sm:$0xff]
      %v383 = vld [vmem:[%s1 + $0x108] sm:$0xff]
      %v384 = vld [vmem:[%s1 + $0x110] sm:$0xff]
      %v385 = vld [vmem:[%s1 + $0x118] sm:$0xff]
      %v386 = vld [vmem:[%s1 + $0x120] sm:$0xff]
      %v387 = vld [vmem:[%s1 + $0x128] sm:$0xff]
      %v388 = vld [vmem:[%s1 + $0x130] sm:$0xff]
      %v389 = vld [vmem:[%s1 + $0x138] sm:$0xff]
      %v390 = vld [vmem:[%s1 + $0x140] sm:$0xff]
      %v391 = vld [vmem:[%s1 + $0x148] sm:$0xff]
      %v392 = vld [vmem:[%s1 + $0x150] sm:$0xff]
      %v393 = vld [vmem:[%s1 + $0x158] sm:$0xff]
      %v394 = vld [vmem:[%s1 + $0x160] sm:$0xff]
      %v395 = vld [vmem:[%s1 + $0x168] sm:$0xff]
      %v396 = vld [vmem:[%s1 + $0x170] sm:$0xff]
      %v397 = vld [vmem:[%s1 + $0x178] sm:$0xff]
      %v398 = vld [vmem:[%s1 + $0x180] sm:$0xff]
      %v399 = vld [vmem:[%s1 + $0x188] sm:$0xff]
      %v400 = vld [vmem:[%s1 + $0x190] sm:$0xff]
      %v401 = vld [vmem:[%s1 + $0x198] sm:$0xff]
      %v402 = vld [vmem:[%s1 + $0x1a0] sm:$0xff]
      %v403 = vld [vmem:[%s1 + $0x1a8] sm:$0xff]
      %v404 = vld [vmem:[%s1 + $0x1b0] sm:$0xff]
      %v405 = vld [vmem:[%s1 + $0x1b8] sm:$0xff]
      %v406 = vld [vmem:[%s1 + $0x1c0] sm:$0xff]
      %v407 = vld [vmem:[%s1 + $0x1c8] sm:$0xff]
      %v408 = vld [vmem:[%s1 + $0x1d0] sm:$0xff]
      %v409 = vld [vmem:[%s1 + $0x1d8] sm:$0xff]
      %v410 = vld [vmem:[%s1 + $0x1e0] sm:$0xff]
      %v411 = vld [vmem:[%s1 + $0x1e8] sm:$0xff]
      %v412 = vld [vmem:[%s1 + $0x1f0] sm:$0xff]
      %v413 = vld [vmem:[%s1 + $0x1f8] sm:$0xff]
      %v414 = vld [vmem:[%s1 + $0x200] sm:$0xff]
      %v415 = vld [vmem:[%s1 + $0x208] sm:$0xff]
      %v416 = vld [vmem:[%s1 + $0x210] sm:$0xff]
      %v417 = vld [vmem:[%s1 + $0x218] sm:$0xff]
      %v418 = vld [vmem:[%s1 + $0x220] sm:$0xff]
      %v419 = vld [vmem:[%s1 + $0x228] sm:$0xff]
      %v420 = vld [vmem:[%s1 + $0x230] sm:$0xff]
      %v421 = vld [vmem:[%s1 + $0x238] sm:$0xff]
      %v422 = vld [vmem:[%s1 + $0x240] sm:$0xff]
      %v423 = vld [vmem:[%s1 + $0x248] sm:$0xff]
      %v424 = vld [vmem:[%s1 + $0x250] sm:$0xff]
      %v425 = vld [vmem:[%s1 + $0x258] sm:$0xff]
      %v426 = vld [vmem:[%s1 + $0x260] sm:$0xff]
      %v427 = vld [vmem:[%s1 + $0x268] sm:$0xff]
      %v428 = vld [vmem:[%s1 + $0x270] sm:$0xff]
      %v429 = vld [vmem:[%s1 + $0x278] sm:$0xff]
      %v430 = vld [vmem:[%s1 + $0x280] sm:$0xff]
      %v431 = vld [vmem:[%s1 + $0x288] sm:$0xff]
      %v432 = vld [vmem:[%s1 + $0x290] sm:$0xff]
      %v433 = vld [vmem:[%s1 + $0x298] sm:$0xff]
      %v434 = vld [vmem:[%s1 + $0x2a0] sm:$0xff]
      %v435 = vld [vmem:[%s1 + $0x2a8] sm:$0xff]
      %v436 = vld [vmem:[%s1 + $0x2b0] sm:$0xff]
      %v437 = vld [vmem:[%s1 + $0x2b8] sm:$0xff]
      %v438 = vld [vmem:[%s1 + $0x2c0] sm:$0xff]
      %v439 = vld [vmem:[%s1 + $0x2c8] sm:$0xff]
      %v440 = vld [vmem:[%s1 + $0x2d0] sm:$0xff]
      %v441 = vld [vmem:[%s1 + $0x2d8] sm:$0xff]
      %v442 = vld [vmem:[%s1 + $0x2e0] sm:$0xff]
      %v443 = vld [vmem:[%s1 + $0x2e8] sm:$0xff]
      %v444 = vld [vmem:[%s1 + $0x2f0] sm:$0xff]
      %v445 = vld [vmem:[%s1 + $0x2f8] sm:$0xff]
      %v446 = vld [vmem:[%s1 + $0x300] sm:$0xff]
      %v447 = vld [vmem:[%s1 + $0x308] sm:$0xff]
      %v448 = vld [vmem:[%s1 + $0x310] sm:$0xff]
      %v449 = vld [vmem:[%s1 + $0x318] sm:$0xff]
      %v450 = vld [vmem:[%s1 + $0x320] sm:$0xff]
      %v451 = vld [vmem:[%s1 + $0x328] sm:$0xff]
      %v452 = vld [vmem:[%s1 + $0x330] sm:$0xff]
      %v453 = vld [vmem:[%s1 + $0x338] sm:$0xff]
      %v454 = vld [vmem:[%s1 + $0x340] sm:$0xff]
      %v455 = vld [vmem:[%s1 + $0x348] sm:$0xff]
      %v456 = vld [vmem:[%s1 + $0x350] sm:$0xff]
      %v457 = vld [vmem:[%s1 + $0x358] sm:$0xff]
      %v458 = vld [vmem:[%s1 + $0x360] sm:$0xff]
      %v459 = vld [vmem:[%s1 + $0x368] sm:$0xff]
      %v460 = vld [vmem:[%s1 + $0x370] sm:$0xff]
      %v461 = vld [vmem:[%s1 + $0x378] sm:$0xff]
      %v462 = vld [vmem:[%s1 + $0x380] sm:$0xff]
      %v463 = vld [vmem:[%s1 + $0x388] sm:$0xff]
      %v464 = vld [vmem:[%s1 + $0x390] sm:$0xff]
      %v465 = vld [vmem:[%s1 + $0x398] sm:$0xff]
      %v466 = vld [vmem:[%s1 + $0x3a0] sm:$0xff]
      %v467 = vld [vmem:[%s1 + $0x3a8] sm:$0xff]
      %v468 = vld [vmem:[%s1 + $0x3b0] sm:$0xff]
      %v469 = vld [vmem:[%s1 + $0x3b8] sm:$0xff]
      %v470 = vld [vmem:[%s1 + $0x3c0] sm:$0xff]
      %v471 = vld [vmem:[%s1 + $0x3c8] sm:$0xff]
      %v472 = vld [vmem:[%s1 + $0x3d0] sm:$0xff]
      %v473 = vld [vmem:[%s1 + $0x3d8] sm:$0xff]
      %v474 = vld [vmem:[%s1 + $0x3e0] sm:$0xff]
      %v475 = vld [vmem:[%s1 + $0x3e8] sm:$0xff]
      %v476 = vld [vmem:[%s1 + $0x3f0] sm:$0xff]
      %v477 = vld [vmem:[%s1 + $0x3f8] sm:$0xff]
      %v478 = vld [vmem:[%s1 + $0x400] sm:$0xff]
      %v479 = vld [vmem:[%s1 + $0x408] sm:$0xff]
      %v480 = vld [vmem:[%s1 + $0x410] sm:$0xff]
      %v481 = vld [vmem:[%s1 + $0x418] sm:$0xff]
      %v482 = vld [vmem:[%s1 + $0x420] sm:$0xff]
      %v483 = vld [vmem:[%s1 + $0x428] sm:$0xff]
      %v484 = vld [vmem:[%s1 + $0x430] sm:$0xff]
      %v485 = vld [vmem:[%s1 + $0x438] sm:$0xff]
      %v486 = vld [vmem:[%s1 + $0x440] sm:$0xff]
      %v487 = vld [vmem:[%s1 + $0x448] sm:$0xff]
      %v488 = vld [vmem:[%s1 + $0x450] sm:$0xff]
      %v489 = vld [vmem:[%s1 + $0x458] sm:$0xff]
      %v490 = vld [vmem:[%s1 + $0x460] sm:$0xff]
      %v491 = vld [vmem:[%s1 + $0x468] sm:$0xff]
      %v492 = vld [vmem:[%s1 + $0x470] sm:$0xff]
      %v493 = vld [vmem:[%s1 + $0x478] sm:$0xff]
      %v494 = vld [vmem:[%s1 + $0x480] sm:$0xff]
      %v495 = vld [vmem:[%s1 + $0x488] sm:$0xff]
      %v496 = vld [vmem:[%s1 + $0x490] sm:$0xff]
      %v497 = vld [vmem:[%s1 + $0x498] sm:$0xff]
      %v498 = vld [vmem:[%s1 + $0x4a0] sm:$0xff]
      %v499 = vld [vmem:[%s1 + $0x4a8] sm:$0xff]
      %v500 = vld [vmem:[%s1 + $0x4b0] sm:$0xff]
      %v501 = vld [vmem:[%s1 + $0x4b8] sm:$0xff]
      %v502 = vld [vmem:[%s1 + $0x4c0] sm:$0xff]
      %v503 = vld [vmem:[%s1 + $0x4c8] sm:$0xff]
      %v504 = vld [vmem:[%s1 + $0x4d0] sm:$0xff]
      %v505 = vld [vmem:[%s1 + $0x4d8] sm:$0xff]
      %v506 = vld [vmem:[%s1 + $0x4e0] sm:$0xff]
      %v507 = vld [vmem:[%s1 + $0x4e8] sm:$0xff]
      %v508 = vld [vmem:[%s1 + $0x4f0] sm:$0xff]
      %v509 = vld [vmem:[%s1 + $0x4f8] sm:$0xff]
      %v510 = vld [vmem:[%s1 + $0x500] sm:$0xff]
      %v511 = vld [vmem:[%s1 + $0x508] sm:$0xff]
      %v512 = vld [vmem:[%s1 + $0x510] sm:$0xff]
      %v513 = vld [vmem:[%s1 + $0x518] sm:$0xff]
      %v514 = vld [vmem:[%s1 + $0x520] sm:$0xff]
      %v515 = vld [vmem:[%s1 + $0x528] sm:$0xff]
      %v516 = vld [vmem:[%s1 + $0x530] sm:$0xff]
      %v517 = vld [vmem:[%s1 + $0x538] sm:$0xff]
      %v518 = vld [vmem:[%s1 + $0x540] sm:$0xff]
      %v519 = vld [vmem:[%s1 + $0x548] sm:$0xff]
      %v520 = vld [vmem:[%s1 + $0x550] sm:$0xff]
      %v521 = vld [vmem:[%s1 + $0x558] sm:$0xff]
      %v522 = vld [vmem:[%s1 + $0x560] sm:$0xff]
      %v523 = vld [vmem:[%s1 + $0x568] sm:$0xff]
      %v524 = vld [vmem:[%s1 + $0x570] sm:$0xff]
      %v525 = vld [vmem:[%s1 + $0x578] sm:$0xff]
      %v526 = vld [vmem:[%s1 + $0x580] sm:$0xff]
      %v527 = vld [vmem:[%s1 + $0x588] sm:$0xff]
      %v528 = vld [vmem:[%s1 + $0x590] sm:$0xff]
      %v529 = vld [vmem:[%s1 + $0x598] sm:$0xff]
      %v530 = vld [vmem:[%s1 + $0x5a0] sm:$0xff]
      %v531 = vld [vmem:[%s1 + $0x5a8] sm:$0xff]
      %v532 = vld [vmem:[%s1 + $0x5b0] sm:$0xff]
      %v533 = vld [vmem:[%s1 + $0x5b8] sm:$0xff]
      %v534 = vld [vmem:[%s1 + $0x5c0] sm:$0xff]
      %v535 = vld [vmem:[%s1 + $0x5c8] sm:$0xff]
      %v536 = vld [vmem:[%s1 + $0x5d0] sm:$0xff]
      %v537 = vld [vmem:[%s1 + $0x5d8] sm:$0xff]
      %v538 = vld [vmem:[%s1 + $0x5e0] sm:$0xff]
      %v539 = vld [vmem:[%s1 + $0x5e8] sm:$0xff]
      %v540 = vld [vmem:[%s1 + $0x5f0] sm:$0xff]
      %v541 = vld [vmem:[%s1 + $0x5f8] sm:$0xff]
      %v542 = vld [vmem:[%s1 + $0x600] sm:$0xff]
      %v543 = vld [vmem:[%s1 + $0x608] sm:$0xff]
      %v544 = vld [vmem:[%s1 + $0x610] sm:$0xff]
      %v545 = vld [vmem:[%s1 + $0x618] sm:$0xff]
      %v546 = vld [vmem:[%s1 + $0x620] sm:$0xff]
      %v547 = vld [vmem:[%s1 + $0x628] sm:$0xff]
      %v548 = vld [vmem:[%s1 + $0x630] sm:$0xff]
      %v549 = vld [vmem:[%s1 + $0x638] sm:$0xff]
      %v550 = vld [vmem:[%s1 + $0x640] sm:$0xff]
      %v551 = vld [vmem:[%s1 + $0x648] sm:$0xff]
      %v552 = vld [vmem:[%s1 + $0x650] sm:$0xff]
      %v553 = vld [vmem:[%s1 + $0x658] sm:$0xff]
      %v554 = vld [vmem:[%s1 + $0x660] sm:$0xff]
      %v555 = vld [vmem:[%s1 + $0x668] sm:$0xff]
      %v556 = vld [vmem:[%s1 + $0x670] sm:$0xff]
      %v557 = vld [vmem:[%s1 + $0x678] sm:$0xff]
      %v558 = vld [vmem:[%s1 + $0x680] sm:$0xff]
      %v559 = vld [vmem:[%s1 + $0x688] sm:$0xff]
      %v560 = vld [vmem:[%s1 + $0x690] sm:$0xff]
      %v561 = vld [vmem:[%s1 + $0x698] sm:$0xff]
      %v562 = vld [vmem:[%s1 + $0x6a0] sm:$0xff]
      %v563 = vld [vmem:[%s1 + $0x6a8] sm:$0xff]
      %v564 = vld [vmem:[%s1 + $0x6b0] sm:$0xff]
      %v565 = vld [vmem:[%s1 + $0x6b8] sm:$0xff]
      %v566 = vld [vmem:[%s1 + $0x6c0] sm:$0xff]
      %v567 = vld [vmem:[%s1 + $0x6c8] sm:$0xff]
      %v568 = vld [vmem:[%s1 + $0x6d0] sm:$0xff]
      %v569 = vld [vmem:[%s1 + $0x6d8] sm:$0xff]
      %v570 = vld [vmem:[%s1 + $0x6e0] sm:$0xff]
      %v571 = vld [vmem:[%s1 + $0x6e8] sm:$0xff]
      %v572 = vld [vmem:[%s1 + $0x6f0] sm:$0xff]
      %v573 = vld [vmem:[%s1 + $0x6f8] sm:$0xff]
      %v574 = vld [vmem:[%s2] sm:$0xf]
      %v576 = vlaneseq
      %v577 = vshrl.u32 %v576, 7
      %v578 = vsub.s32 0, %v577
      %v579 = vrot.slane %v574, %v578
      %v580 = vlaneseq
      %v581 = vshrl.u32 %v580, 7
      %v582 = vsub.s32 1, %v581
      %v583 = vrot.slane %v574, %v582
      %v584 = vlaneseq
      %v585 = vshrl.u32 %v584, 7
      %v586 = vsub.s32 2, %v585
      %v587 = vrot.slane %v574, %v586
      %v588 = vlaneseq
      %v589 = vshrl.u32 %v588, 7
      %v590 = vsub.s32 3, %v589
      %v591 = vrot.slane %v574, %v590
      %v660 = vunpack.c.l.b16 %v286
      %v661 = vunpack.c.h.b16 %v286
      %v662 = vunpack.c.l.b16 %v287
      %v663 = vunpack.c.h.b16 %v287
      %v664 = vunpack.c.l.b16 %v288
      %v665 = vunpack.c.h.b16 %v288
      %v666 = vunpack.c.l.b16 %v289
      %v667 = vunpack.c.l.b16 %v290
      %v668 = vunpack.c.h.b16 %v290
      %v669 = vunpack.c.l.b16 %v291
      %v670 = vunpack.c.h.b16 %v291
      %v671 = vunpack.c.l.b16 %v292
      %v672 = vunpack.c.h.b16 %v292
      %v673 = vunpack.c.l.b16 %v293
      %v674 = vunpack.c.l.b16 %v294
      %v675 = vunpack.c.h.b16 %v294
      %v676 = vunpack.c.l.b16 %v295
      %v677 = vunpack.c.h.b16 %v295
      %v678 = vunpack.c.l.b16 %v296
      %v679 = vunpack.c.h.b16 %v296
      %v680 = vunpack.c.l.b16 %v297
      %v681 = vunpack.c.l.b16 %v298
      %v682 = vunpack.c.h.b16 %v298
      %v683 = vunpack.c.l.b16 %v299
      %v684 = vunpack.c.h.b16 %v299
      %v685 = vunpack.c.l.b16 %v300
      %v686 = vunpack.c.h.b16 %v300
      %v687 = vunpack.c.l.b16 %v301
      %v688 = vunpack.c.l.b16 %v302
      %v689 = vunpack.c.h.b16 %v302
      %v690 = vunpack.c.l.b16 %v303
      %v691 = vunpack.c.h.b16 %v303
      %v692 = vunpack.c.l.b16 %v304
      %v693 = vunpack.c.h.b16 %v304
      %v694 = vunpack.c.l.b16 %v305
      %v695 = vunpack.c.l.b16 %v306
      %v696 = vunpack.c.h.b16 %v306
      %v697 = vunpack.c.l.b16 %v307
      %v698 = vunpack.c.h.b16 %v307
      %v699 = vunpack.c.l.b16 %v308
      %v700 = vunpack.c.h.b16 %v308
      %v701 = vunpack.c.l.b16 %v309
      %v702 = vunpack.c.l.b16 %v310
      %v703 = vunpack.c.h.b16 %v310
      %v704 = vunpack.c.l.b16 %v311
      %v705 = vunpack.c.h.b16 %v311
      %v706 = vunpack.c.l.b16 %v312
      %v707 = vunpack.c.h.b16 %v312
      %v708 = vunpack.c.l.b16 %v313
      %v709 = vunpack.c.l.b16 %v314
      %v710 = vunpack.c.h.b16 %v314
      %v711 = vunpack.c.l.b16 %v315
      %v712 = vunpack.c.h.b16 %v315
      %v713 = vunpack.c.l.b16 %v316
      %v714 = vunpack.c.h.b16 %v316
      %v715 = vunpack.c.l.b16 %v317
      %v716 = vunpack.c.l.b16 %v318
      %v717 = vunpack.c.h.b16 %v318
      %v718 = vunpack.c.l.b16 %v319
      %v719 = vunpack.c.h.b16 %v319
      %v720 = vunpack.c.l.b16 %v320
      %v721 = vunpack.c.h.b16 %v320
      %v722 = vunpack.c.l.b16 %v321
      %v723 = vunpack.c.l.b16 %v322
      %v724 = vunpack.c.h.b16 %v322
      %v725 = vunpack.c.l.b16 %v323
      %v726 = vunpack.c.h.b16 %v323
      %v727 = vunpack.c.l.b16 %v324
      %v728 = vunpack.c.h.b16 %v324
      %v729 = vunpack.c.l.b16 %v325
      %v730 = vunpack.c.l.b16 %v326
      %v731 = vunpack.c.h.b16 %v326
      %v732 = vunpack.c.l.b16 %v327
      %v733 = vunpack.c.h.b16 %v327
      %v734 = vunpack.c.l.b16 %v328
      %v735 = vunpack.c.h.b16 %v328
      %v736 = vunpack.c.l.b16 %v329
      %v737 = vunpack.c.l.b16 %v330
      %v738 = vunpack.c.h.b16 %v330
      %v739 = vunpack.c.l.b16 %v331
      %v740 = vunpack.c.h.b16 %v331
      %v741 = vunpack.c.l.b16 %v332
      %v742 = vunpack.c.h.b16 %v332
      %v743 = vunpack.c.l.b16 %v333
      %v744 = vunpack.c.l.b16 %v334
      %v745 = vunpack.c.h.b16 %v334
      %v746 = vunpack.c.l.b16 %v335
      %v747 = vunpack.c.h.b16 %v335
      %v748 = vunpack.c.l.b16 %v336
      %v749 = vunpack.c.h.b16 %v336
      %v750 = vunpack.c.l.b16 %v337
      %v751 = vunpack.c.l.b16 %v338
      %v752 = vunpack.c.h.b16 %v338
      %v753 = vunpack.c.l.b16 %v339
      %v754 = vunpack.c.h.b16 %v339
      %v755 = vunpack.c.l.b16 %v340
      %v756 = vunpack.c.h.b16 %v340
      %v757 = vunpack.c.l.b16 %v341
      %v758 = vunpack.c.l.b16 %v342
      %v759 = vunpack.c.h.b16 %v342
      %v760 = vunpack.c.l.b16 %v343
      %v761 = vunpack.c.h.b16 %v343
      %v762 = vunpack.c.l.b16 %v344
      %v763 = vunpack.c.h.b16 %v344
      %v764 = vunpack.c.l.b16 %v345
      %v765 = vunpack.c.l.b16 %v346
      %v766 = vunpack.c.h.b16 %v346
      %v767 = vunpack.c.l.b16 %v347
      %v768 = vunpack.c.h.b16 %v347
      %v769 = vunpack.c.l.b16 %v348
      %v770 = vunpack.c.h.b16 %v348
      %v771 = vunpack.c.l.b16 %v349
      %v772 = vpack.c.b16 %v667, %v660
      %v773 = vpack.c.b16 %v668, %v661
      %v774 = vpack.c.b16 %v669, %v662
      %v775 = vpack.c.b16 %v670, %v663
      %v776 = vpack.c.b16 %v671, %v664
      %v777 = vpack.c.b16 %v672, %v665
      %v778 = vpack.c.b16 %v673, %v666
      %v779 = vpack.c.b16 %v681, %v674
      %v780 = vpack.c.b16 %v682, %v675
      %v781 = vpack.c.b16 %v683, %v676
      %v782 = vpack.c.b16 %v684, %v677
      %v783 = vpack.c.b16 %v685, %v678
      %v784 = vpack.c.b16 %v686, %v679
      %v785 = vpack.c.b16 %v687, %v680
      %v786 = vpack.c.b16 %v695, %v688
      %v787 = vpack.c.b16 %v696, %v689
      %v788 = vpack.c.b16 %v697, %v690
      %v789 = vpack.c.b16 %v698, %v691
      %v790 = vpack.c.b16 %v699, %v692
      %v791 = vpack.c.b16 %v700, %v693
      %v792 = vpack.c.b16 %v701, %v694
      %v793 = vpack.c.b16 %v709, %v702
      %v794 = vpack.c.b16 %v710, %v703
      %v795 = vpack.c.b16 %v711, %v704
      %v796 = vpack.c.b16 %v712, %v705
      %v797 = vpack.c.b16 %v713, %v706
      %v798 = vpack.c.b16 %v714, %v707
      %v799 = vpack.c.b16 %v715, %v708
      %v800 = vpack.c.b16 %v723, %v716
      %v801 = vpack.c.b16 %v724, %v717
      %v802 = vpack.c.b16 %v725, %v718
      %v803 = vpack.c.b16 %v726, %v719
      %v804 = vpack.c.b16 %v727, %v720
      %v805 = vpack.c.b16 %v728, %v721
      %v806 = vpack.c.b16 %v729, %v722
      %v807 = vpack.c.b16 %v737, %v730
      %v808 = vpack.c.b16 %v738, %v731
      %v809 = vpack.c.b16 %v739, %v732
      %v810 = vpack.c.b16 %v740, %v733
      %v811 = vpack.c.b16 %v741, %v734
      %v812 = vpack.c.b16 %v742, %v735
      %v813 = vpack.c.b16 %v743, %v736
      %v814 = vpack.c.b16 %v751, %v744
      %v815 = vpack.c.b16 %v752, %v745
      %v816 = vpack.c.b16 %v753, %v746
      %v817 = vpack.c.b16 %v754, %v747
      %v818 = vpack.c.b16 %v755, %v748
      %v819 = vpack.c.b16 %v756, %v749
      %v820 = vpack.c.b16 %v757, %v750
      %v821 = vpack.c.b16 %v765, %v758
      %v822 = vpack.c.b16 %v766, %v759
      %v823 = vpack.c.b16 %v767, %v760
      %v824 = vpack.c.b16 %v768, %v761
      %v825 = vpack.c.b16 %v769, %v762
      %v826 = vpack.c.b16 %v770, %v763
      %v827 = vpack.c.b16 %v771, %v764
      %v1108 = vunpack.c.l.b16 %v350
      %v1109 = vunpack.c.h.b16 %v350
      %v1110 = vunpack.c.l.b16 %v351
      %v1111 = vunpack.c.h.b16 %v351
      %v1112 = vunpack.c.l.b16 %v352
      %v1113 = vunpack.c.h.b16 %v352
      %v1114 = vunpack.c.l.b16 %v353
      %v1115 = vunpack.c.h.b16 %v353
      %v1116 = vunpack.c.l.b16 %v354
      %v1117 = vunpack.c.h.b16 %v354
      %v1118 = vunpack.c.l.b16 %v355
      %v1119 = vunpack.c.h.b16 %v355
      %v1120 = vunpack.c.l.b16 %v356
      %v1121 = vunpack.c.h.b16 %v356
      %v1122 = vunpack.c.l.b16 %v357
      %v1123 = vunpack.c.h.b16 %v357
      %v1124 = vunpack.c.l.b16 %v358
      %v1125 = vunpack.c.h.b16 %v358
      %v1126 = vunpack.c.l.b16 %v359
      %v1127 = vunpack.c.h.b16 %v359
      %v1128 = vunpack.c.l.b16 %v360
      %v1129 = vunpack.c.h.b16 %v360
      %v1130 = vunpack.c.l.b16 %v361
      %v1131 = vunpack.c.h.b16 %v361
      %v1132 = vunpack.c.l.b16 %v362
      %v1133 = vunpack.c.h.b16 %v362
      %v1134 = vunpack.c.l.b16 %v363
      %v1135 = vunpack.c.h.b16 %v363
      %v1136 = vunpack.c.l.b16 %v364
      %v1137 = vunpack.c.h.b16 %v364
      %v1138 = vunpack.c.l.b16 %v365
      %v1139 = vunpack.c.h.b16 %v365
      %v1140 = vunpack.c.l.b16 %v366
      %v1141 = vunpack.c.h.b16 %v366
      %v1142 = vunpack.c.l.b16 %v367
      %v1143 = vunpack.c.h.b16 %v367
      %v1144 = vunpack.c.l.b16 %v368
      %v1145 = vunpack.c.h.b16 %v368
      %v1146 = vunpack.c.l.b16 %v369
      %v1147 = vunpack.c.h.b16 %v369
      %v1148 = vunpack.c.l.b16 %v370
      %v1149 = vunpack.c.h.b16 %v370
      %v1150 = vunpack.c.l.b16 %v371
      %v1151 = vunpack.c.h.b16 %v371
      %v1152 = vunpack.c.l.b16 %v372
      %v1153 = vunpack.c.h.b16 %v372
      %v1154 = vunpack.c.l.b16 %v373
      %v1155 = vunpack.c.h.b16 %v373
      %v1156 = vunpack.c.l.b16 %v374
      %v1157 = vunpack.c.h.b16 %v374
      %v1158 = vunpack.c.l.b16 %v375
      %v1159 = vunpack.c.h.b16 %v375
      %v1160 = vunpack.c.l.b16 %v376
      %v1161 = vunpack.c.h.b16 %v376
      %v1162 = vunpack.c.l.b16 %v377
      %v1163 = vunpack.c.h.b16 %v377
      %v1164 = vunpack.c.l.b16 %v378
      %v1165 = vunpack.c.h.b16 %v378
      %v1166 = vunpack.c.l.b16 %v379
      %v1167 = vunpack.c.h.b16 %v379
      %v1168 = vunpack.c.l.b16 %v380
      %v1169 = vunpack.c.h.b16 %v380
      %v1170 = vunpack.c.l.b16 %v381
      %v1171 = vunpack.c.h.b16 %v381
      %v1172 = vunpack.c.l.b16 %v382
      %v1173 = vunpack.c.h.b16 %v382
      %v1174 = vunpack.c.l.b16 %v383
      %v1175 = vunpack.c.h.b16 %v383
      %v1176 = vunpack.c.l.b16 %v384
      %v1177 = vunpack.c.h.b16 %v384
      %v1178 = vunpack.c.l.b16 %v385
      %v1179 = vunpack.c.h.b16 %v385
      %v1180 = vunpack.c.l.b16 %v386
      %v1181 = vunpack.c.h.b16 %v386
      %v1182 = vunpack.c.l.b16 %v387
      %v1183 = vunpack.c.h.b16 %v387
      %v1184 = vunpack.c.l.b16 %v388
      %v1185 = vunpack.c.h.b16 %v388
      %v1186 = vunpack.c.l.b16 %v389
      %v1187 = vunpack.c.h.b16 %v389
      %v1188 = vunpack.c.l.b16 %v390
      %v1189 = vunpack.c.h.b16 %v390
      %v1190 = vunpack.c.l.b16 %v391
      %v1191 = vunpack.c.h.b16 %v391
      %v1192 = vunpack.c.l.b16 %v392
      %v1193 = vunpack.c.h.b16 %v392
      %v1194 = vunpack.c.l.b16 %v393
      %v1195 = vunpack.c.h.b16 %v393
      %v1196 = vunpack.c.l.b16 %v394
      %v1197 = vunpack.c.h.b16 %v394
      %v1198 = vunpack.c.l.b16 %v395
      %v1199 = vunpack.c.h.b16 %v395
      %v1200 = vunpack.c.l.b16 %v396
      %v1201 = vunpack.c.h.b16 %v396
      %v1202 = vunpack.c.l.b16 %v397
      %v1203 = vunpack.c.h.b16 %v397
      %v1204 = vunpack.c.l.b16 %v398
      %v1205 = vunpack.c.h.b16 %v398
      %v1206 = vunpack.c.l.b16 %v399
      %v1207 = vunpack.c.h.b16 %v399
      %v1208 = vunpack.c.l.b16 %v400
      %v1209 = vunpack.c.h.b16 %v400
      %v1210 = vunpack.c.l.b16 %v401
      %v1211 = vunpack.c.h.b16 %v401
      %v1212 = vunpack.c.l.b16 %v402
      %v1213 = vunpack.c.h.b16 %v402
      %v1214 = vunpack.c.l.b16 %v403
      %v1215 = vunpack.c.h.b16 %v403
      %v1216 = vunpack.c.l.b16 %v404
      %v1217 = vunpack.c.h.b16 %v404
      %v1218 = vunpack.c.l.b16 %v405
      %v1219 = vunpack.c.h.b16 %v405
      %v1220 = vunpack.c.l.b16 %v406
      %v1221 = vunpack.c.h.b16 %v406
      %v1222 = vunpack.c.l.b16 %v407
      %v1223 = vunpack.c.h.b16 %v407
      %v1224 = vunpack.c.l.b16 %v408
      %v1225 = vunpack.c.h.b16 %v408
      %v1226 = vunpack.c.l.b16 %v409
      %v1227 = vunpack.c.h.b16 %v409
      %v1228 = vunpack.c.l.b16 %v410
      %v1229 = vunpack.c.h.b16 %v410
      %v1230 = vunpack.c.l.b16 %v411
      %v1231 = vunpack.c.h.b16 %v411
      %v1232 = vunpack.c.l.b16 %v412
      %v1233 = vunpack.c.h.b16 %v412
      %v1234 = vunpack.c.l.b16 %v413
      %v1235 = vunpack.c.h.b16 %v413
      %v1236 = vunpack.c.l.b16 %v414
      %v1237 = vunpack.c.h.b16 %v414
      %v1238 = vunpack.c.l.b16 %v415
      %v1239 = vunpack.c.h.b16 %v415
      %v1240 = vunpack.c.l.b16 %v416
      %v1241 = vunpack.c.h.b16 %v416
      %v1242 = vunpack.c.l.b16 %v417
      %v1243 = vunpack.c.h.b16 %v417
      %v1244 = vunpack.c.l.b16 %v418
      %v1245 = vunpack.c.h.b16 %v418
      %v1246 = vunpack.c.l.b16 %v419
      %v1247 = vunpack.c.h.b16 %v419
      %v1248 = vunpack.c.l.b16 %v420
      %v1249 = vunpack.c.h.b16 %v420
      %v1250 = vunpack.c.l.b16 %v421
      %v1251 = vunpack.c.h.b16 %v421
      %v1252 = vunpack.c.l.b16 %v422
      %v1253 = vunpack.c.h.b16 %v422
      %v1254 = vunpack.c.l.b16 %v423
      %v1255 = vunpack.c.h.b16 %v423
      %v1256 = vunpack.c.l.b16 %v424
      %v1257 = vunpack.c.h.b16 %v424
      %v1258 = vunpack.c.l.b16 %v425
      %v1259 = vunpack.c.h.b16 %v425
      %v1260 = vunpack.c.l.b16 %v426
      %v1261 = vunpack.c.h.b16 %v426
      %v1262 = vunpack.c.l.b16 %v427
      %v1263 = vunpack.c.h.b16 %v427
      %v1264 = vunpack.c.l.b16 %v428
      %v1265 = vunpack.c.h.b16 %v428
      %v1266 = vunpack.c.l.b16 %v429
      %v1267 = vunpack.c.h.b16 %v429
      %v1268 = vunpack.c.l.b16 %v430
      %v1269 = vunpack.c.h.b16 %v430
      %v1270 = vunpack.c.l.b16 %v431
      %v1271 = vunpack.c.h.b16 %v431
      %v1272 = vunpack.c.l.b16 %v432
      %v1273 = vunpack.c.h.b16 %v432
      %v1274 = vunpack.c.l.b16 %v433
      %v1275 = vunpack.c.h.b16 %v433
      %v1276 = vunpack.c.l.b16 %v434
      %v1277 = vunpack.c.h.b16 %v434
      %v1278 = vunpack.c.l.b16 %v435
      %v1279 = vunpack.c.h.b16 %v435
      %v1280 = vunpack.c.l.b16 %v436
      %v1281 = vunpack.c.h.b16 %v436
      %v1282 = vunpack.c.l.b16 %v437
      %v1283 = vunpack.c.h.b16 %v437
      %v1284 = vunpack.c.l.b16 %v438
      %v1285 = vunpack.c.h.b16 %v438
      %v1286 = vunpack.c.l.b16 %v439
      %v1287 = vunpack.c.h.b16 %v439
      %v1288 = vunpack.c.l.b16 %v440
      %v1289 = vunpack.c.h.b16 %v440
      %v1290 = vunpack.c.l.b16 %v441
      %v1291 = vunpack.c.h.b16 %v441
      %v1292 = vunpack.c.l.b16 %v442
      %v1293 = vunpack.c.h.b16 %v442
      %v1294 = vunpack.c.l.b16 %v443
      %v1295 = vunpack.c.h.b16 %v443
      %v1296 = vunpack.c.l.b16 %v444
      %v1297 = vunpack.c.h.b16 %v444
      %v1298 = vunpack.c.l.b16 %v445
      %v1299 = vunpack.c.h.b16 %v445
      %v1300 = vunpack.c.l.b16 %v446
      %v1301 = vunpack.c.h.b16 %v446
      %v1302 = vunpack.c.l.b16 %v447
      %v1303 = vunpack.c.h.b16 %v447
      %v1304 = vunpack.c.l.b16 %v448
      %v1305 = vunpack.c.h.b16 %v448
      %v1306 = vunpack.c.l.b16 %v449
      %v1307 = vunpack.c.h.b16 %v449
      %v1308 = vunpack.c.l.b16 %v450
      %v1309 = vunpack.c.h.b16 %v450
      %v1310 = vunpack.c.l.b16 %v451
      %v1311 = vunpack.c.h.b16 %v451
      %v1312 = vunpack.c.l.b16 %v452
      %v1313 = vunpack.c.h.b16 %v452
      %v1314 = vunpack.c.l.b16 %v453
      %v1315 = vunpack.c.h.b16 %v453
      %v1316 = vunpack.c.l.b16 %v454
      %v1317 = vunpack.c.h.b16 %v454
      %v1318 = vunpack.c.l.b16 %v455
      %v1319 = vunpack.c.h.b16 %v455
      %v1320 = vunpack.c.l.b16 %v456
      %v1321 = vunpack.c.h.b16 %v456
      %v1322 = vunpack.c.l.b16 %v457
      %v1323 = vunpack.c.h.b16 %v457
      %v1324 = vunpack.c.l.b16 %v458
      %v1325 = vunpack.c.h.b16 %v458
      %v1326 = vunpack.c.l.b16 %v459
      %v1327 = vunpack.c.h.b16 %v459
      %v1328 = vunpack.c.l.b16 %v460
      %v1329 = vunpack.c.h.b16 %v460
      %v1330 = vunpack.c.l.b16 %v461
      %v1331 = vunpack.c.h.b16 %v461
      %v1332 = vunpack.c.l.b16 %v462
      %v1333 = vunpack.c.h.b16 %v462
      %v1334 = vunpack.c.l.b16 %v463
      %v1335 = vunpack.c.h.b16 %v463
      %v1336 = vunpack.c.l.b16 %v464
      %v1337 = vunpack.c.h.b16 %v464
      %v1338 = vunpack.c.l.b16 %v465
      %v1339 = vunpack.c.h.b16 %v465
      %v1340 = vunpack.c.l.b16 %v466
      %v1341 = vunpack.c.h.b16 %v466
      %v1342 = vunpack.c.l.b16 %v467
      %v1343 = vunpack.c.h.b16 %v467
      %v1344 = vunpack.c.l.b16 %v468
      %v1345 = vunpack.c.h.b16 %v468
      %v1346 = vunpack.c.l.b16 %v469
      %v1347 = vunpack.c.h.b16 %v469
      %v1348 = vunpack.c.l.b16 %v470
      %v1349 = vunpack.c.h.b16 %v470
      %v1350 = vunpack.c.l.b16 %v471
      %v1351 = vunpack.c.h.b16 %v471
      %v1352 = vunpack.c.l.b16 %v472
      %v1353 = vunpack.c.h.b16 %v472
      %v1354 = vunpack.c.l.b16 %v473
      %v1355 = vunpack.c.h.b16 %v473
      %v1356 = vunpack.c.l.b16 %v474
      %v1357 = vunpack.c.h.b16 %v474
      %v1358 = vunpack.c.l.b16 %v475
      %v1359 = vunpack.c.h.b16 %v475
      %v1360 = vunpack.c.l.b16 %v476
      %v1361 = vunpack.c.h.b16 %v476
      %v1362 = vunpack.c.l.b16 %v477
      %v1363 = vunpack.c.h.b16 %v477
      %v1364 = vunpack.c.l.b16 %v478
      %v1365 = vunpack.c.h.b16 %v478
      %v1366 = vunpack.c.l.b16 %v479
      %v1367 = vunpack.c.h.b16 %v479
      %v1368 = vunpack.c.l.b16 %v480
      %v1369 = vunpack.c.h.b16 %v480
      %v1370 = vunpack.c.l.b16 %v481
      %v1371 = vunpack.c.h.b16 %v481
      %v1372 = vunpack.c.l.b16 %v482
      %v1373 = vunpack.c.h.b16 %v482
      %v1374 = vunpack.c.l.b16 %v483
      %v1375 = vunpack.c.h.b16 %v483
      %v1376 = vunpack.c.l.b16 %v484
      %v1377 = vunpack.c.h.b16 %v484
      %v1378 = vunpack.c.l.b16 %v485
      %v1379 = vunpack.c.h.b16 %v485
      %v1380 = vunpack.c.l.b16 %v486
      %v1381 = vunpack.c.h.b16 %v486
      %v1382 = vunpack.c.l.b16 %v487
      %v1383 = vunpack.c.h.b16 %v487
      %v1384 = vunpack.c.l.b16 %v488
      %v1385 = vunpack.c.h.b16 %v488
      %v1386 = vunpack.c.l.b16 %v489
      %v1387 = vunpack.c.h.b16 %v489
      %v1388 = vunpack.c.l.b16 %v490
      %v1389 = vunpack.c.h.b16 %v490
      %v1390 = vunpack.c.l.b16 %v491
      %v1391 = vunpack.c.h.b16 %v491
      %v1392 = vunpack.c.l.b16 %v492
      %v1393 = vunpack.c.h.b16 %v492
      %v1394 = vunpack.c.l.b16 %v493
      %v1395 = vunpack.c.h.b16 %v493
      %v1396 = vunpack.c.l.b16 %v494
      %v1397 = vunpack.c.h.b16 %v494
      %v1398 = vunpack.c.l.b16 %v495
      %v1399 = vunpack.c.h.b16 %v495
      %v1400 = vunpack.c.l.b16 %v496
      %v1401 = vunpack.c.h.b16 %v496
      %v1402 = vunpack.c.l.b16 %v497
      %v1403 = vunpack.c.h.b16 %v497
      %v1404 = vunpack.c.l.b16 %v498
      %v1405 = vunpack.c.h.b16 %v498
      %v1406 = vunpack.c.l.b16 %v499
      %v1407 = vunpack.c.h.b16 %v499
      %v1408 = vunpack.c.l.b16 %v500
      %v1409 = vunpack.c.h.b16 %v500
      %v1410 = vunpack.c.l.b16 %v501
      %v1411 = vunpack.c.h.b16 %v501
      %v1412 = vunpack.c.l.b16 %v502
      %v1413 = vunpack.c.h.b16 %v502
      %v1414 = vunpack.c.l.b16 %v503
      %v1415 = vunpack.c.h.b16 %v503
      %v1416 = vunpack.c.l.b16 %v504
      %v1417 = vunpack.c.h.b16 %v504
      %v1418 = vunpack.c.l.b16 %v505
      %v1419 = vunpack.c.h.b16 %v505
      %v1420 = vunpack.c.l.b16 %v506
      %v1421 = vunpack.c.h.b16 %v506
      %v1422 = vunpack.c.l.b16 %v507
      %v1423 = vunpack.c.h.b16 %v507
      %v1424 = vunpack.c.l.b16 %v508
      %v1425 = vunpack.c.h.b16 %v508
      %v1426 = vunpack.c.l.b16 %v509
      %v1427 = vunpack.c.h.b16 %v509
      %v1428 = vunpack.c.l.b16 %v510
      %v1429 = vunpack.c.h.b16 %v510
      %v1430 = vunpack.c.l.b16 %v511
      %v1431 = vunpack.c.h.b16 %v511
      %v1432 = vunpack.c.l.b16 %v512
      %v1433 = vunpack.c.h.b16 %v512
      %v1434 = vunpack.c.l.b16 %v513
      %v1435 = vunpack.c.h.b16 %v513
      %v1436 = vunpack.c.l.b16 %v514
      %v1437 = vunpack.c.h.b16 %v514
      %v1438 = vunpack.c.l.b16 %v515
      %v1439 = vunpack.c.h.b16 %v515
      %v1440 = vunpack.c.l.b16 %v516
      %v1441 = vunpack.c.h.b16 %v516
      %v1442 = vunpack.c.l.b16 %v517
      %v1443 = vunpack.c.h.b16 %v517
      %v1444 = vunpack.c.l.b16 %v518
      %v1445 = vunpack.c.h.b16 %v518
      %v1446 = vunpack.c.l.b16 %v519
      %v1447 = vunpack.c.h.b16 %v519
      %v1448 = vunpack.c.l.b16 %v520
      %v1449 = vunpack.c.h.b16 %v520
      %v1450 = vunpack.c.l.b16 %v521
      %v1451 = vunpack.c.h.b16 %v521
      %v1452 = vunpack.c.l.b16 %v522
      %v1453 = vunpack.c.h.b16 %v522
      %v1454 = vunpack.c.l.b16 %v523
      %v1455 = vunpack.c.h.b16 %v523
      %v1456 = vunpack.c.l.b16 %v524
      %v1457 = vunpack.c.h.b16 %v524
      %v1458 = vunpack.c.l.b16 %v525
      %v1459 = vunpack.c.h.b16 %v525
      %v1460 = vunpack.c.l.b16 %v526
      %v1461 = vunpack.c.h.b16 %v526
      %v1462 = vunpack.c.l.b16 %v527
      %v1463 = vunpack.c.h.b16 %v527
      %v1464 = vunpack.c.l.b16 %v528
      %v1465 = vunpack.c.h.b16 %v528
      %v1466 = vunpack.c.l.b16 %v529
      %v1467 = vunpack.c.h.b16 %v529
      %v1468 = vunpack.c.l.b16 %v530
      %v1469 = vunpack.c.h.b16 %v530
      %v1470 = vunpack.c.l.b16 %v531
      %v1471 = vunpack.c.h.b16 %v531
      %v1472 = vunpack.c.l.b16 %v532
      %v1473 = vunpack.c.h.b16 %v532
      %v1474 = vunpack.c.l.b16 %v533
      %v1475 = vunpack.c.h.b16 %v533
      %v1476 = vunpack.c.l.b16 %v534
      %v1477 = vunpack.c.h.b16 %v534
      %v1478 = vunpack.c.l.b16 %v535
      %v1479 = vunpack.c.h.b16 %v535
      %v1480 = vunpack.c.l.b16 %v536
      %v1481 = vunpack.c.h.b16 %v536
      %v1482 = vunpack.c.l.b16 %v537
      %v1483 = vunpack.c.h.b16 %v537
      %v1484 = vunpack.c.l.b16 %v538
      %v1485 = vunpack.c.h.b16 %v538
      %v1486 = vunpack.c.l.b16 %v539
      %v1487 = vunpack.c.h.b16 %v539
      %v1488 = vunpack.c.l.b16 %v540
      %v1489 = vunpack.c.h.b16 %v540
      %v1490 = vunpack.c.l.b16 %v541
      %v1491 = vunpack.c.h.b16 %v541
      %v1492 = vunpack.c.l.b16 %v542
      %v1493 = vunpack.c.h.b16 %v542
      %v1494 = vunpack.c.l.b16 %v543
      %v1495 = vunpack.c.h.b16 %v543
      %v1496 = vunpack.c.l.b16 %v544
      %v1497 = vunpack.c.h.b16 %v544
      %v1498 = vunpack.c.l.b16 %v545
      %v1499 = vunpack.c.h.b16 %v545
      %v1500 = vunpack.c.l.b16 %v546
      %v1501 = vunpack.c.h.b16 %v546
      %v1502 = vunpack.c.l.b16 %v547
      %v1503 = vunpack.c.h.b16 %v547
      %v1504 = vunpack.c.l.b16 %v548
      %v1505 = vunpack.c.h.b16 %v548
      %v1506 = vunpack.c.l.b16 %v549
      %v1507 = vunpack.c.h.b16 %v549
      %v1508 = vunpack.c.l.b16 %v550
      %v1509 = vunpack.c.h.b16 %v550
      %v1510 = vunpack.c.l.b16 %v551
      %v1511 = vunpack.c.h.b16 %v551
      %v1512 = vunpack.c.l.b16 %v552
      %v1513 = vunpack.c.h.b16 %v552
      %v1514 = vunpack.c.l.b16 %v553
      %v1515 = vunpack.c.h.b16 %v553
      %v1516 = vunpack.c.l.b16 %v554
      %v1517 = vunpack.c.h.b16 %v554
      %v1518 = vunpack.c.l.b16 %v555
      %v1519 = vunpack.c.h.b16 %v555
      %v1520 = vunpack.c.l.b16 %v556
      %v1521 = vunpack.c.h.b16 %v556
      %v1522 = vunpack.c.l.b16 %v557
      %v1523 = vunpack.c.h.b16 %v557
      %v1524 = vunpack.c.l.b16 %v558
      %v1525 = vunpack.c.h.b16 %v558
      %v1526 = vunpack.c.l.b16 %v559
      %v1527 = vunpack.c.h.b16 %v559
      %v1528 = vunpack.c.l.b16 %v560
      %v1529 = vunpack.c.h.b16 %v560
      %v1530 = vunpack.c.l.b16 %v561
      %v1531 = vunpack.c.h.b16 %v561
      %v1532 = vunpack.c.l.b16 %v562
      %v1533 = vunpack.c.h.b16 %v562
      %v1534 = vunpack.c.l.b16 %v563
      %v1535 = vunpack.c.h.b16 %v563
      %v1536 = vunpack.c.l.b16 %v564
      %v1537 = vunpack.c.h.b16 %v564
      %v1538 = vunpack.c.l.b16 %v565
      %v1539 = vunpack.c.h.b16 %v565
      %v1540 = vunpack.c.l.b16 %v566
      %v1541 = vunpack.c.h.b16 %v566
      %v1542 = vunpack.c.l.b16 %v567
      %v1543 = vunpack.c.h.b16 %v567
      %v1544 = vunpack.c.l.b16 %v568
      %v1545 = vunpack.c.h.b16 %v568
      %v1546 = vunpack.c.l.b16 %v569
      %v1547 = vunpack.c.h.b16 %v569
      %v1548 = vunpack.c.l.b16 %v570
      %v1549 = vunpack.c.h.b16 %v570
      %v1550 = vunpack.c.l.b16 %v571
      %v1551 = vunpack.c.h.b16 %v571
      %v1552 = vunpack.c.l.b16 %v572
      %v1553 = vunpack.c.h.b16 %v572
      %v1554 = vunpack.c.l.b16 %v573
      %v1555 = vunpack.c.h.b16 %v573
      %v1556 = vpack.c.b16 %v1112, %v1108
      %v1557 = vpack.c.b16 %v1113, %v1109
      %v1558 = vpack.c.b16 %v1114, %v1110
      %v1559 = vpack.c.b16 %v1115, %v1111
      %v1560 = vpack.c.b16 %v1120, %v1116
      %v1561 = vpack.c.b16 %v1121, %v1117
      %v1562 = vpack.c.b16 %v1122, %v1118
      %v1563 = vpack.c.b16 %v1123, %v1119
      %v1564 = vpack.c.b16 %v1128, %v1124
      %v1565 = vpack.c.b16 %v1129, %v1125
      %v1566 = vpack.c.b16 %v1130, %v1126
      %v1567 = vpack.c.b16 %v1131, %v1127
      %v1568 = vpack.c.b16 %v1136, %v1132
      %v1569 = vpack.c.b16 %v1137, %v1133
      %v1570 = vpack.c.b16 %v1138, %v1134
      %v1571 = vpack.c.b16 %v1139, %v1135
      %v1572 = vpack.c.b16 %v1144, %v1140
      %v1573 = vpack.c.b16 %v1145, %v1141
      %v1574 = vpack.c.b16 %v1146, %v1142
      %v1575 = vpack.c.b16 %v1147, %v1143
      %v1576 = vpack.c.b16 %v1152, %v1148
      %v1577 = vpack.c.b16 %v1153, %v1149
      %v1578 = vpack.c.b16 %v1154, %v1150
      %v1579 = vpack.c.b16 %v1155, %v1151
      %v1580 = vpack.c.b16 %v1160, %v1156
      %v1581 = vpack.c.b16 %v1161, %v1157
      %v1582 = vpack.c.b16 %v1162, %v1158
      %v1583 = vpack.c.b16 %v1163, %v1159
      %v1584 = vpack.c.b16 %v1168, %v1164
      %v1585 = vpack.c.b16 %v1169, %v1165
      %v1586 = vpack.c.b16 %v1170, %v1166
      %v1587 = vpack.c.b16 %v1171, %v1167
      %v1588 = vpack.c.b16 %v1176, %v1172
      %v1589 = vpack.c.b16 %v1177, %v1173
      %v1590 = vpack.c.b16 %v1178, %v1174
      %v1591 = vpack.c.b16 %v1179, %v1175
      %v1592 = vpack.c.b16 %v1184, %v1180
      %v1593 = vpack.c.b16 %v1185, %v1181
      %v1594 = vpack.c.b16 %v1186, %v1182
      %v1595 = vpack.c.b16 %v1187, %v1183
      %v1596 = vpack.c.b16 %v1192, %v1188
      %v1597 = vpack.c.b16 %v1193, %v1189
      %v1598 = vpack.c.b16 %v1194, %v1190
      %v1599 = vpack.c.b16 %v1195, %v1191
      %v1600 = vpack.c.b16 %v1200, %v1196
      %v1601 = vpack.c.b16 %v1201, %v1197
      %v1602 = vpack.c.b16 %v1202, %v1198
      %v1603 = vpack.c.b16 %v1203, %v1199
      %v1604 = vpack.c.b16 %v1208, %v1204
      %v1605 = vpack.c.b16 %v1209, %v1205
      %v1606 = vpack.c.b16 %v1210, %v1206
      %v1607 = vpack.c.b16 %v1211, %v1207
      %v1608 = vpack.c.b16 %v1216, %v1212
      %v1609 = vpack.c.b16 %v1217, %v1213
      %v1610 = vpack.c.b16 %v1218, %v1214
      %v1611 = vpack.c.b16 %v1219, %v1215
      %v1612 = vpack.c.b16 %v1224, %v1220
      %v1613 = vpack.c.b16 %v1225, %v1221
      %v1614 = vpack.c.b16 %v1226, %v1222
      %v1615 = vpack.c.b16 %v1227, %v1223
      %v1616 = vpack.c.b16 %v1232, %v1228
      %v1617 = vpack.c.b16 %v1233, %v1229
      %v1618 = vpack.c.b16 %v1234, %v1230
      %v1619 = vpack.c.b16 %v1235, %v1231
      %v1620 = vpack.c.b16 %v1240, %v1236
      %v1621 = vpack.c.b16 %v1241, %v1237
      %v1622 = vpack.c.b16 %v1242, %v1238
      %v1623 = vpack.c.b16 %v1243, %v1239
      %v1624 = vpack.c.b16 %v1248, %v1244
      %v1625 = vpack.c.b16 %v1249, %v1245
      %v1626 = vpack.c.b16 %v1250, %v1246
      %v1627 = vpack.c.b16 %v1251, %v1247
      %v1628 = vpack.c.b16 %v1256, %v1252
      %v1629 = vpack.c.b16 %v1257, %v1253
      %v1630 = vpack.c.b16 %v1258, %v1254
      %v1631 = vpack.c.b16 %v1259, %v1255
      %v1632 = vpack.c.b16 %v1264, %v1260
      %v1633 = vpack.c.b16 %v1265, %v1261
      %v1634 = vpack.c.b16 %v1266, %v1262
      %v1635 = vpack.c.b16 %v1267, %v1263
      %v1636 = vpack.c.b16 %v1272, %v1268
      %v1637 = vpack.c.b16 %v1273, %v1269
      %v1638 = vpack.c.b16 %v1274, %v1270
      %v1639 = vpack.c.b16 %v1275, %v1271
      %v1640 = vpack.c.b16 %v1280, %v1276
      %v1641 = vpack.c.b16 %v1281, %v1277
      %v1642 = vpack.c.b16 %v1282, %v1278
      %v1643 = vpack.c.b16 %v1283, %v1279
      %v1644 = vpack.c.b16 %v1288, %v1284
      %v1645 = vpack.c.b16 %v1289, %v1285
      %v1646 = vpack.c.b16 %v1290, %v1286
      %v1647 = vpack.c.b16 %v1291, %v1287
      %v1648 = vpack.c.b16 %v1296, %v1292
      %v1649 = vpack.c.b16 %v1297, %v1293
      %v1650 = vpack.c.b16 %v1298, %v1294
      %v1651 = vpack.c.b16 %v1299, %v1295
      %v1652 = vpack.c.b16 %v1304, %v1300
      %v1653 = vpack.c.b16 %v1305, %v1301
      %v1654 = vpack.c.b16 %v1306, %v1302
      %v1655 = vpack.c.b16 %v1307, %v1303
      %v1656 = vpack.c.b16 %v1312, %v1308
      %v1657 = vpack.c.b16 %v1313, %v1309
      %v1658 = vpack.c.b16 %v1314, %v1310
      %v1659 = vpack.c.b16 %v1315, %v1311
      %v1660 = vpack.c.b16 %v1320, %v1316
      %v1661 = vpack.c.b16 %v1321, %v1317
      %v1662 = vpack.c.b16 %v1322, %v1318
      %v1663 = vpack.c.b16 %v1323, %v1319
      %v1664 = vpack.c.b16 %v1328, %v1324
      %v1665 = vpack.c.b16 %v1329, %v1325
      %v1666 = vpack.c.b16 %v1330, %v1326
      %v1667 = vpack.c.b16 %v1331, %v1327
      %v1668 = vpack.c.b16 %v1336, %v1332
      %v1669 = vpack.c.b16 %v1337, %v1333
      %v1670 = vpack.c.b16 %v1338, %v1334
      %v1671 = vpack.c.b16 %v1339, %v1335
      %v1672 = vpack.c.b16 %v1344, %v1340
      %v1673 = vpack.c.b16 %v1345, %v1341
      %v1674 = vpack.c.b16 %v1346, %v1342
      %v1675 = vpack.c.b16 %v1347, %v1343
      %v1676 = vpack.c.b16 %v1352, %v1348
      %v1677 = vpack.c.b16 %v1353, %v1349
      %v1678 = vpack.c.b16 %v1354, %v1350
      %v1679 = vpack.c.b16 %v1355, %v1351
      %v1680 = vpack.c.b16 %v1360, %v1356
      %v1681 = vpack.c.b16 %v1361, %v1357
      %v1682 = vpack.c.b16 %v1362, %v1358
      %v1683 = vpack.c.b16 %v1363, %v1359
      %v1684 = vpack.c.b16 %v1368, %v1364
      %v1685 = vpack.c.b16 %v1369, %v1365
      %v1686 = vpack.c.b16 %v1370, %v1366
      %v1687 = vpack.c.b16 %v1371, %v1367
      %v1688 = vpack.c.b16 %v1376, %v1372
      %v1689 = vpack.c.b16 %v1377, %v1373
      %v1690 = vpack.c.b16 %v1378, %v1374
      %v1691 = vpack.c.b16 %v1379, %v1375
      %v1692 = vpack.c.b16 %v1384, %v1380
      %v1693 = vpack.c.b16 %v1385, %v1381
      %v1694 = vpack.c.b16 %v1386, %v1382
      %v1695 = vpack.c.b16 %v1387, %v1383
      %v1696 = vpack.c.b16 %v1392, %v1388
      %v1697 = vpack.c.b16 %v1393, %v1389
      %v1698 = vpack.c.b16 %v1394, %v1390
      %v1699 = vpack.c.b16 %v1395, %v1391
      %v1700 = vpack.c.b16 %v1400, %v1396
      %v1701 = vpack.c.b16 %v1401, %v1397
      %v1702 = vpack.c.b16 %v1402, %v1398
      %v1703 = vpack.c.b16 %v1403, %v1399
      %v1704 = vpack.c.b16 %v1408, %v1404
      %v1705 = vpack.c.b16 %v1409, %v1405
      %v1706 = vpack.c.b16 %v1410, %v1406
      %v1707 = vpack.c.b16 %v1411, %v1407
      %v1708 = vpack.c.b16 %v1416, %v1412
      %v1709 = vpack.c.b16 %v1417, %v1413
      %v1710 = vpack.c.b16 %v1418, %v1414
      %v1711 = vpack.c.b16 %v1419, %v1415
      %v1712 = vpack.c.b16 %v1424, %v1420
      %v1713 = vpack.c.b16 %v1425, %v1421
      %v1714 = vpack.c.b16 %v1426, %v1422
      %v1715 = vpack.c.b16 %v1427, %v1423
      %v1716 = vpack.c.b16 %v1432, %v1428
      %v1717 = vpack.c.b16 %v1433, %v1429
      %v1718 = vpack.c.b16 %v1434, %v1430
      %v1719 = vpack.c.b16 %v1435, %v1431
      %v1720 = vpack.c.b16 %v1440, %v1436
      %v1721 = vpack.c.b16 %v1441, %v1437
      %v1722 = vpack.c.b16 %v1442, %v1438
      %v1723 = vpack.c.b16 %v1443, %v1439
      %v1724 = vpack.c.b16 %v1448, %v1444
      %v1725 = vpack.c.b16 %v1449, %v1445
      %v1726 = vpack.c.b16 %v1450, %v1446
      %v1727 = vpack.c.b16 %v1451, %v1447
      %v1728 = vpack.c.b16 %v1456, %v1452
      %v1729 = vpack.c.b16 %v1457, %v1453
      %v1730 = vpack.c.b16 %v1458, %v1454
      %v1731 = vpack.c.b16 %v1459, %v1455
      %v1732 = vpack.c.b16 %v1464, %v1460
      %v1733 = vpack.c.b16 %v1465, %v1461
      %v1734 = vpack.c.b16 %v1466, %v1462
      %v1735 = vpack.c.b16 %v1467, %v1463
      %v1736 = vpack.c.b16 %v1472, %v1468
      %v1737 = vpack.c.b16 %v1473, %v1469
      %v1738 = vpack.c.b16 %v1474, %v1470
      %v1739 = vpack.c.b16 %v1475, %v1471
      %v1740 = vpack.c.b16 %v1480, %v1476
      %v1741 = vpack.c.b16 %v1481, %v1477
      %v1742 = vpack.c.b16 %v1482, %v1478
      %v1743 = vpack.c.b16 %v1483, %v1479
      %v1744 = vpack.c.b16 %v1488, %v1484
      %v1745 = vpack.c.b16 %v1489, %v1485
      %v1746 = vpack.c.b16 %v1490, %v1486
      %v1747 = vpack.c.b16 %v1491, %v1487
      %v1748 = vpack.c.b16 %v1496, %v1492
      %v1749 = vpack.c.b16 %v1497, %v1493
      %v1750 = vpack.c.b16 %v1498, %v1494
      %v1751 = vpack.c.b16 %v1499, %v1495
      %v1752 = vpack.c.b16 %v1504, %v1500
      %v1753 = vpack.c.b16 %v1505, %v1501
      %v1754 = vpack.c.b16 %v1506, %v1502
      %v1755 = vpack.c.b16 %v1507, %v1503
      %v1756 = vpack.c.b16 %v1512, %v1508
      %v1757 = vpack.c.b16 %v1513, %v1509
      %v1758 = vpack.c.b16 %v1514, %v1510
      %v1759 = vpack.c.b16 %v1515, %v1511
      %v1760 = vpack.c.b16 %v1520, %v1516
      %v1761 = vpack.c.b16 %v1521, %v1517
      %v1762 = vpack.c.b16 %v1522, %v1518
      %v1763 = vpack.c.b16 %v1523, %v1519
      %v1764 = vpack.c.b16 %v1528, %v1524
      %v1765 = vpack.c.b16 %v1529, %v1525
      %v1766 = vpack.c.b16 %v1530, %v1526
      %v1767 = vpack.c.b16 %v1531, %v1527
      %v1768 = vpack.c.b16 %v1536, %v1532
      %v1769 = vpack.c.b16 %v1537, %v1533
      %v1770 = vpack.c.b16 %v1538, %v1534
      %v1771 = vpack.c.b16 %v1539, %v1535
      %v1772 = vpack.c.b16 %v1544, %v1540
      %v1773 = vpack.c.b16 %v1545, %v1541
      %v1774 = vpack.c.b16 %v1546, %v1542
      %v1775 = vpack.c.b16 %v1547, %v1543
      %v1776 = vpack.c.b16 %v1552, %v1548
      %v1777 = vpack.c.b16 %v1553, %v1549
      %v1778 = vpack.c.b16 %v1554, %v1550
      %v1779 = vpack.c.b16 %v1555, %v1551
      %2004 = vmatprep.subr.bf16.mxu0 %v1585
      %2005 = vmatpush1.bf16.msra.mxu0 %v1584
      %2006 = vmatprep.subr.bf16.mxu0 %v1581
      %2007 = vmatpush1.bf16.msra.mxu0 %v1580
      %2008 = vmatprep.subr.bf16.mxu0 %v1577
      %2009 = vmatpush1.bf16.msra.mxu0 %v1576
      %2010 = vmatprep.subr.bf16.mxu0 %v1573
      %2011 = vmatpush1.bf16.msra.mxu0 %v1572
      %2012 = vmatprep.subr.bf16.mxu0 %v1569
      %2013 = vmatpush1.bf16.msra.mxu0 %v1568
      %2014 = vmatprep.subr.bf16.mxu0 %v1565
      %2015 = vmatpush1.bf16.msra.mxu0 %v1564
      %2016 = vmatprep.subr.bf16.mxu0 %v1561
      %2017 = vmatpush1.bf16.msra.mxu0 %v1560
      %2018 = vmatprep.subr.bf16.mxu0 %v1557
      %2019 = vmatpush1.bf16.msra.mxu0 %v1556
      %2020 = vmatprep.subr.bf16.mxu0 %v1617
      %2021 = vmatpush2.bf16.msra.mxu0 %v1616
      %2022 = vmatprep.subr.bf16.mxu0 %v1613
      %2023 = vmatpush2.bf16.msra.mxu0 %v1612
      %2024 = vmatprep.subr.bf16.mxu0 %v1609
      %2025 = vmatpush2.bf16.msra.mxu0 %v1608
      %2026 = vmatprep.subr.bf16.mxu0 %v1605
      %2027 = vmatpush2.bf16.msra.mxu0 %v1604
      %2028 = vmatprep.subr.bf16.mxu0 %v1601
      %2029 = vmatpush2.bf16.msra.mxu0 %v1600
      %2030 = vmatprep.subr.bf16.mxu0 %v1597
      %2031 = vmatpush2.bf16.msra.mxu0 %v1596
      %2032 = vmatprep.subr.bf16.mxu0 %v1593
      %2033 = vmatpush2.bf16.msra.mxu0 %v1592
      %2034 = vmatprep.subr.bf16.mxu0 %v1589
      %2035 = vmatpush2.bf16.msra.mxu0 %v1588
      %2036 = vmatprep.mubr.bf16.mxu0 %v773
      %2037 = vmatmul.mubr.bf16.gmra.mxu0 %v772
      %v2038 = vpop.f32.mrf.mxu0
      %v2039 = vadd.f32 %v579, %v2038
      %v2040 = vpop.f32.mrf.mxu0
      %v2041 = vadd.f32 %v583, %v2040
      %v2042 = vpop.f32.mrf.mxu0
      %v2043 = vadd.f32 %v579, %v2042
      %v2044 = vpop.f32.mrf.mxu0
      %v2045 = vadd.f32 %v583, %v2044
      %2046 = vmatprep.mubr.bf16.mxu0 %v780
      %2047 = vmatmul.mubr.bf16.gmra.mxu0 %v779
      %v2048 = vpop.f32.mrf.mxu0
      %v2049 = vadd.f32 %v579, %v2048
      %v2050 = vpop.f32.mrf.mxu0
      %v2051 = vadd.f32 %v583, %v2050
      %v2052 = vpop.f32.mrf.mxu0
      %v2053 = vadd.f32 %v579, %v2052
      %v2054 = vpop.f32.mrf.mxu0
      %v2055 = vadd.f32 %v583, %v2054
      %2056 = vmatprep.mubr.bf16.mxu0 %v787
      %2057 = vmatmul.mubr.bf16.gmra.mxu0 %v786
      %v2058 = vpop.f32.mrf.mxu0
      %v2059 = vadd.f32 %v579, %v2058
      %v2060 = vpop.f32.mrf.mxu0
      %v2061 = vadd.f32 %v583, %v2060
      %v2062 = vpop.f32.mrf.mxu0
      %v2063 = vadd.f32 %v579, %v2062
      %v2064 = vpop.f32.mrf.mxu0
      %v2065 = vadd.f32 %v583, %v2064
      %2066 = vmatprep.mubr.bf16.mxu0 %v794
      %2067 = vmatmul.mubr.bf16.gmra.mxu0 %v793
      %v2068 = vpop.f32.mrf.mxu0
      %v2069 = vadd.f32 %v579, %v2068
      %v2070 = vpop.f32.mrf.mxu0
      %v2071 = vadd.f32 %v583, %v2070
      %v2072 = vpop.f32.mrf.mxu0
      %v2073 = vadd.f32 %v579, %v2072
      %v2074 = vpop.f32.mrf.mxu0
      %v2075 = vadd.f32 %v583, %v2074
      %2076 = vmatprep.mubr.bf16.mxu0 %v801
      %2077 = vmatmul.mubr.bf16.gmra.mxu0 %v800
      %v2078 = vpop.f32.mrf.mxu0
      %v2079 = vadd.f32 %v579, %v2078
      %v2080 = vpop.f32.mrf.mxu0
      %v2081 = vadd.f32 %v583, %v2080
      %v2082 = vpop.f32.mrf.mxu0
      %v2083 = vadd.f32 %v579, %v2082
      %v2084 = vpop.f32.mrf.mxu0
      %v2085 = vadd.f32 %v583, %v2084
      %2086 = vmatprep.mubr.bf16.mxu0 %v808
      %2087 = vmatmul.mubr.bf16.gmra.mxu0 %v807
      %v2088 = vpop.f32.mrf.mxu0
      %v2089 = vadd.f32 %v579, %v2088
      %v2090 = vpop.f32.mrf.mxu0
      %v2091 = vadd.f32 %v583, %v2090
      %v2092 = vpop.f32.mrf.mxu0
      %v2093 = vadd.f32 %v579, %v2092
      %v2094 = vpop.f32.mrf.mxu0
      %v2095 = vadd.f32 %v583, %v2094
      %2096 = vmatprep.mubr.bf16.mxu0 %v815
      %2097 = vmatmul.mubr.bf16.gmra.mxu0 %v814
      %v2098 = vpop.f32.mrf.mxu0
      %v2099 = vadd.f32 %v579, %v2098
      %v2100 = vpop.f32.mrf.mxu0
      %v2101 = vadd.f32 %v583, %v2100
      %v2102 = vpop.f32.mrf.mxu0
      %v2103 = vadd.f32 %v579, %v2102
      %v2104 = vpop.f32.mrf.mxu0
      %v2105 = vadd.f32 %v583, %v2104
      %2106 = vmatprep.mubr.bf16.mxu0 %v822
      %2107 = vmatmul.mubr.bf16.gmra.mxu0 %v821
      %v2108 = vpop.f32.mrf.mxu0
      %v2109 = vadd.f32 %v579, %v2108
      %v2110 = vpop.f32.mrf.mxu0
      %v2111 = vadd.f32 %v583, %v2110
      %v2112 = vpop.f32.mrf.mxu0
      %v2113 = vadd.f32 %v579, %v2112
      %v2114 = vpop.f32.mrf.mxu0
      %v2115 = vadd.f32 %v583, %v2114
      %2116 = vdwg.mxu0
      %2117 = vmatprep.subr.bf16.mxu0 %v1649
      %2118 = vmatpush1.bf16.msra.mxu0 %v1648
      %2119 = vmatprep.subr.bf16.mxu0 %v1645
      %2120 = vmatpush1.bf16.msra.mxu0 %v1644
      %2121 = vmatprep.subr.bf16.mxu0 %v1641
      %2122 = vmatpush1.bf16.msra.mxu0 %v1640
      %2123 = vmatprep.subr.bf16.mxu0 %v1637
      %2124 = vmatpush1.bf16.msra.mxu0 %v1636
      %2125 = vmatprep.subr.bf16.mxu0 %v1633
      %2126 = vmatpush1.bf16.msra.mxu0 %v1632
      %2127 = vmatprep.subr.bf16.mxu0 %v1629
      %2128 = vmatpush1.bf16.msra.mxu0 %v1628
      %2129 = vmatprep.subr.bf16.mxu0 %v1625
      %2130 = vmatpush1.bf16.msra.mxu0 %v1624
      %2131 = vmatprep.subr.bf16.mxu0 %v1621
      %2132 = vmatpush1.bf16.msra.mxu0 %v1620
      %2133 = vmatprep.subr.bf16.mxu0 %v1681
      %2134 = vmatpush2.bf16.msra.mxu0 %v1680
      %2135 = vmatprep.subr.bf16.mxu0 %v1677
      %2136 = vmatpush2.bf16.msra.mxu0 %v1676
      %2137 = vmatprep.subr.bf16.mxu0 %v1673
      %2138 = vmatpush2.bf16.msra.mxu0 %v1672
      %2139 = vmatprep.subr.bf16.mxu0 %v1669
      %2140 = vmatpush2.bf16.msra.mxu0 %v1668
      %2141 = vmatprep.subr.bf16.mxu0 %v1665
      %2142 = vmatpush2.bf16.msra.mxu0 %v1664
      %2143 = vmatprep.subr.bf16.mxu0 %v1661
      %2144 = vmatpush2.bf16.msra.mxu0 %v1660
      %2145 = vmatprep.subr.bf16.mxu0 %v1657
      %2146 = vmatpush2.bf16.msra.mxu0 %v1656
      %2147 = vmatprep.subr.bf16.mxu0 %v1653
      %2148 = vmatpush2.bf16.msra.mxu0 %v1652
      %2149 = vmatprep.mubr.bf16.mxu0 %v775
      %2150 = vmatmul.mubr.bf16.gmra.mxu0 %v774
      %v2151 = vpop.f32.mrf.mxu0
      %v2152 = vadd.f32 %v2039, %v2151
      %v2153 = vpop.f32.mrf.mxu0
      %v2154 = vadd.f32 %v2041, %v2153
      %v2155 = vpop.f32.mrf.mxu0
      %v2156 = vadd.f32 %v2043, %v2155
      %v2157 = vpop.f32.mrf.mxu0
      %v2158 = vadd.f32 %v2045, %v2157
      %2159 = vmatprep.mubr.bf16.mxu0 %v782
      %2160 = vmatmul.mubr.bf16.gmra.mxu0 %v781
      %v2161 = vpop.f32.mrf.mxu0
      %v2162 = vadd.f32 %v2049, %v2161
      %v2163 = vpop.f32.mrf.mxu0
      %v2164 = vadd.f32 %v2051, %v2163
      %v2165 = vpop.f32.mrf.mxu0
      %v2166 = vadd.f32 %v2053, %v2165
      %v2167 = vpop.f32.mrf.mxu0
      %v2168 = vadd.f32 %v2055, %v2167
      %2169 = vmatprep.mubr.bf16.mxu0 %v789
      %2170 = vmatmul.mubr.bf16.gmra.mxu0 %v788
      %v2171 = vpop.f32.mrf.mxu0
      %v2172 = vadd.f32 %v2059, %v2171
      %v2173 = vpop.f32.mrf.mxu0
      %v2174 = vadd.f32 %v2061, %v2173
      %v2175 = vpop.f32.mrf.mxu0
      %v2176 = vadd.f32 %v2063, %v2175
      %v2177 = vpop.f32.mrf.mxu0
      %v2178 = vadd.f32 %v2065, %v2177
      %2179 = vmatprep.mubr.bf16.mxu0 %v796
      %2180 = vmatmul.mubr.bf16.gmra.mxu0 %v795
      %v2181 = vpop.f32.mrf.mxu0
      %v2182 = vadd.f32 %v2069, %v2181
      %v2183 = vpop.f32.mrf.mxu0
      %v2184 = vadd.f32 %v2071, %v2183
      %v2185 = vpop.f32.mrf.mxu0
      %v2186 = vadd.f32 %v2073, %v2185
      %v2187 = vpop.f32.mrf.mxu0
      %v2188 = vadd.f32 %v2075, %v2187
      %2189 = vmatprep.mubr.bf16.mxu0 %v803
      %2190 = vmatmul.mubr.bf16.gmra.mxu0 %v802
      %v2191 = vpop.f32.mrf.mxu0
      %v2192 = vadd.f32 %v2079, %v2191
      %v2193 = vpop.f32.mrf.mxu0
      %v2194 = vadd.f32 %v2081, %v2193
      %v2195 = vpop.f32.mrf.mxu0
      %v2196 = vadd.f32 %v2083, %v2195
      %v2197 = vpop.f32.mrf.mxu0
      %v2198 = vadd.f32 %v2085, %v2197
      %2199 = vmatprep.mubr.bf16.mxu0 %v810
      %2200 = vmatmul.mubr.bf16.gmra.mxu0 %v809
      %v2201 = vpop.f32.mrf.mxu0
      %v2202 = vadd.f32 %v2089, %v2201
      %v2203 = vpop.f32.mrf.mxu0
      %v2204 = vadd.f32 %v2091, %v2203
      %v2205 = vpop.f32.mrf.mxu0
      %v2206 = vadd.f32 %v2093, %v2205
      %v2207 = vpop.f32.mrf.mxu0
      %v2208 = vadd.f32 %v2095, %v2207
      %2209 = vmatprep.mubr.bf16.mxu0 %v817
      %2210 = vmatmul.mubr.bf16.gmra.mxu0 %v816
      %v2211 = vpop.f32.mrf.mxu0
      %v2212 = vadd.f32 %v2099, %v2211
      %v2213 = vpop.f32.mrf.mxu0
      %v2214 = vadd.f32 %v2101, %v2213
      %v2215 = vpop.f32.mrf.mxu0
      %v2216 = vadd.f32 %v2103, %v2215
      %v2217 = vpop.f32.mrf.mxu0
      %v2218 = vadd.f32 %v2105, %v2217
      %2219 = vmatprep.mubr.bf16.mxu0 %v824
      %2220 = vmatmul.mubr.bf16.gmra.mxu0 %v823
      %v2221 = vpop.f32.mrf.mxu0
      %v2222 = vadd.f32 %v2109, %v2221
      %v2223 = vpop.f32.mrf.mxu0
      %v2224 = vadd.f32 %v2111, %v2223
      %v2225 = vpop.f32.mrf.mxu0
      %v2226 = vadd.f32 %v2113, %v2225
      %v2227 = vpop.f32.mrf.mxu0
      %v2228 = vadd.f32 %v2115, %v2227
      %2229 = vdwg.mxu0
      %2230 = vmatprep.subr.bf16.mxu0 %v1713
      %2231 = vmatpush1.bf16.msra.mxu0 %v1712
      %2232 = vmatprep.subr.bf16.mxu0 %v1709
      %2233 = vmatpush1.bf16.msra.mxu0 %v1708
      %2234 = vmatprep.subr.bf16.mxu0 %v1705
      %2235 = vmatpush1.bf16.msra.mxu0 %v1704
      %2236 = vmatprep.subr.bf16.mxu0 %v1701
      %2237 = vmatpush1.bf16.msra.mxu0 %v1700
      %2238 = vmatprep.subr.bf16.mxu0 %v1697
      %2239 = vmatpush1.bf16.msra.mxu0 %v1696
      %2240 = vmatprep.subr.bf16.mxu0 %v1693
      %2241 = vmatpush1.bf16.msra.mxu0 %v1692
      %2242 = vmatprep.subr.bf16.mxu0 %v1689
      %2243 = vmatpush1.bf16.msra.mxu0 %v1688
      %2244 = vmatprep.subr.bf16.mxu0 %v1685
      %2245 = vmatpush1.bf16.msra.mxu0 %v1684
      %2246 = vmatprep.subr.bf16.mxu0 %v1745
      %2247 = vmatpush2.bf16.msra.mxu0 %v1744
      %2248 = vmatprep.subr.bf16.mxu0 %v1741
      %2249 = vmatpush2.bf16.msra.mxu0 %v1740
      %2250 = vmatprep.subr.bf16.mxu0 %v1737
      %2251 = vmatpush2.bf16.msra.mxu0 %v1736
      %2252 = vmatprep.subr.bf16.mxu0 %v1733
      %2253 = vmatpush2.bf16.msra.mxu0 %v1732
      %2254 = vmatprep.subr.bf16.mxu0 %v1729
      %2255 = vmatpush2.bf16.msra.mxu0 %v1728
      %2256 = vmatprep.subr.bf16.mxu0 %v1725
      %2257 = vmatpush2.bf16.msra.mxu0 %v1724
      %2258 = vmatprep.subr.bf16.mxu0 %v1721
      %2259 = vmatpush2.bf16.msra.mxu0 %v1720
      %2260 = vmatprep.subr.bf16.mxu0 %v1717
      %2261 = vmatpush2.bf16.msra.mxu0 %v1716
      %2262 = vmatprep.mubr.bf16.mxu0 %v777
      %2263 = vmatmul.mubr.bf16.gmra.mxu0 %v776
      %v2264 = vpop.f32.mrf.mxu0
      %v2265 = vadd.f32 %v2152, %v2264
      %v2266 = vpop.f32.mrf.mxu0
      %v2267 = vadd.f32 %v2154, %v2266
      %v2268 = vpop.f32.mrf.mxu0
      %v2269 = vadd.f32 %v2156, %v2268
      %v2270 = vpop.f32.mrf.mxu0
      %v2271 = vadd.f32 %v2158, %v2270
      %2272 = vmatprep.mubr.bf16.mxu0 %v784
      %2273 = vmatmul.mubr.bf16.gmra.mxu0 %v783
      %v2274 = vpop.f32.mrf.mxu0
      %v2275 = vadd.f32 %v2162, %v2274
      %v2276 = vpop.f32.mrf.mxu0
      %v2277 = vadd.f32 %v2164, %v2276
      %v2278 = vpop.f32.mrf.mxu0
      %v2279 = vadd.f32 %v2166, %v2278
      %v2280 = vpop.f32.mrf.mxu0
      %v2281 = vadd.f32 %v2168, %v2280
      %2282 = vmatprep.mubr.bf16.mxu0 %v791
      %2283 = vmatmul.mubr.bf16.gmra.mxu0 %v790
      %v2284 = vpop.f32.mrf.mxu0
      %v2285 = vadd.f32 %v2172, %v2284
      %v2286 = vpop.f32.mrf.mxu0
      %v2287 = vadd.f32 %v2174, %v2286
      %v2288 = vpop.f32.mrf.mxu0
      %v2289 = vadd.f32 %v2176, %v2288
      %v2290 = vpop.f32.mrf.mxu0
      %v2291 = vadd.f32 %v2178, %v2290
      %2292 = vmatprep.mubr.bf16.mxu0 %v798
      %2293 = vmatmul.mubr.bf16.gmra.mxu0 %v797
      %v2294 = vpop.f32.mrf.mxu0
      %v2295 = vadd.f32 %v2182, %v2294
      %v2296 = vpop.f32.mrf.mxu0
      %v2297 = vadd.f32 %v2184, %v2296
      %v2298 = vpop.f32.mrf.mxu0
      %v2299 = vadd.f32 %v2186, %v2298
      %v2300 = vpop.f32.mrf.mxu0
      %v2301 = vadd.f32 %v2188, %v2300
      %2302 = vmatprep.mubr.bf16.mxu0 %v805
      %2303 = vmatmul.mubr.bf16.gmra.mxu0 %v804
      %v2304 = vpop.f32.mrf.mxu0
      %v2305 = vadd.f32 %v2192, %v2304
      %v2306 = vpop.f32.mrf.mxu0
      %v2307 = vadd.f32 %v2194, %v2306
      %v2308 = vpop.f32.mrf.mxu0
      %v2309 = vadd.f32 %v2196, %v2308
      %v2310 = vpop.f32.mrf.mxu0
      %v2311 = vadd.f32 %v2198, %v2310
      %2312 = vmatprep.mubr.bf16.mxu0 %v812
      %2313 = vmatmul.mubr.bf16.gmra.mxu0 %v811
      %v2314 = vpop.f32.mrf.mxu0
      %v2315 = vadd.f32 %v2202, %v2314
      %v2316 = vpop.f32.mrf.mxu0
      %v2317 = vadd.f32 %v2204, %v2316
      %v2318 = vpop.f32.mrf.mxu0
      %v2319 = vadd.f32 %v2206, %v2318
      %v2320 = vpop.f32.mrf.mxu0
      %v2321 = vadd.f32 %v2208, %v2320
      %2322 = vmatprep.mubr.bf16.mxu0 %v819
      %2323 = vmatmul.mubr.bf16.gmra.mxu0 %v818
      %v2324 = vpop.f32.mrf.mxu0
      %v2325 = vadd.f32 %v2212, %v2324
      %v2326 = vpop.f32.mrf.mxu0
      %v2327 = vadd.f32 %v2214, %v2326
      %v2328 = vpop.f32.mrf.mxu0
      %v2329 = vadd.f32 %v2216, %v2328
      %v2330 = vpop.f32.mrf.mxu0
      %v2331 = vadd.f32 %v2218, %v2330
      %2332 = vmatprep.mubr.bf16.mxu0 %v826
      %2333 = vmatmul.mubr.bf16.gmra.mxu0 %v825
      %v2334 = vpop.f32.mrf.mxu0
      %v2335 = vadd.f32 %v2222, %v2334
      %v2336 = vpop.f32.mrf.mxu0
      %v2337 = vadd.f32 %v2224, %v2336
      %v2338 = vpop.f32.mrf.mxu0
      %v2339 = vadd.f32 %v2226, %v2338
      %v2340 = vpop.f32.mrf.mxu0
      %v2341 = vadd.f32 %v2228, %v2340
      %2342 = vdwg.mxu0
      %2343 = vmatprep.subr.bf16.mxu0 %v1777
      %2344 = vmatpush1.bf16.msra.mxu0 %v1776
      %2345 = vmatprep.subr.bf16.mxu0 %v1773
      %2346 = vmatpush1.bf16.msra.mxu0 %v1772
      %2347 = vmatprep.subr.bf16.mxu0 %v1769
      %2348 = vmatpush1.bf16.msra.mxu0 %v1768
      %2349 = vmatprep.subr.bf16.mxu0 %v1765
      %2350 = vmatpush1.bf16.msra.mxu0 %v1764
      %2351 = vmatprep.subr.bf16.mxu0 %v1761
      %2352 = vmatpush1.bf16.msra.mxu0 %v1760
      %2353 = vmatprep.subr.bf16.mxu0 %v1757
      %2354 = vmatpush1.bf16.msra.mxu0 %v1756
      %2355 = vmatprep.subr.bf16.mxu0 %v1753
      %2356 = vmatpush1.bf16.msra.mxu0 %v1752
      %2357 = vmatprep.subr.bf16.mxu0 %v1749
      %2358 = vmatpush1.bf16.msra.mxu0 %v1748
      %2359 = vmatprep.subr.bf16.mxu0 0
      %2360 = vmatpush2.bf16.msra.mxu0 0
      %2361 = vmatprep.subr.bf16.mxu0 0
      %2362 = vmatpush2.bf16.msra.mxu0 0
      %2363 = vmatprep.subr.bf16.mxu0 0
      %2364 = vmatpush2.bf16.msra.mxu0 0
      %2365 = vmatprep.subr.bf16.mxu0 0
      %2366 = vmatpush2.bf16.msra.mxu0 0
      %2367 = vmatprep.subr.bf16.mxu0 0
      %2368 = vmatpush2.bf16.msra.mxu0 0
      %2369 = vmatprep.subr.bf16.mxu0 0
      %2370 = vmatpush2.bf16.msra.mxu0 0
      %2371 = vmatprep.subr.bf16.mxu0 0
      %2372 = vmatpush2.bf16.msra.mxu0 0
      %2373 = vmatprep.subr.bf16.mxu0 0
      %2374 = vmatpush2.bf16.msra.mxu0 0
      %2375 = vmatprep.mubr.bf16.mxu0 0
      %2376 = vmatmul.mubr.bf16.gmra.mxu0 %v778
      %v2377 = vpop.f32.mrf.mxu0
      %v2378 = vadd.f32 %v2265, %v2377
      %v2379 = vpop.f32.mrf.mxu0
      %v2380 = vadd.f32 %v2267, %v2379
      %v2381 = vpop.f32.mrf.mxu0
      %v2382 = vadd.f32 %v2269, %v2381
      %v2383 = vpop.f32.mrf.mxu0
      %v2384 = vadd.f32 %v2271, %v2383
      %2385 = vmatprep.mubr.bf16.mxu0 0
      %2386 = vmatmul.mubr.bf16.gmra.mxu0 %v785
      %v2387 = vpop.f32.mrf.mxu0
      %v2388 = vadd.f32 %v2275, %v2387
      %v2389 = vpop.f32.mrf.mxu0
      %v2390 = vadd.f32 %v2277, %v2389
      %v2391 = vpop.f32.mrf.mxu0
      %v2392 = vadd.f32 %v2279, %v2391
      %v2393 = vpop.f32.mrf.mxu0
      %v2394 = vadd.f32 %v2281, %v2393
      %2395 = vmatprep.mubr.bf16.mxu0 0
      %2396 = vmatmul.mubr.bf16.gmra.mxu0 %v792
      %v2397 = vpop.f32.mrf.mxu0
      %v2398 = vadd.f32 %v2285, %v2397
      %v2399 = vpop.f32.mrf.mxu0
      %v2400 = vadd.f32 %v2287, %v2399
      %v2401 = vpop.f32.mrf.mxu0
      %v2402 = vadd.f32 %v2289, %v2401
      %v2403 = vpop.f32.mrf.mxu0
      %v2404 = vadd.f32 %v2291, %v2403
      %2405 = vmatprep.mubr.bf16.mxu0 0
      %2406 = vmatmul.mubr.bf16.gmra.mxu0 %v799
      %v2407 = vpop.f32.mrf.mxu0
      %v2408 = vadd.f32 %v2295, %v2407
      %v2409 = vpop.f32.mrf.mxu0
      %v2410 = vadd.f32 %v2297, %v2409
      %v2411 = vpop.f32.mrf.mxu0
      %v2412 = vadd.f32 %v2299, %v2411
      %v2413 = vpop.f32.mrf.mxu0
      %v2414 = vadd.f32 %v2301, %v2413
      %2415 = vmatprep.mubr.bf16.mxu0 0
      %2416 = vmatmul.mubr.bf16.gmra.mxu0 %v806
      %v2417 = vpop.f32.mrf.mxu0
      %v2418 = vadd.f32 %v2305, %v2417
      %v2419 = vpop.f32.mrf.mxu0
      %v2420 = vadd.f32 %v2307, %v2419
      %v2421 = vpop.f32.mrf.mxu0
      %v2422 = vadd.f32 %v2309, %v2421
      %v2423 = vpop.f32.mrf.mxu0
      %v2424 = vadd.f32 %v2311, %v2423
      %2425 = vmatprep.mubr.bf16.mxu0 0
      %2426 = vmatmul.mubr.bf16.gmra.mxu0 %v813
      %v2427 = vpop.f32.mrf.mxu0
      %v2428 = vadd.f32 %v2315, %v2427
      %v2429 = vpop.f32.mrf.mxu0
      %v2430 = vadd.f32 %v2317, %v2429
      %v2431 = vpop.f32.mrf.mxu0
      %v2432 = vadd.f32 %v2319, %v2431
      %v2433 = vpop.f32.mrf.mxu0
      %v2434 = vadd.f32 %v2321, %v2433
      %2435 = vmatprep.mubr.bf16.mxu0 0
      %2436 = vmatmul.mubr.bf16.gmra.mxu0 %v820
      %v2437 = vpop.f32.mrf.mxu0
      %v2438 = vadd.f32 %v2325, %v2437
      %v2439 = vpop.f32.mrf.mxu0
      %v2440 = vadd.f32 %v2327, %v2439
      %v2441 = vpop.f32.mrf.mxu0
      %v2442 = vadd.f32 %v2329, %v2441
      %v2443 = vpop.f32.mrf.mxu0
      %v2444 = vadd.f32 %v2331, %v2443
      %2445 = vmatprep.mubr.bf16.mxu0 0
      %2446 = vmatmul.mubr.bf16.gmra.mxu0 %v827
      %v2447 = vpop.f32.mrf.mxu0
      %v2448 = vadd.f32 %v2335, %v2447
      %v2449 = vpop.f32.mrf.mxu0
      %v2450 = vadd.f32 %v2337, %v2449
      %v2451 = vpop.f32.mrf.mxu0
      %v2452 = vadd.f32 %v2339, %v2451
      %v2453 = vpop.f32.mrf.mxu0
      %v2454 = vadd.f32 %v2341, %v2453
      %2455 = vdwg.mxu0
      %2456 = vmatprep.subr.bf16.mxu0 %v1587
      %2457 = vmatpush1.bf16.msra.mxu0 %v1586
      %2458 = vmatprep.subr.bf16.mxu0 %v1583
      %2459 = vmatpush1.bf16.msra.mxu0 %v1582
      %2460 = vmatprep.subr.bf16.mxu0 %v1579
      %2461 = vmatpush1.bf16.msra.mxu0 %v1578
      %2462 = vmatprep.subr.bf16.mxu0 %v1575
      %2463 = vmatpush1.bf16.msra.mxu0 %v1574
      %2464 = vmatprep.subr.bf16.mxu0 %v1571
      %2465 = vmatpush1.bf16.msra.mxu0 %v1570
      %2466 = vmatprep.subr.bf16.mxu0 %v1567
      %2467 = vmatpush1.bf16.msra.mxu0 %v1566
      %2468 = vmatprep.subr.bf16.mxu0 %v1563
      %2469 = vmatpush1.bf16.msra.mxu0 %v1562
      %2470 = vmatprep.subr.bf16.mxu0 %v1559
      %2471 = vmatpush1.bf16.msra.mxu0 %v1558
      %2472 = vmatprep.subr.bf16.mxu0 %v1619
      %2473 = vmatpush2.bf16.msra.mxu0 %v1618
      %2474 = vmatprep.subr.bf16.mxu0 %v1615
      %2475 = vmatpush2.bf16.msra.mxu0 %v1614
      %2476 = vmatprep.subr.bf16.mxu0 %v1611
      %2477 = vmatpush2.bf16.msra.mxu0 %v1610
      %2478 = vmatprep.subr.bf16.mxu0 %v1607
      %2479 = vmatpush2.bf16.msra.mxu0 %v1606
      %2480 = vmatprep.subr.bf16.mxu0 %v1603
      %2481 = vmatpush2.bf16.msra.mxu0 %v1602
      %2482 = vmatprep.subr.bf16.mxu0 %v1599
      %2483 = vmatpush2.bf16.msra.mxu0 %v1598
      %2484 = vmatprep.subr.bf16.mxu0 %v1595
      %2485 = vmatpush2.bf16.msra.mxu0 %v1594
      %2486 = vmatprep.subr.bf16.mxu0 %v1591
      %2487 = vmatpush2.bf16.msra.mxu0 %v1590
      %2488 = vmatprep.mubr.bf16.mxu0 %v773
      %2489 = vmatmul.mubr.bf16.gmra.mxu0 %v772
      %v2490 = vpop.f32.mrf.mxu0
      %v2491 = vadd.f32 %v587, %v2490
      %v2492 = vpop.f32.mrf.mxu0
      %v2493 = vadd.f32 %v591, %v2492
      %v2494 = vpop.f32.mrf.mxu0
      %v2495 = vadd.f32 %v587, %v2494
      %v2496 = vpop.f32.mrf.mxu0
      %v2497 = vadd.f32 %v591, %v2496
      %2498 = vmatprep.mubr.bf16.mxu0 %v780
      %2499 = vmatmul.mubr.bf16.gmra.mxu0 %v779
      %v2500 = vpop.f32.mrf.mxu0
      %v2501 = vadd.f32 %v587, %v2500
      %v2502 = vpop.f32.mrf.mxu0
      %v2503 = vadd.f32 %v591, %v2502
      %v2504 = vpop.f32.mrf.mxu0
      %v2505 = vadd.f32 %v587, %v2504
      %v2506 = vpop.f32.mrf.mxu0
      %v2507 = vadd.f32 %v591, %v2506
      %2508 = vmatprep.mubr.bf16.mxu0 %v787
      %2509 = vmatmul.mubr.bf16.gmra.mxu0 %v786
      %v2510 = vpop.f32.mrf.mxu0
      %v2511 = vadd.f32 %v587, %v2510
      %v2512 = vpop.f32.mrf.mxu0
      %v2513 = vadd.f32 %v591, %v2512
      %v2514 = vpop.f32.mrf.mxu0
      %v2515 = vadd.f32 %v587, %v2514
      %v2516 = vpop.f32.mrf.mxu0
      %v2517 = vadd.f32 %v591, %v2516
      %2518 = vmatprep.mubr.bf16.mxu0 %v794
      %2519 = vmatmul.mubr.bf16.gmra.mxu0 %v793
      %v2520 = vpop.f32.mrf.mxu0
      %v2521 = vadd.f32 %v587, %v2520
      %v2522 = vpop.f32.mrf.mxu0
      %v2523 = vadd.f32 %v591, %v2522
      %v2524 = vpop.f32.mrf.mxu0
      %v2525 = vadd.f32 %v587, %v2524
      %v2526 = vpop.f32.mrf.mxu0
      %v2527 = vadd.f32 %v591, %v2526
      %2528 = vmatprep.mubr.bf16.mxu0 %v801
      %2529 = vmatmul.mubr.bf16.gmra.mxu0 %v800
      %v2530 = vpop.f32.mrf.mxu0
      %v2531 = vadd.f32 %v587, %v2530
      %v2532 = vpop.f32.mrf.mxu0
      %v2533 = vadd.f32 %v591, %v2532
      %v2534 = vpop.f32.mrf.mxu0
      %v2535 = vadd.f32 %v587, %v2534
      %v2536 = vpop.f32.mrf.mxu0
      %v2537 = vadd.f32 %v591, %v2536
      %2538 = vmatprep.mubr.bf16.mxu0 %v808
      %2539 = vmatmul.mubr.bf16.gmra.mxu0 %v807
      %v2540 = vpop.f32.mrf.mxu0
      %v2541 = vadd.f32 %v587, %v2540
      %v2542 = vpop.f32.mrf.mxu0
      %v2543 = vadd.f32 %v591, %v2542
      %v2544 = vpop.f32.mrf.mxu0
      %v2545 = vadd.f32 %v587, %v2544
      %v2546 = vpop.f32.mrf.mxu0
      %v2547 = vadd.f32 %v591, %v2546
      %2548 = vmatprep.mubr.bf16.mxu0 %v815
      %2549 = vmatmul.mubr.bf16.gmra.mxu0 %v814
      %v2550 = vpop.f32.mrf.mxu0
      %v2551 = vadd.f32 %v587, %v2550
      %v2552 = vpop.f32.mrf.mxu0
      %v2553 = vadd.f32 %v591, %v2552
      %v2554 = vpop.f32.mrf.mxu0
      %v2555 = vadd.f32 %v587, %v2554
      %v2556 = vpop.f32.mrf.mxu0
      %v2557 = vadd.f32 %v591, %v2556
      %2558 = vmatprep.mubr.bf16.mxu0 %v822
      %2559 = vmatmul.mubr.bf16.gmra.mxu0 %v821
      %v2560 = vpop.f32.mrf.mxu0
      %v2561 = vadd.f32 %v587, %v2560
      %v2562 = vpop.f32.mrf.mxu0
      %v2563 = vadd.f32 %v591, %v2562
      %v2564 = vpop.f32.mrf.mxu0
      %v2565 = vadd.f32 %v587, %v2564
      %v2566 = vpop.f32.mrf.mxu0
      %v2567 = vadd.f32 %v591, %v2566
      %2568 = vdwg.mxu0
      %2569 = vmatprep.subr.bf16.mxu0 %v1651
      %2570 = vmatpush1.bf16.msra.mxu0 %v1650
      %2571 = vmatprep.subr.bf16.mxu0 %v1647
      %2572 = vmatpush1.bf16.msra.mxu0 %v1646
      %2573 = vmatprep.subr.bf16.mxu0 %v1643
      %2574 = vmatpush1.bf16.msra.mxu0 %v1642
      %2575 = vmatprep.subr.bf16.mxu0 %v1639
      %2576 = vmatpush1.bf16.msra.mxu0 %v1638
      %2577 = vmatprep.subr.bf16.mxu0 %v1635
      %2578 = vmatpush1.bf16.msra.mxu0 %v1634
      %2579 = vmatprep.subr.bf16.mxu0 %v1631
      %2580 = vmatpush1.bf16.msra.mxu0 %v1630
      %2581 = vmatprep.subr.bf16.mxu0 %v1627
      %2582 = vmatpush1.bf16.msra.mxu0 %v1626
      %2583 = vmatprep.subr.bf16.mxu0 %v1623
      %2584 = vmatpush1.bf16.msra.mxu0 %v1622
      %2585 = vmatprep.subr.bf16.mxu0 %v1683
      %2586 = vmatpush2.bf16.msra.mxu0 %v1682
      %2587 = vmatprep.subr.bf16.mxu0 %v1679
      %2588 = vmatpush2.bf16.msra.mxu0 %v1678
      %2589 = vmatprep.subr.bf16.mxu0 %v1675
      %2590 = vmatpush2.bf16.msra.mxu0 %v1674
      %2591 = vmatprep.subr.bf16.mxu0 %v1671
      %2592 = vmatpush2.bf16.msra.mxu0 %v1670
      %2593 = vmatprep.subr.bf16.mxu0 %v1667
      %2594 = vmatpush2.bf16.msra.mxu0 %v1666
      %2595 = vmatprep.subr.bf16.mxu0 %v1663
      %2596 = vmatpush2.bf16.msra.mxu0 %v1662
      %2597 = vmatprep.subr.bf16.mxu0 %v1659
      %2598 = vmatpush2.bf16.msra.mxu0 %v1658
      %2599 = vmatprep.subr.bf16.mxu0 %v1655
      %2600 = vmatpush2.bf16.msra.mxu0 %v1654
      %2601 = vmatprep.mubr.bf16.mxu0 %v775
      %2602 = vmatmul.mubr.bf16.gmra.mxu0 %v774
      %v2603 = vpop.f32.mrf.mxu0
      %v2604 = vadd.f32 %v2491, %v2603
      %v2605 = vpop.f32.mrf.mxu0
      %v2606 = vadd.f32 %v2493, %v2605
      %v2607 = vpop.f32.mrf.mxu0
      %v2608 = vadd.f32 %v2495, %v2607
      %v2609 = vpop.f32.mrf.mxu0
      %v2610 = vadd.f32 %v2497, %v2609
      %2611 = vmatprep.mubr.bf16.mxu0 %v782
      %2612 = vmatmul.mubr.bf16.gmra.mxu0 %v781
      %v2613 = vpop.f32.mrf.mxu0
      %v2614 = vadd.f32 %v2501, %v2613
      %v2615 = vpop.f32.mrf.mxu0
      %v2616 = vadd.f32 %v2503, %v2615
      %v2617 = vpop.f32.mrf.mxu0
      %v2618 = vadd.f32 %v2505, %v2617
      %v2619 = vpop.f32.mrf.mxu0
      %v2620 = vadd.f32 %v2507, %v2619
      %2621 = vmatprep.mubr.bf16.mxu0 %v789
      %2622 = vmatmul.mubr.bf16.gmra.mxu0 %v788
      %v2623 = vpop.f32.mrf.mxu0
      %v2624 = vadd.f32 %v2511, %v2623
      %v2625 = vpop.f32.mrf.mxu0
      %v2626 = vadd.f32 %v2513, %v2625
      %v2627 = vpop.f32.mrf.mxu0
      %v2628 = vadd.f32 %v2515, %v2627
      %v2629 = vpop.f32.mrf.mxu0
      %v2630 = vadd.f32 %v2517, %v2629
      %2631 = vmatprep.mubr.bf16.mxu0 %v796
      %2632 = vmatmul.mubr.bf16.gmra.mxu0 %v795
      %v2633 = vpop.f32.mrf.mxu0
      %v2634 = vadd.f32 %v2521, %v2633
      %v2635 = vpop.f32.mrf.mxu0
      %v2636 = vadd.f32 %v2523, %v2635
      %v2637 = vpop.f32.mrf.mxu0
      %v2638 = vadd.f32 %v2525, %v2637
      %v2639 = vpop.f32.mrf.mxu0
      %v2640 = vadd.f32 %v2527, %v2639
      %2641 = vmatprep.mubr.bf16.mxu0 %v803
      %2642 = vmatmul.mubr.bf16.gmra.mxu0 %v802
      %v2643 = vpop.f32.mrf.mxu0
      %v2644 = vadd.f32 %v2531, %v2643
      %v2645 = vpop.f32.mrf.mxu0
      %v2646 = vadd.f32 %v2533, %v2645
      %v2647 = vpop.f32.mrf.mxu0
      %v2648 = vadd.f32 %v2535, %v2647
      %v2649 = vpop.f32.mrf.mxu0
      %v2650 = vadd.f32 %v2537, %v2649
      %2651 = vmatprep.mubr.bf16.mxu0 %v810
      %2652 = vmatmul.mubr.bf16.gmra.mxu0 %v809
      %v2653 = vpop.f32.mrf.mxu0
      %v2654 = vadd.f32 %v2541, %v2653
      %v2655 = vpop.f32.mrf.mxu0
      %v2656 = vadd.f32 %v2543, %v2655
      %v2657 = vpop.f32.mrf.mxu0
      %v2658 = vadd.f32 %v2545, %v2657
      %v2659 = vpop.f32.mrf.mxu0
      %v2660 = vadd.f32 %v2547, %v2659
      %2661 = vmatprep.mubr.bf16.mxu0 %v817
      %2662 = vmatmul.mubr.bf16.gmra.mxu0 %v816
      %v2663 = vpop.f32.mrf.mxu0
      %v2664 = vadd.f32 %v2551, %v2663
      %v2665 = vpop.f32.mrf.mxu0
      %v2666 = vadd.f32 %v2553, %v2665
      %v2667 = vpop.f32.mrf.mxu0
      %v2668 = vadd.f32 %v2555, %v2667
      %v2669 = vpop.f32.mrf.mxu0
      %v2670 = vadd.f32 %v2557, %v2669
      %2671 = vmatprep.mubr.bf16.mxu0 %v824
      %2672 = vmatmul.mubr.bf16.gmra.mxu0 %v823
      %v2673 = vpop.f32.mrf.mxu0
      %v2674 = vadd.f32 %v2561, %v2673
      %v2675 = vpop.f32.mrf.mxu0
      %v2676 = vadd.f32 %v2563, %v2675
      %v2677 = vpop.f32.mrf.mxu0
      %v2678 = vadd.f32 %v2565, %v2677
      %v2679 = vpop.f32.mrf.mxu0
      %v2680 = vadd.f32 %v2567, %v2679
      %2681 = vdwg.mxu0
      %2682 = vmatprep.subr.bf16.mxu0 %v1715
      %2683 = vmatpush1.bf16.msra.mxu0 %v1714
      %2684 = vmatprep.subr.bf16.mxu0 %v1711
      %2685 = vmatpush1.bf16.msra.mxu0 %v1710
      %2686 = vmatprep.subr.bf16.mxu0 %v1707
      %2687 = vmatpush1.bf16.msra.mxu0 %v1706
      %2688 = vmatprep.subr.bf16.mxu0 %v1703
      %2689 = vmatpush1.bf16.msra.mxu0 %v1702
      %2690 = vmatprep.subr.bf16.mxu0 %v1699
      %2691 = vmatpush1.bf16.msra.mxu0 %v1698
      %2692 = vmatprep.subr.bf16.mxu0 %v1695
      %2693 = vmatpush1.bf16.msra.mxu0 %v1694
      %2694 = vmatprep.subr.bf16.mxu0 %v1691
      %2695 = vmatpush1.bf16.msra.mxu0 %v1690
      %2696 = vmatprep.subr.bf16.mxu0 %v1687
      %2697 = vmatpush1.bf16.msra.mxu0 %v1686
      %2698 = vmatprep.subr.bf16.mxu0 %v1747
      %2699 = vmatpush2.bf16.msra.mxu0 %v1746
      %2700 = vmatprep.subr.bf16.mxu0 %v1743
      %2701 = vmatpush2.bf16.msra.mxu0 %v1742
      %2702 = vmatprep.subr.bf16.mxu0 %v1739
      %2703 = vmatpush2.bf16.msra.mxu0 %v1738
      %2704 = vmatprep.subr.bf16.mxu0 %v1735
      %2705 = vmatpush2.bf16.msra.mxu0 %v1734
      %2706 = vmatprep.subr.bf16.mxu0 %v1731
      %2707 = vmatpush2.bf16.msra.mxu0 %v1730
      %2708 = vmatprep.subr.bf16.mxu0 %v1727
      %2709 = vmatpush2.bf16.msra.mxu0 %v1726
      %2710 = vmatprep.subr.bf16.mxu0 %v1723
      %2711 = vmatpush2.bf16.msra.mxu0 %v1722
      %2712 = vmatprep.subr.bf16.mxu0 %v1719
      %2713 = vmatpush2.bf16.msra.mxu0 %v1718
      %2714 = vmatprep.mubr.bf16.mxu0 %v777
      %2715 = vmatmul.mubr.bf16.gmra.mxu0 %v776
      %v2716 = vpop.f32.mrf.mxu0
      %v2717 = vadd.f32 %v2604, %v2716
      %v2718 = vpop.f32.mrf.mxu0
      %v2719 = vadd.f32 %v2606, %v2718
      %v2720 = vpop.f32.mrf.mxu0
      %v2721 = vadd.f32 %v2608, %v2720
      %v2722 = vpop.f32.mrf.mxu0
      %v2723 = vadd.f32 %v2610, %v2722
      %2724 = vmatprep.mubr.bf16.mxu0 %v784
      %2725 = vmatmul.mubr.bf16.gmra.mxu0 %v783
      %v2726 = vpop.f32.mrf.mxu0
      %v2727 = vadd.f32 %v2614, %v2726
      %v2728 = vpop.f32.mrf.mxu0
      %v2729 = vadd.f32 %v2616, %v2728
      %v2730 = vpop.f32.mrf.mxu0
      %v2731 = vadd.f32 %v2618, %v2730
      %v2732 = vpop.f32.mrf.mxu0
      %v2733 = vadd.f32 %v2620, %v2732
      %2734 = vmatprep.mubr.bf16.mxu0 %v791
      %2735 = vmatmul.mubr.bf16.gmra.mxu0 %v790
      %v2736 = vpop.f32.mrf.mxu0
      %v2737 = vadd.f32 %v2624, %v2736
      %v2738 = vpop.f32.mrf.mxu0
      %v2739 = vadd.f32 %v2626, %v2738
      %v2740 = vpop.f32.mrf.mxu0
      %v2741 = vadd.f32 %v2628, %v2740
      %v2742 = vpop.f32.mrf.mxu0
      %v2743 = vadd.f32 %v2630, %v2742
      %2744 = vmatprep.mubr.bf16.mxu0 %v798
      %2745 = vmatmul.mubr.bf16.gmra.mxu0 %v797
      %v2746 = vpop.f32.mrf.mxu0
      %v2747 = vadd.f32 %v2634, %v2746
      %v2748 = vpop.f32.mrf.mxu0
      %v2749 = vadd.f32 %v2636, %v2748
      %v2750 = vpop.f32.mrf.mxu0
      %v2751 = vadd.f32 %v2638, %v2750
      %v2752 = vpop.f32.mrf.mxu0
      %v2753 = vadd.f32 %v2640, %v2752
      %2754 = vmatprep.mubr.bf16.mxu0 %v805
      %2755 = vmatmul.mubr.bf16.gmra.mxu0 %v804
      %v2756 = vpop.f32.mrf.mxu0
      %v2757 = vadd.f32 %v2644, %v2756
      %v2758 = vpop.f32.mrf.mxu0
      %v2759 = vadd.f32 %v2646, %v2758
      %v2760 = vpop.f32.mrf.mxu0
      %v2761 = vadd.f32 %v2648, %v2760
      %v2762 = vpop.f32.mrf.mxu0
      %v2763 = vadd.f32 %v2650, %v2762
      %2764 = vmatprep.mubr.bf16.mxu0 %v812
      %2765 = vmatmul.mubr.bf16.gmra.mxu0 %v811
      %v2766 = vpop.f32.mrf.mxu0
      %v2767 = vadd.f32 %v2654, %v2766
      %v2768 = vpop.f32.mrf.mxu0
      %v2769 = vadd.f32 %v2656, %v2768
      %v2770 = vpop.f32.mrf.mxu0
      %v2771 = vadd.f32 %v2658, %v2770
      %v2772 = vpop.f32.mrf.mxu0
      %v2773 = vadd.f32 %v2660, %v2772
      %2774 = vmatprep.mubr.bf16.mxu0 %v819
      %2775 = vmatmul.mubr.bf16.gmra.mxu0 %v818
      %v2776 = vpop.f32.mrf.mxu0
      %v2777 = vadd.f32 %v2664, %v2776
      %v2778 = vpop.f32.mrf.mxu0
      %v2779 = vadd.f32 %v2666, %v2778
      %v2780 = vpop.f32.mrf.mxu0
      %v2781 = vadd.f32 %v2668, %v2780
      %v2782 = vpop.f32.mrf.mxu0
      %v2783 = vadd.f32 %v2670, %v2782
      %2784 = vmatprep.mubr.bf16.mxu0 %v826
      %2785 = vmatmul.mubr.bf16.gmra.mxu0 %v825
      %v2786 = vpop.f32.mrf.mxu0
      %v2787 = vadd.f32 %v2674, %v2786
      %v2788 = vpop.f32.mrf.mxu0
      %v2789 = vadd.f32 %v2676, %v2788
      %v2790 = vpop.f32.mrf.mxu0
      %v2791 = vadd.f32 %v2678, %v2790
      %v2792 = vpop.f32.mrf.mxu0
      %v2793 = vadd.f32 %v2680, %v2792
      %2794 = vdwg.mxu0
      %2795 = vmatprep.subr.bf16.mxu0 %v1779
      %2796 = vmatpush1.bf16.msra.mxu0 %v1778
      %2797 = vmatprep.subr.bf16.mxu0 %v1775
      %2798 = vmatpush1.bf16.msra.mxu0 %v1774
      %2799 = vmatprep.subr.bf16.mxu0 %v1771
      %2800 = vmatpush1.bf16.msra.mxu0 %v1770
      %2801 = vmatprep.subr.bf16.mxu0 %v1767
      %2802 = vmatpush1.bf16.msra.mxu0 %v1766
      %2803 = vmatprep.subr.bf16.mxu0 %v1763
      %2804 = vmatpush1.bf16.msra.mxu0 %v1762
      %2805 = vmatprep.subr.bf16.mxu0 %v1759
      %2806 = vmatpush1.bf16.msra.mxu0 %v1758
      %2807 = vmatprep.subr.bf16.mxu0 %v1755
      %2808 = vmatpush1.bf16.msra.mxu0 %v1754
      %2809 = vmatprep.subr.bf16.mxu0 %v1751
      %2810 = vmatpush1.bf16.msra.mxu0 %v1750
      %2811 = vmatprep.subr.bf16.mxu0 0
      %2812 = vmatpush2.bf16.msra.mxu0 0
      %2813 = vmatprep.subr.bf16.mxu0 0
      %2814 = vmatpush2.bf16.msra.mxu0 0
      %2815 = vmatprep.subr.bf16.mxu0 0
      %2816 = vmatpush2.bf16.msra.mxu0 0
      %2817 = vmatprep.subr.bf16.mxu0 0
      %2818 = vmatpush2.bf16.msra.mxu0 0
      %2819 = vmatprep.subr.bf16.mxu0 0
      %2820 = vmatpush2.bf16.msra.mxu0 0
      %2821 = vmatprep.subr.bf16.mxu0 0
      %2822 = vmatpush2.bf16.msra.mxu0 0
      %2823 = vmatprep.subr.bf16.mxu0 0
      %2824 = vmatpush2.bf16.msra.mxu0 0
      %2825 = vmatprep.subr.bf16.mxu0 0
      %2826 = vmatpush2.bf16.msra.mxu0 0
      %2827 = vmatprep.mubr.bf16.mxu0 0
      %2828 = vmatmul.mubr.bf16.gmra.mxu0 %v778
      %v2829 = vpop.f32.mrf.mxu0
      %v2830 = vadd.f32 %v2717, %v2829
      %v2831 = vpop.f32.mrf.mxu0
      %v2832 = vadd.f32 %v2719, %v2831
      %v2833 = vpop.f32.mrf.mxu0
      %v2834 = vadd.f32 %v2721, %v2833
      %v2835 = vpop.f32.mrf.mxu0
      %v2836 = vadd.f32 %v2723, %v2835
      %2837 = vmatprep.mubr.bf16.mxu0 0
      %2838 = vmatmul.mubr.bf16.gmra.mxu0 %v785
      %v2839 = vpop.f32.mrf.mxu0
      %v2840 = vadd.f32 %v2727, %v2839
      %v2841 = vpop.f32.mrf.mxu0
      %v2842 = vadd.f32 %v2729, %v2841
      %v2843 = vpop.f32.mrf.mxu0
      %v2844 = vadd.f32 %v2731, %v2843
      %v2845 = vpop.f32.mrf.mxu0
      %v2846 = vadd.f32 %v2733, %v2845
      %2847 = vmatprep.mubr.bf16.mxu0 0
      %2848 = vmatmul.mubr.bf16.gmra.mxu0 %v792
      %v2849 = vpop.f32.mrf.mxu0
      %v2850 = vadd.f32 %v2737, %v2849
      %v2851 = vpop.f32.mrf.mxu0
      %v2852 = vadd.f32 %v2739, %v2851
      %v2853 = vpop.f32.mrf.mxu0
      %v2854 = vadd.f32 %v2741, %v2853
      %v2855 = vpop.f32.mrf.mxu0
      %v2856 = vadd.f32 %v2743, %v2855
      %2857 = vmatprep.mubr.bf16.mxu0 0
      %2858 = vmatmul.mubr.bf16.gmra.mxu0 %v799
      %v2859 = vpop.f32.mrf.mxu0
      %v2860 = vadd.f32 %v2747, %v2859
      %v2861 = vpop.f32.mrf.mxu0
      %v2862 = vadd.f32 %v2749, %v2861
      %v2863 = vpop.f32.mrf.mxu0
      %v2864 = vadd.f32 %v2751, %v2863
      %v2865 = vpop.f32.mrf.mxu0
      %v2866 = vadd.f32 %v2753, %v2865
      %2867 = vmatprep.mubr.bf16.mxu0 0
      %2868 = vmatmul.mubr.bf16.gmra.mxu0 %v806
      %v2869 = vpop.f32.mrf.mxu0
      %v2870 = vadd.f32 %v2757, %v2869
      %v2871 = vpop.f32.mrf.mxu0
      %v2872 = vadd.f32 %v2759, %v2871
      %v2873 = vpop.f32.mrf.mxu0
      %v2874 = vadd.f32 %v2761, %v2873
      %v2875 = vpop.f32.mrf.mxu0
      %v2876 = vadd.f32 %v2763, %v2875
      %2877 = vmatprep.mubr.bf16.mxu0 0
      %2878 = vmatmul.mubr.bf16.gmra.mxu0 %v813
      %v2879 = vpop.f32.mrf.mxu0
      %v2880 = vadd.f32 %v2767, %v2879
      %v2881 = vpop.f32.mrf.mxu0
      %v2882 = vadd.f32 %v2769, %v2881
      %v2883 = vpop.f32.mrf.mxu0
      %v2884 = vadd.f32 %v2771, %v2883
      %v2885 = vpop.f32.mrf.mxu0
      %v2886 = vadd.f32 %v2773, %v2885
      %2887 = vmatprep.mubr.bf16.mxu0 0
      %2888 = vmatmul.mubr.bf16.gmra.mxu0 %v820
      %v2889 = vpop.f32.mrf.mxu0
      %v2890 = vadd.f32 %v2777, %v2889
      %v2891 = vpop.f32.mrf.mxu0
      %v2892 = vadd.f32 %v2779, %v2891
      %v2893 = vpop.f32.mrf.mxu0
      %v2894 = vadd.f32 %v2781, %v2893
      %v2895 = vpop.f32.mrf.mxu0
      %v2896 = vadd.f32 %v2783, %v2895
      %2897 = vmatprep.mubr.bf16.mxu0 0
      %2898 = vmatmul.mubr.bf16.gmra.mxu0 %v827
      %v2899 = vpop.f32.mrf.mxu0
      %v2900 = vadd.f32 %v2787, %v2899
      %v2901 = vpop.f32.mrf.mxu0
      %v2902 = vadd.f32 %v2789, %v2901
      %v2903 = vpop.f32.mrf.mxu0
      %v2904 = vadd.f32 %v2791, %v2903
      %v2905 = vpop.f32.mrf.mxu0
      %v2906 = vadd.f32 %v2793, %v2905
      %2907 = vdwg.mxu0
      %v2908 = vmax.f32 %v2378, 0.0
      %v2909 = vmax.f32 %v2380, 0.0
      %v2910 = vmax.f32 %v2830, 0.0
      %v2911 = vmax.f32 %v2832, 0.0
      %v2912 = vmax.f32 %v2382, 0.0
      %v2913 = vmax.f32 %v2384, 0.0
      %v2914 = vmax.f32 %v2834, 0.0
      %v2915 = vmax.f32 %v2836, 0.0
      %v2916 = vmax.f32 %v2388, 0.0
      %v2917 = vmax.f32 %v2390, 0.0
      %v2918 = vmax.f32 %v2840, 0.0
      %v2919 = vmax.f32 %v2842, 0.0
      %v2920 = vmax.f32 %v2392, 0.0
      %v2921 = vmax.f32 %v2394, 0.0
      %v2922 = vmax.f32 %v2844, 0.0
      %v2923 = vmax.f32 %v2846, 0.0
      %v2924 = vmax.f32 %v2398, 0.0
      %v2925 = vmax.f32 %v2400, 0.0
      %v2926 = vmax.f32 %v2850, 0.0
      %v2927 = vmax.f32 %v2852, 0.0
      %v2928 = vmax.f32 %v2402, 0.0
      %v2929 = vmax.f32 %v2404, 0.0
      %v2930 = vmax.f32 %v2854, 0.0
      %v2931 = vmax.f32 %v2856, 0.0
      %v2932 = vmax.f32 %v2408, 0.0
      %v2933 = vmax.f32 %v2410, 0.0
      %v2934 = vmax.f32 %v2860, 0.0
      %v2935 = vmax.f32 %v2862, 0.0
      %v2936 = vmax.f32 %v2412, 0.0
      %v2937 = vmax.f32 %v2414, 0.0
      %v2938 = vmax.f32 %v2864, 0.0
      %v2939 = vmax.f32 %v2866, 0.0
      %v2940 = vmax.f32 %v2418, 0.0
      %v2941 = vmax.f32 %v2420, 0.0
      %v2942 = vmax.f32 %v2870, 0.0
      %v2943 = vmax.f32 %v2872, 0.0
      %v2944 = vmax.f32 %v2422, 0.0
      %v2945 = vmax.f32 %v2424, 0.0
      %v2946 = vmax.f32 %v2874, 0.0
      %v2947 = vmax.f32 %v2876, 0.0
      %v2948 = vmax.f32 %v2428, 0.0
      %v2949 = vmax.f32 %v2430, 0.0
      %v2950 = vmax.f32 %v2880, 0.0
      %v2951 = vmax.f32 %v2882, 0.0
      %v2952 = vmax.f32 %v2432, 0.0
      %v2953 = vmax.f32 %v2434, 0.0
      %v2954 = vmax.f32 %v2884, 0.0
      %v2955 = vmax.f32 %v2886, 0.0
      %v2956 = vmax.f32 %v2438, 0.0
      %v2957 = vmax.f32 %v2440, 0.0
      %v2958 = vmax.f32 %v2890, 0.0
      %v2959 = vmax.f32 %v2892, 0.0
      %v2960 = vmax.f32 %v2442, 0.0
      %v2961 = vmax.f32 %v2444, 0.0
      %v2962 = vmax.f32 %v2894, 0.0
      %v2963 = vmax.f32 %v2896, 0.0
      %v2964 = vmax.f32 %v2448, 0.0
      %v2965 = vmax.f32 %v2450, 0.0
      %v2966 = vmax.f32 %v2900, 0.0
      %v2967 = vmax.f32 %v2902, 0.0
      %v2968 = vmax.f32 %v2452, 0.0
      %v2969 = vmax.f32 %v2454, 0.0
      %v2970 = vmax.f32 %v2904, 0.0
      %v2971 = vmax.f32 %v2906, 0.0
      %v2972 = vpack.c.bf16 %v2912, %v2908
      %v2973 = vpack.c.bf16 %v2913, %v2909
      %v2974 = vpack.c.bf16 %v2914, %v2910
      %v2975 = vpack.c.bf16 %v2915, %v2911
      %v2976 = vpack.c.bf16 %v2920, %v2916
      %v2977 = vpack.c.bf16 %v2921, %v2917
      %v2978 = vpack.c.bf16 %v2922, %v2918
      %v2979 = vpack.c.bf16 %v2923, %v2919
      %v2980 = vpack.c.bf16 %v2928, %v2924
      %v2981 = vpack.c.bf16 %v2929, %v2925
      %v2982 = vpack.c.bf16 %v2930, %v2926
      %v2983 = vpack.c.bf16 %v2931, %v2927
      %v2984 = vpack.c.bf16 %v2936, %v2932
      %v2985 = vpack.c.bf16 %v2937, %v2933
      %v2986 = vpack.c.bf16 %v2938, %v2934
      %v2987 = vpack.c.bf16 %v2939, %v2935
      %v2988 = vpack.c.bf16 %v2944, %v2940
      %v2989 = vpack.c.bf16 %v2945, %v2941
      %v2990 = vpack.c.bf16 %v2946, %v2942
      %v2991 = vpack.c.bf16 %v2947, %v2943
      %v2992 = vpack.c.bf16 %v2952, %v2948
      %v2993 = vpack.c.bf16 %v2953, %v2949
      %v2994 = vpack.c.bf16 %v2954, %v2950
      %v2995 = vpack.c.bf16 %v2955, %v2951
      %v2996 = vpack.c.bf16 %v2960, %v2956
      %v2997 = vpack.c.bf16 %v2961, %v2957
      %v2998 = vpack.c.bf16 %v2962, %v2958
      %v2999 = vpack.c.bf16 %v2963, %v2959
      %v3000 = vpack.c.bf16 %v2968, %v2964
      %v3001 = vpack.c.bf16 %v2969, %v2965
      %v3002 = vpack.c.bf16 %v2970, %v2966
      %v3003 = vpack.c.bf16 %v2971, %v2967
      %v3004 = vld [vmem:[%s3] sm:$0xff]
      %v3005 = vld [vmem:[%s3 + $0x8] sm:$0xf]
      %v3006 = vld [vmem:[%s3 + $0xc] sm:$0xff]
      %v3007 = vld [vmem:[%s3 + $0x14] sm:$0xf]
      %v3008 = vld [vmem:[%s3 + $0x18] sm:$0xff]
      %v3009 = vld [vmem:[%s3 + $0x20] sm:$0xf]
      %v3010 = vld [vmem:[%s3 + $0x24] sm:$0xff]
      %v3011 = vld [vmem:[%s3 + $0x2c] sm:$0xf]
      %v3012 = vld [vmem:[%s3 + $0x30] sm:$0xff]
      %v3013 = vld [vmem:[%s3 + $0x38] sm:$0xf]
      %v3014 = vld [vmem:[%s3 + $0x3c] sm:$0xff]
      %v3015 = vld [vmem:[%s3 + $0x44] sm:$0xf]
      %v3016 = vld [vmem:[%s3 + $0x48] sm:$0xff]
      %v3017 = vld [vmem:[%s3 + $0x50] sm:$0xf]
      %v3018 = vld [vmem:[%s3 + $0x54] sm:$0xff]
      %v3019 = vld [vmem:[%s3 + $0x5c] sm:$0xf]
      %v3020 = vld [vmem:[%s3 + $0x60] sm:$0xff]
      %v3021 = vld [vmem:[%s3 + $0x68] sm:$0xf]
      %v3022 = vld [vmem:[%s3 + $0x6c] sm:$0xff]
      %v3023 = vld [vmem:[%s3 + $0x74] sm:$0xf]
      %v3024 = vld [vmem:[%s3 + $0x78] sm:$0xff]
      %v3025 = vld [vmem:[%s3 + $0x80] sm:$0xf]
      %v3026 = vld [vmem:[%s3 + $0x84] sm:$0xff]
      %v3027 = vld [vmem:[%s3 + $0x8c] sm:$0xf]
      %v3028 = vld [vmem:[%s3 + $0x90] sm:$0xff]
      %v3029 = vld [vmem:[%s3 + $0x98] sm:$0xf]
      %v3030 = vld [vmem:[%s3 + $0x9c] sm:$0xff]
      %v3031 = vld [vmem:[%s3 + $0xa4] sm:$0xf]
      %v3032 = vld [vmem:[%s3 + $0xa8] sm:$0xff]
      %v3033 = vld [vmem:[%s3 + $0xb0] sm:$0xf]
      %v3034 = vld [vmem:[%s3 + $0xb4] sm:$0xff]
      %v3035 = vld [vmem:[%s3 + $0xbc] sm:$0xf]
      %v3036 = vld [vmem:[%s3 + $0xc0] sm:$0xff]
      %v3037 = vld [vmem:[%s3 + $0xc8] sm:$0xf]
      %v3038 = vld [vmem:[%s3 + $0xcc] sm:$0xff]
      %v3039 = vld [vmem:[%s3 + $0xd4] sm:$0xf]
      %v3040 = vld [vmem:[%s3 + $0xd8] sm:$0xff]
      %v3041 = vld [vmem:[%s3 + $0xe0] sm:$0xf]
      %v3042 = vld [vmem:[%s3 + $0xe4] sm:$0xff]
      %v3043 = vld [vmem:[%s3 + $0xec] sm:$0xf]
      %v3044 = vld [vmem:[%s3 + $0xf0] sm:$0xff]
      %v3045 = vld [vmem:[%s3 + $0xf8] sm:$0xf]
      %v3046 = vld [vmem:[%s3 + $0xfc] sm:$0xff]
      %v3047 = vld [vmem:[%s3 + $0x104] sm:$0xf]
      %v3048 = vld [vmem:[%s3 + $0x108] sm:$0xff]
      %v3049 = vld [vmem:[%s3 + $0x110] sm:$0xf]
      %v3050 = vld [vmem:[%s3 + $0x114] sm:$0xff]
      %v3051 = vld [vmem:[%s3 + $0x11c] sm:$0xf]
      %v3052 = vld [vmem:[%s3 + $0x120] sm:$0xff]
      %v3053 = vld [vmem:[%s3 + $0x128] sm:$0xf]
      %v3054 = vld [vmem:[%s3 + $0x12c] sm:$0xff]
      %v3055 = vld [vmem:[%s3 + $0x134] sm:$0xf]
      %v3056 = vld [vmem:[%s3 + $0x138] sm:$0xff]
      %v3057 = vld [vmem:[%s3 + $0x140] sm:$0xf]
      %v3058 = vld [vmem:[%s3 + $0x144] sm:$0xff]
      %v3059 = vld [vmem:[%s3 + $0x14c] sm:$0xf]
      %v3060 = vld [vmem:[%s3 + $0x150] sm:$0xff]
      %v3061 = vld [vmem:[%s3 + $0x158] sm:$0xf]
      %v3062 = vld [vmem:[%s3 + $0x15c] sm:$0xff]
      %v3063 = vld [vmem:[%s3 + $0x164] sm:$0xf]
      %v3064 = vld [vmem:[%s3 + $0x168] sm:$0xff]
      %v3065 = vld [vmem:[%s3 + $0x170] sm:$0xf]
      %v3066 = vld [vmem:[%s3 + $0x174] sm:$0xff]
      %v3067 = vld [vmem:[%s3 + $0x17c] sm:$0xf]
      %v3068 = vld [vmem:[%s3 + $0x180] sm:$0xff]
      %v3069 = vld [vmem:[%s3 + $0x188] sm:$0xf]
      %v3070 = vld [vmem:[%s3 + $0x18c] sm:$0xff]
      %v3071 = vld [vmem:[%s3 + $0x194] sm:$0xf]
      %v3072 = vld [vmem:[%s3 + $0x198] sm:$0xff]
      %v3073 = vld [vmem:[%s3 + $0x1a0] sm:$0xf]
      %v3074 = vld [vmem:[%s3 + $0x1a4] sm:$0xff]
      %v3075 = vld [vmem:[%s3 + $0x1ac] sm:$0xf]
      %v3076 = vld [vmem:[%s3 + $0x1b0] sm:$0xff]
      %v3077 = vld [vmem:[%s3 + $0x1b8] sm:$0xf]
      %v3078 = vld [vmem:[%s3 + $0x1bc] sm:$0xff]
      %v3079 = vld [vmem:[%s3 + $0x1c4] sm:$0xf]
      %v3080 = vld [vmem:[%s3 + $0x1c8] sm:$0xff]
      %v3081 = vld [vmem:[%s3 + $0x1d0] sm:$0xf]
      %v3082 = vld [vmem:[%s3 + $0x1d4] sm:$0xff]
      %v3083 = vld [vmem:[%s3 + $0x1dc] sm:$0xf]
      %v3084 = vld [vmem:[%s3 + $0x1e0] sm:$0xff]
      %v3085 = vld [vmem:[%s3 + $0x1e8] sm:$0xf]
      %v3086 = vld [vmem:[%s3 + $0x1ec] sm:$0xff]
      %v3087 = vld [vmem:[%s3 + $0x1f4] sm:$0xf]
      %v3088 = vld [vmem:[%s3 + $0x1f8] sm:$0xff]
      %v3089 = vld [vmem:[%s3 + $0x200] sm:$0xf]
      %v3090 = vld [vmem:[%s3 + $0x204] sm:$0xff]
      %v3091 = vld [vmem:[%s3 + $0x20c] sm:$0xf]
      %v3092 = vld [vmem:[%s3 + $0x210] sm:$0xff]
      %v3093 = vld [vmem:[%s3 + $0x218] sm:$0xf]
      %v3094 = vld [vmem:[%s3 + $0x21c] sm:$0xff]
      %v3095 = vld [vmem:[%s3 + $0x224] sm:$0xf]
      %v3096 = vld [vmem:[%s3 + $0x228] sm:$0xff]
      %v3097 = vld [vmem:[%s3 + $0x230] sm:$0xf]
      %v3098 = vld [vmem:[%s3 + $0x234] sm:$0xff]
      %v3099 = vld [vmem:[%s3 + $0x23c] sm:$0xf]
      %v3100 = vld [vmem:[%s3 + $0x240] sm:$0xff]
      %v3101 = vld [vmem:[%s3 + $0x248] sm:$0xf]
      %v3102 = vld [vmem:[%s3 + $0x24c] sm:$0xff]
      %v3103 = vld [vmem:[%s3 + $0x254] sm:$0xf]
      %v3104 = vld [vmem:[%s3 + $0x258] sm:$0xff]
      %v3105 = vld [vmem:[%s3 + $0x260] sm:$0xf]
      %v3106 = vld [vmem:[%s3 + $0x264] sm:$0xff]
      %v3107 = vld [vmem:[%s3 + $0x26c] sm:$0xf]
      %v3108 = vld [vmem:[%s3 + $0x270] sm:$0xff]
      %v3109 = vld [vmem:[%s3 + $0x278] sm:$0xf]
      %v3110 = vld [vmem:[%s3 + $0x27c] sm:$0xff]
      %v3111 = vld [vmem:[%s3 + $0x284] sm:$0xf]
      %v3112 = vld [vmem:[%s3 + $0x288] sm:$0xff]
      %v3113 = vld [vmem:[%s3 + $0x290] sm:$0xf]
      %v3114 = vld [vmem:[%s3 + $0x294] sm:$0xff]
      %v3115 = vld [vmem:[%s3 + $0x29c] sm:$0xf]
      %v3116 = vld [vmem:[%s3 + $0x2a0] sm:$0xff]
      %v3117 = vld [vmem:[%s3 + $0x2a8] sm:$0xf]
      %v3118 = vld [vmem:[%s3 + $0x2ac] sm:$0xff]
      %v3119 = vld [vmem:[%s3 + $0x2b4] sm:$0xf]
      %v3120 = vld [vmem:[%s3 + $0x2b8] sm:$0xff]
      %v3121 = vld [vmem:[%s3 + $0x2c0] sm:$0xf]
      %v3122 = vld [vmem:[%s3 + $0x2c4] sm:$0xff]
      %v3123 = vld [vmem:[%s3 + $0x2cc] sm:$0xf]
      %v3124 = vld [vmem:[%s3 + $0x2d0] sm:$0xff]
      %v3125 = vld [vmem:[%s3 + $0x2d8] sm:$0xf]
      %v3126 = vld [vmem:[%s3 + $0x2dc] sm:$0xff]
      %v3127 = vld [vmem:[%s3 + $0x2e4] sm:$0xf]
      %v3128 = vld [vmem:[%s3 + $0x2e8] sm:$0xff]
      %v3129 = vld [vmem:[%s3 + $0x2f0] sm:$0xf]
      %v3130 = vld [vmem:[%s3 + $0x2f4] sm:$0xff]
      %v3131 = vld [vmem:[%s3 + $0x2fc] sm:$0xf]
      %v3132 = vld [vmem:[%s4] sm:$0x7]
      %v3134 = vlaneseq
      %v3135 = vshrl.u32 %v3134, 7
      %v3136 = vsub.s32 0, %v3135
      %v3137 = vrot.slane %v3132, %v3136
      %v3138 = vlaneseq
      %v3139 = vshrl.u32 %v3138, 7
      %v3140 = vsub.s32 1, %v3139
      %v3141 = vrot.slane %v3132, %v3140
      %v3142 = vlaneseq
      %v3143 = vshrl.u32 %v3142, 7
      %v3144 = vsub.s32 2, %v3143
      %v3145 = vrot.slane %v3132, %v3144
      %v3277 = vunpack.c.l.b16 %v3004
      %v3278 = vunpack.c.h.b16 %v3004
      %v3279 = vunpack.c.l.b16 %v3005
      %v3280 = vunpack.c.l.b16 %v3006
      %v3281 = vunpack.c.h.b16 %v3006
      %v3282 = vunpack.c.l.b16 %v3007
      %v3283 = vunpack.c.l.b16 %v3008
      %v3284 = vunpack.c.h.b16 %v3008
      %v3285 = vunpack.c.l.b16 %v3009
      %v3286 = vunpack.c.l.b16 %v3010
      %v3287 = vunpack.c.h.b16 %v3010
      %v3288 = vunpack.c.l.b16 %v3011
      %v3289 = vunpack.c.l.b16 %v3012
      %v3290 = vunpack.c.h.b16 %v3012
      %v3291 = vunpack.c.l.b16 %v3013
      %v3292 = vunpack.c.l.b16 %v3014
      %v3293 = vunpack.c.h.b16 %v3014
      %v3294 = vunpack.c.l.b16 %v3015
      %v3295 = vunpack.c.l.b16 %v3016
      %v3296 = vunpack.c.h.b16 %v3016
      %v3297 = vunpack.c.l.b16 %v3017
      %v3298 = vunpack.c.l.b16 %v3018
      %v3299 = vunpack.c.h.b16 %v3018
      %v3300 = vunpack.c.l.b16 %v3019
      %v3301 = vunpack.c.l.b16 %v3020
      %v3302 = vunpack.c.h.b16 %v3020
      %v3303 = vunpack.c.l.b16 %v3021
      %v3304 = vunpack.c.l.b16 %v3022
      %v3305 = vunpack.c.h.b16 %v3022
      %v3306 = vunpack.c.l.b16 %v3023
      %v3307 = vunpack.c.l.b16 %v3024
      %v3308 = vunpack.c.h.b16 %v3024
      %v3309 = vunpack.c.l.b16 %v3025
      %v3310 = vunpack.c.l.b16 %v3026
      %v3311 = vunpack.c.h.b16 %v3026
      %v3312 = vunpack.c.l.b16 %v3027
      %v3313 = vunpack.c.l.b16 %v3028
      %v3314 = vunpack.c.h.b16 %v3028
      %v3315 = vunpack.c.l.b16 %v3029
      %v3316 = vunpack.c.l.b16 %v3030
      %v3317 = vunpack.c.h.b16 %v3030
      %v3318 = vunpack.c.l.b16 %v3031
      %v3319 = vunpack.c.l.b16 %v3032
      %v3320 = vunpack.c.h.b16 %v3032
      %v3321 = vunpack.c.l.b16 %v3033
      %v3322 = vunpack.c.l.b16 %v3034
      %v3323 = vunpack.c.h.b16 %v3034
      %v3324 = vunpack.c.l.b16 %v3035
      %v3325 = vunpack.c.l.b16 %v3036
      %v3326 = vunpack.c.h.b16 %v3036
      %v3327 = vunpack.c.l.b16 %v3037
      %v3328 = vunpack.c.l.b16 %v3038
      %v3329 = vunpack.c.h.b16 %v3038
      %v3330 = vunpack.c.l.b16 %v3039
      %v3331 = vunpack.c.l.b16 %v3040
      %v3332 = vunpack.c.h.b16 %v3040
      %v3333 = vunpack.c.l.b16 %v3041
      %v3334 = vunpack.c.l.b16 %v3042
      %v3335 = vunpack.c.h.b16 %v3042
      %v3336 = vunpack.c.l.b16 %v3043
      %v3337 = vunpack.c.l.b16 %v3044
      %v3338 = vunpack.c.h.b16 %v3044
      %v3339 = vunpack.c.l.b16 %v3045
      %v3340 = vunpack.c.l.b16 %v3046
      %v3341 = vunpack.c.h.b16 %v3046
      %v3342 = vunpack.c.l.b16 %v3047
      %v3343 = vunpack.c.l.b16 %v3048
      %v3344 = vunpack.c.h.b16 %v3048
      %v3345 = vunpack.c.l.b16 %v3049
      %v3346 = vunpack.c.l.b16 %v3050
      %v3347 = vunpack.c.h.b16 %v3050
      %v3348 = vunpack.c.l.b16 %v3051
      %v3349 = vunpack.c.l.b16 %v3052
      %v3350 = vunpack.c.h.b16 %v3052
      %v3351 = vunpack.c.l.b16 %v3053
      %v3352 = vunpack.c.l.b16 %v3054
      %v3353 = vunpack.c.h.b16 %v3054
      %v3354 = vunpack.c.l.b16 %v3055
      %v3355 = vunpack.c.l.b16 %v3056
      %v3356 = vunpack.c.h.b16 %v3056
      %v3357 = vunpack.c.l.b16 %v3057
      %v3358 = vunpack.c.l.b16 %v3058
      %v3359 = vunpack.c.h.b16 %v3058
      %v3360 = vunpack.c.l.b16 %v3059
      %v3361 = vunpack.c.l.b16 %v3060
      %v3362 = vunpack.c.h.b16 %v3060
      %v3363 = vunpack.c.l.b16 %v3061
      %v3364 = vunpack.c.l.b16 %v3062
      %v3365 = vunpack.c.h.b16 %v3062
      %v3366 = vunpack.c.l.b16 %v3063
      %v3367 = vunpack.c.l.b16 %v3064
      %v3368 = vunpack.c.h.b16 %v3064
      %v3369 = vunpack.c.l.b16 %v3065
      %v3370 = vunpack.c.l.b16 %v3066
      %v3371 = vunpack.c.h.b16 %v3066
      %v3372 = vunpack.c.l.b16 %v3067
      %v3373 = vunpack.c.l.b16 %v3068
      %v3374 = vunpack.c.h.b16 %v3068
      %v3375 = vunpack.c.l.b16 %v3069
      %v3376 = vunpack.c.l.b16 %v3070
      %v3377 = vunpack.c.h.b16 %v3070
      %v3378 = vunpack.c.l.b16 %v3071
      %v3379 = vunpack.c.l.b16 %v3072
      %v3380 = vunpack.c.h.b16 %v3072
      %v3381 = vunpack.c.l.b16 %v3073
      %v3382 = vunpack.c.l.b16 %v3074
      %v3383 = vunpack.c.h.b16 %v3074
      %v3384 = vunpack.c.l.b16 %v3075
      %v3385 = vunpack.c.l.b16 %v3076
      %v3386 = vunpack.c.h.b16 %v3076
      %v3387 = vunpack.c.l.b16 %v3077
      %v3388 = vunpack.c.l.b16 %v3078
      %v3389 = vunpack.c.h.b16 %v3078
      %v3390 = vunpack.c.l.b16 %v3079
      %v3391 = vunpack.c.l.b16 %v3080
      %v3392 = vunpack.c.h.b16 %v3080
      %v3393 = vunpack.c.l.b16 %v3081
      %v3394 = vunpack.c.l.b16 %v3082
      %v3395 = vunpack.c.h.b16 %v3082
      %v3396 = vunpack.c.l.b16 %v3083
      %v3397 = vunpack.c.l.b16 %v3084
      %v3398 = vunpack.c.h.b16 %v3084
      %v3399 = vunpack.c.l.b16 %v3085
      %v3400 = vunpack.c.l.b16 %v3086
      %v3401 = vunpack.c.h.b16 %v3086
      %v3402 = vunpack.c.l.b16 %v3087
      %v3403 = vunpack.c.l.b16 %v3088
      %v3404 = vunpack.c.h.b16 %v3088
      %v3405 = vunpack.c.l.b16 %v3089
      %v3406 = vunpack.c.l.b16 %v3090
      %v3407 = vunpack.c.h.b16 %v3090
      %v3408 = vunpack.c.l.b16 %v3091
      %v3409 = vunpack.c.l.b16 %v3092
      %v3410 = vunpack.c.h.b16 %v3092
      %v3411 = vunpack.c.l.b16 %v3093
      %v3412 = vunpack.c.l.b16 %v3094
      %v3413 = vunpack.c.h.b16 %v3094
      %v3414 = vunpack.c.l.b16 %v3095
      %v3415 = vunpack.c.l.b16 %v3096
      %v3416 = vunpack.c.h.b16 %v3096
      %v3417 = vunpack.c.l.b16 %v3097
      %v3418 = vunpack.c.l.b16 %v3098
      %v3419 = vunpack.c.h.b16 %v3098
      %v3420 = vunpack.c.l.b16 %v3099
      %v3421 = vunpack.c.l.b16 %v3100
      %v3422 = vunpack.c.h.b16 %v3100
      %v3423 = vunpack.c.l.b16 %v3101
      %v3424 = vunpack.c.l.b16 %v3102
      %v3425 = vunpack.c.h.b16 %v3102
      %v3426 = vunpack.c.l.b16 %v3103
      %v3427 = vunpack.c.l.b16 %v3104
      %v3428 = vunpack.c.h.b16 %v3104
      %v3429 = vunpack.c.l.b16 %v3105
      %v3430 = vunpack.c.l.b16 %v3106
      %v3431 = vunpack.c.h.b16 %v3106
      %v3432 = vunpack.c.l.b16 %v3107
      %v3433 = vunpack.c.l.b16 %v3108
      %v3434 = vunpack.c.h.b16 %v3108
      %v3435 = vunpack.c.l.b16 %v3109
      %v3436 = vunpack.c.l.b16 %v3110
      %v3437 = vunpack.c.h.b16 %v3110
      %v3438 = vunpack.c.l.b16 %v3111
      %v3439 = vunpack.c.l.b16 %v3112
      %v3440 = vunpack.c.h.b16 %v3112
      %v3441 = vunpack.c.l.b16 %v3113
      %v3442 = vunpack.c.l.b16 %v3114
      %v3443 = vunpack.c.h.b16 %v3114
      %v3444 = vunpack.c.l.b16 %v3115
      %v3445 = vunpack.c.l.b16 %v3116
      %v3446 = vunpack.c.h.b16 %v3116
      %v3447 = vunpack.c.l.b16 %v3117
      %v3448 = vunpack.c.l.b16 %v3118
      %v3449 = vunpack.c.h.b16 %v3118
      %v3450 = vunpack.c.l.b16 %v3119
      %v3451 = vunpack.c.l.b16 %v3120
      %v3452 = vunpack.c.h.b16 %v3120
      %v3453 = vunpack.c.l.b16 %v3121
      %v3454 = vunpack.c.l.b16 %v3122
      %v3455 = vunpack.c.h.b16 %v3122
      %v3456 = vunpack.c.l.b16 %v3123
      %v3457 = vunpack.c.l.b16 %v3124
      %v3458 = vunpack.c.h.b16 %v3124
      %v3459 = vunpack.c.l.b16 %v3125
      %v3460 = vunpack.c.l.b16 %v3126
      %v3461 = vunpack.c.h.b16 %v3126
      %v3462 = vunpack.c.l.b16 %v3127
      %v3463 = vunpack.c.l.b16 %v3128
      %v3464 = vunpack.c.h.b16 %v3128
      %v3465 = vunpack.c.l.b16 %v3129
      %v3466 = vunpack.c.l.b16 %v3130
      %v3467 = vunpack.c.h.b16 %v3130
      %v3468 = vunpack.c.l.b16 %v3131
      %v3469 = vpack.c.b16 %v3280, %v3277
      %v3470 = vpack.c.b16 %v3281, %v3278
      %v3471 = vpack.c.b16 %v3282, %v3279
      %v3472 = vpack.c.b16 %v3286, %v3283
      %v3473 = vpack.c.b16 %v3287, %v3284
      %v3474 = vpack.c.b16 %v3288, %v3285
      %v3475 = vpack.c.b16 %v3292, %v3289
      %v3476 = vpack.c.b16 %v3293, %v3290
      %v3477 = vpack.c.b16 %v3294, %v3291
      %v3478 = vpack.c.b16 %v3298, %v3295
      %v3479 = vpack.c.b16 %v3299, %v3296
      %v3480 = vpack.c.b16 %v3300, %v3297
      %v3481 = vpack.c.b16 %v3304, %v3301
      %v3482 = vpack.c.b16 %v3305, %v3302
      %v3483 = vpack.c.b16 %v3306, %v3303
      %v3484 = vpack.c.b16 %v3310, %v3307
      %v3485 = vpack.c.b16 %v3311, %v3308
      %v3486 = vpack.c.b16 %v3312, %v3309
      %v3487 = vpack.c.b16 %v3316, %v3313
      %v3488 = vpack.c.b16 %v3317, %v3314
      %v3489 = vpack.c.b16 %v3318, %v3315
      %v3490 = vpack.c.b16 %v3322, %v3319
      %v3491 = vpack.c.b16 %v3323, %v3320
      %v3492 = vpack.c.b16 %v3324, %v3321
      %v3493 = vpack.c.b16 %v3328, %v3325
      %v3494 = vpack.c.b16 %v3329, %v3326
      %v3495 = vpack.c.b16 %v3330, %v3327
      %v3496 = vpack.c.b16 %v3334, %v3331
      %v3497 = vpack.c.b16 %v3335, %v3332
      %v3498 = vpack.c.b16 %v3336, %v3333
      %v3499 = vpack.c.b16 %v3340, %v3337
      %v3500 = vpack.c.b16 %v3341, %v3338
      %v3501 = vpack.c.b16 %v3342, %v3339
      %v3502 = vpack.c.b16 %v3346, %v3343
      %v3503 = vpack.c.b16 %v3347, %v3344
      %v3504 = vpack.c.b16 %v3348, %v3345
      %v3505 = vpack.c.b16 %v3352, %v3349
      %v3506 = vpack.c.b16 %v3353, %v3350
      %v3507 = vpack.c.b16 %v3354, %v3351
      %v3508 = vpack.c.b16 %v3358, %v3355
      %v3509 = vpack.c.b16 %v3359, %v3356
      %v3510 = vpack.c.b16 %v3360, %v3357
      %v3511 = vpack.c.b16 %v3364, %v3361
      %v3512 = vpack.c.b16 %v3365, %v3362
      %v3513 = vpack.c.b16 %v3366, %v3363
      %v3514 = vpack.c.b16 %v3370, %v3367
      %v3515 = vpack.c.b16 %v3371, %v3368
      %v3516 = vpack.c.b16 %v3372, %v3369
      %v3517 = vpack.c.b16 %v3376, %v3373
      %v3518 = vpack.c.b16 %v3377, %v3374
      %v3519 = vpack.c.b16 %v3378, %v3375
      %v3520 = vpack.c.b16 %v3382, %v3379
      %v3521 = vpack.c.b16 %v3383, %v3380
      %v3522 = vpack.c.b16 %v3384, %v3381
      %v3523 = vpack.c.b16 %v3388, %v3385
      %v3524 = vpack.c.b16 %v3389, %v3386
      %v3525 = vpack.c.b16 %v3390, %v3387
      %v3526 = vpack.c.b16 %v3394, %v3391
      %v3527 = vpack.c.b16 %v3395, %v3392
      %v3528 = vpack.c.b16 %v3396, %v3393
      %v3529 = vpack.c.b16 %v3400, %v3397
      %v3530 = vpack.c.b16 %v3401, %v3398
      %v3531 = vpack.c.b16 %v3402, %v3399
      %v3532 = vpack.c.b16 %v3406, %v3403
      %v3533 = vpack.c.b16 %v3407, %v3404
      %v3534 = vpack.c.b16 %v3408, %v3405
      %v3535 = vpack.c.b16 %v3412, %v3409
      %v3536 = vpack.c.b16 %v3413, %v3410
      %v3537 = vpack.c.b16 %v3414, %v3411
      %v3538 = vpack.c.b16 %v3418, %v3415
      %v3539 = vpack.c.b16 %v3419, %v3416
      %v3540 = vpack.c.b16 %v3420, %v3417
      %v3541 = vpack.c.b16 %v3424, %v3421
      %v3542 = vpack.c.b16 %v3425, %v3422
      %v3543 = vpack.c.b16 %v3426, %v3423
      %v3544 = vpack.c.b16 %v3430, %v3427
      %v3545 = vpack.c.b16 %v3431, %v3428
      %v3546 = vpack.c.b16 %v3432, %v3429
      %v3547 = vpack.c.b16 %v3436, %v3433
      %v3548 = vpack.c.b16 %v3437, %v3434
      %v3549 = vpack.c.b16 %v3438, %v3435
      %v3550 = vpack.c.b16 %v3442, %v3439
      %v3551 = vpack.c.b16 %v3443, %v3440
      %v3552 = vpack.c.b16 %v3444, %v3441
      %v3553 = vpack.c.b16 %v3448, %v3445
      %v3554 = vpack.c.b16 %v3449, %v3446
      %v3555 = vpack.c.b16 %v3450, %v3447
      %v3556 = vpack.c.b16 %v3454, %v3451
      %v3557 = vpack.c.b16 %v3455, %v3452
      %v3558 = vpack.c.b16 %v3456, %v3453
      %v3559 = vpack.c.b16 %v3460, %v3457
      %v3560 = vpack.c.b16 %v3461, %v3458
      %v3561 = vpack.c.b16 %v3462, %v3459
      %v3562 = vpack.c.b16 %v3466, %v3463
      %v3563 = vpack.c.b16 %v3467, %v3464
      %v3564 = vpack.c.b16 %v3468, %v3465
      %3661 = vmatprep.subr.bf16.mxu0 %v3491
      %3662 = vmatpush1.bf16.msra.mxu0 %v3490
      %3663 = vmatprep.subr.bf16.mxu0 %v3488
      %3664 = vmatpush1.bf16.msra.mxu0 %v3487
      %3665 = vmatprep.subr.bf16.mxu0 %v3485
      %3666 = vmatpush1.bf16.msra.mxu0 %v3484
      %3667 = vmatprep.subr.bf16.mxu0 %v3482
      %3668 = vmatpush1.bf16.msra.mxu0 %v3481
      %3669 = vmatprep.subr.bf16.mxu0 %v3479
      %3670 = vmatpush1.bf16.msra.mxu0 %v3478
      %3671 = vmatprep.subr.bf16.mxu0 %v3476
      %3672 = vmatpush1.bf16.msra.mxu0 %v3475
      %3673 = vmatprep.subr.bf16.mxu0 %v3473
      %3674 = vmatpush1.bf16.msra.mxu0 %v3472
      %3675 = vmatprep.subr.bf16.mxu0 %v3470
      %3676 = vmatpush1.bf16.msra.mxu0 %v3469
      %3677 = vmatprep.subr.bf16.mxu0 %v3515
      %3678 = vmatpush2.bf16.msra.mxu0 %v3514
      %3679 = vmatprep.subr.bf16.mxu0 %v3512
      %3680 = vmatpush2.bf16.msra.mxu0 %v3511
      %3681 = vmatprep.subr.bf16.mxu0 %v3509
      %3682 = vmatpush2.bf16.msra.mxu0 %v3508
      %3683 = vmatprep.subr.bf16.mxu0 %v3506
      %3684 = vmatpush2.bf16.msra.mxu0 %v3505
      %3685 = vmatprep.subr.bf16.mxu0 %v3503
      %3686 = vmatpush2.bf16.msra.mxu0 %v3502
      %3687 = vmatprep.subr.bf16.mxu0 %v3500
      %3688 = vmatpush2.bf16.msra.mxu0 %v3499
      %3689 = vmatprep.subr.bf16.mxu0 %v3497
      %3690 = vmatpush2.bf16.msra.mxu0 %v3496
      %3691 = vmatprep.subr.bf16.mxu0 %v3494
      %3692 = vmatpush2.bf16.msra.mxu0 %v3493
      %3693 = vmatprep.mubr.bf16.mxu0 %v2973
      %3694 = vmatmul.mubr.bf16.gmra.mxu0 %v2972
      %v3695 = vpop.f32.mrf.mxu0
      %v3696 = vadd.f32 %v3137, %v3695
      %v3697 = vpop.f32.mrf.mxu0
      %v3698 = vadd.f32 %v3141, %v3697
      %v3699 = vpop.f32.mrf.mxu0
      %v3700 = vadd.f32 %v3137, %v3699
      %v3701 = vpop.f32.mrf.mxu0
      %v3702 = vadd.f32 %v3141, %v3701
      %3703 = vmatprep.mubr.bf16.mxu0 %v2977
      %3704 = vmatmul.mubr.bf16.gmra.mxu0 %v2976
      %v3705 = vpop.f32.mrf.mxu0
      %v3706 = vadd.f32 %v3137, %v3705
      %v3707 = vpop.f32.mrf.mxu0
      %v3708 = vadd.f32 %v3141, %v3707
      %v3709 = vpop.f32.mrf.mxu0
      %v3710 = vadd.f32 %v3137, %v3709
      %v3711 = vpop.f32.mrf.mxu0
      %v3712 = vadd.f32 %v3141, %v3711
      %3713 = vmatprep.mubr.bf16.mxu0 %v2981
      %3714 = vmatmul.mubr.bf16.gmra.mxu0 %v2980
      %v3715 = vpop.f32.mrf.mxu0
      %v3716 = vadd.f32 %v3137, %v3715
      %v3717 = vpop.f32.mrf.mxu0
      %v3718 = vadd.f32 %v3141, %v3717
      %v3719 = vpop.f32.mrf.mxu0
      %v3720 = vadd.f32 %v3137, %v3719
      %v3721 = vpop.f32.mrf.mxu0
      %v3722 = vadd.f32 %v3141, %v3721
      %3723 = vmatprep.mubr.bf16.mxu0 %v2985
      %3724 = vmatmul.mubr.bf16.gmra.mxu0 %v2984
      %v3725 = vpop.f32.mrf.mxu0
      %v3726 = vadd.f32 %v3137, %v3725
      %v3727 = vpop.f32.mrf.mxu0
      %v3728 = vadd.f32 %v3141, %v3727
      %v3729 = vpop.f32.mrf.mxu0
      %v3730 = vadd.f32 %v3137, %v3729
      %v3731 = vpop.f32.mrf.mxu0
      %v3732 = vadd.f32 %v3141, %v3731
      %3733 = vmatprep.mubr.bf16.mxu0 %v2989
      %3734 = vmatmul.mubr.bf16.gmra.mxu0 %v2988
      %v3735 = vpop.f32.mrf.mxu0
      %v3736 = vadd.f32 %v3137, %v3735
      %v3737 = vpop.f32.mrf.mxu0
      %v3738 = vadd.f32 %v3141, %v3737
      %v3739 = vpop.f32.mrf.mxu0
      %v3740 = vadd.f32 %v3137, %v3739
      %v3741 = vpop.f32.mrf.mxu0
      %v3742 = vadd.f32 %v3141, %v3741
      %3743 = vmatprep.mubr.bf16.mxu0 %v2993
      %3744 = vmatmul.mubr.bf16.gmra.mxu0 %v2992
      %v3745 = vpop.f32.mrf.mxu0
      %v3746 = vadd.f32 %v3137, %v3745
      %v3747 = vpop.f32.mrf.mxu0
      %v3748 = vadd.f32 %v3141, %v3747
      %v3749 = vpop.f32.mrf.mxu0
      %v3750 = vadd.f32 %v3137, %v3749
      %v3751 = vpop.f32.mrf.mxu0
      %v3752 = vadd.f32 %v3141, %v3751
      %3753 = vmatprep.mubr.bf16.mxu0 %v2997
      %3754 = vmatmul.mubr.bf16.gmra.mxu0 %v2996
      %v3755 = vpop.f32.mrf.mxu0
      %v3756 = vadd.f32 %v3137, %v3755
      %v3757 = vpop.f32.mrf.mxu0
      %v3758 = vadd.f32 %v3141, %v3757
      %v3759 = vpop.f32.mrf.mxu0
      %v3760 = vadd.f32 %v3137, %v3759
      %v3761 = vpop.f32.mrf.mxu0
      %v3762 = vadd.f32 %v3141, %v3761
      %3763 = vmatprep.mubr.bf16.mxu0 %v3001
      %3764 = vmatmul.mubr.bf16.gmra.mxu0 %v3000
      %v3765 = vpop.f32.mrf.mxu0
      %v3766 = vadd.f32 %v3137, %v3765
      %v3767 = vpop.f32.mrf.mxu0
      %v3768 = vadd.f32 %v3141, %v3767
      %v3769 = vpop.f32.mrf.mxu0
      %v3770 = vadd.f32 %v3137, %v3769
      %v3771 = vpop.f32.mrf.mxu0
      %v3772 = vadd.f32 %v3141, %v3771
      %3773 = vdwg.mxu0
      %3774 = vmatprep.subr.bf16.mxu0 %v3539
      %3775 = vmatpush1.bf16.msra.mxu0 %v3538
      %3776 = vmatprep.subr.bf16.mxu0 %v3536
      %3777 = vmatpush1.bf16.msra.mxu0 %v3535
      %3778 = vmatprep.subr.bf16.mxu0 %v3533
      %3779 = vmatpush1.bf16.msra.mxu0 %v3532
      %3780 = vmatprep.subr.bf16.mxu0 %v3530
      %3781 = vmatpush1.bf16.msra.mxu0 %v3529
      %3782 = vmatprep.subr.bf16.mxu0 %v3527
      %3783 = vmatpush1.bf16.msra.mxu0 %v3526
      %3784 = vmatprep.subr.bf16.mxu0 %v3524
      %3785 = vmatpush1.bf16.msra.mxu0 %v3523
      %3786 = vmatprep.subr.bf16.mxu0 %v3521
      %3787 = vmatpush1.bf16.msra.mxu0 %v3520
      %3788 = vmatprep.subr.bf16.mxu0 %v3518
      %3789 = vmatpush1.bf16.msra.mxu0 %v3517
      %3790 = vmatprep.subr.bf16.mxu0 %v3563
      %3791 = vmatpush2.bf16.msra.mxu0 %v3562
      %3792 = vmatprep.subr.bf16.mxu0 %v3560
      %3793 = vmatpush2.bf16.msra.mxu0 %v3559
      %3794 = vmatprep.subr.bf16.mxu0 %v3557
      %3795 = vmatpush2.bf16.msra.mxu0 %v3556
      %3796 = vmatprep.subr.bf16.mxu0 %v3554
      %3797 = vmatpush2.bf16.msra.mxu0 %v3553
      %3798 = vmatprep.subr.bf16.mxu0 %v3551
      %3799 = vmatpush2.bf16.msra.mxu0 %v3550
      %3800 = vmatprep.subr.bf16.mxu0 %v3548
      %3801 = vmatpush2.bf16.msra.mxu0 %v3547
      %3802 = vmatprep.subr.bf16.mxu0 %v3545
      %3803 = vmatpush2.bf16.msra.mxu0 %v3544
      %3804 = vmatprep.subr.bf16.mxu0 %v3542
      %3805 = vmatpush2.bf16.msra.mxu0 %v3541
      %3806 = vmatprep.mubr.bf16.mxu0 %v2975
      %3807 = vmatmul.mubr.bf16.gmra.mxu0 %v2974
      %v3808 = vpop.f32.mrf.mxu0
      %v3809 = vadd.f32 %v3696, %v3808
      %v3810 = vpop.f32.mrf.mxu0
      %v3811 = vadd.f32 %v3698, %v3810
      %v3812 = vpop.f32.mrf.mxu0
      %v3813 = vadd.f32 %v3700, %v3812
      %v3814 = vpop.f32.mrf.mxu0
      %v3815 = vadd.f32 %v3702, %v3814
      %3816 = vmatprep.mubr.bf16.mxu0 %v2979
      %3817 = vmatmul.mubr.bf16.gmra.mxu0 %v2978
      %v3818 = vpop.f32.mrf.mxu0
      %v3819 = vadd.f32 %v3706, %v3818
      %v3820 = vpop.f32.mrf.mxu0
      %v3821 = vadd.f32 %v3708, %v3820
      %v3822 = vpop.f32.mrf.mxu0
      %v3823 = vadd.f32 %v3710, %v3822
      %v3824 = vpop.f32.mrf.mxu0
      %v3825 = vadd.f32 %v3712, %v3824
      %3826 = vmatprep.mubr.bf16.mxu0 %v2983
      %3827 = vmatmul.mubr.bf16.gmra.mxu0 %v2982
      %v3828 = vpop.f32.mrf.mxu0
      %v3829 = vadd.f32 %v3716, %v3828
      %v3830 = vpop.f32.mrf.mxu0
      %v3831 = vadd.f32 %v3718, %v3830
      %v3832 = vpop.f32.mrf.mxu0
      %v3833 = vadd.f32 %v3720, %v3832
      %v3834 = vpop.f32.mrf.mxu0
      %v3835 = vadd.f32 %v3722, %v3834
      %3836 = vmatprep.mubr.bf16.mxu0 %v2987
      %3837 = vmatmul.mubr.bf16.gmra.mxu0 %v2986
      %v3838 = vpop.f32.mrf.mxu0
      %v3839 = vadd.f32 %v3726, %v3838
      %v3840 = vpop.f32.mrf.mxu0
      %v3841 = vadd.f32 %v3728, %v3840
      %v3842 = vpop.f32.mrf.mxu0
      %v3843 = vadd.f32 %v3730, %v3842
      %v3844 = vpop.f32.mrf.mxu0
      %v3845 = vadd.f32 %v3732, %v3844
      %3846 = vmatprep.mubr.bf16.mxu0 %v2991
      %3847 = vmatmul.mubr.bf16.gmra.mxu0 %v2990
      %v3848 = vpop.f32.mrf.mxu0
      %v3849 = vadd.f32 %v3736, %v3848
      %v3850 = vpop.f32.mrf.mxu0
      %v3851 = vadd.f32 %v3738, %v3850
      %v3852 = vpop.f32.mrf.mxu0
      %v3853 = vadd.f32 %v3740, %v3852
      %v3854 = vpop.f32.mrf.mxu0
      %v3855 = vadd.f32 %v3742, %v3854
      %3856 = vmatprep.mubr.bf16.mxu0 %v2995
      %3857 = vmatmul.mubr.bf16.gmra.mxu0 %v2994
      %v3858 = vpop.f32.mrf.mxu0
      %v3859 = vadd.f32 %v3746, %v3858
      %v3860 = vpop.f32.mrf.mxu0
      %v3861 = vadd.f32 %v3748, %v3860
      %v3862 = vpop.f32.mrf.mxu0
      %v3863 = vadd.f32 %v3750, %v3862
      %v3864 = vpop.f32.mrf.mxu0
      %v3865 = vadd.f32 %v3752, %v3864
      %3866 = vmatprep.mubr.bf16.mxu0 %v2999
      %3867 = vmatmul.mubr.bf16.gmra.mxu0 %v2998
      %v3868 = vpop.f32.mrf.mxu0
      %v3869 = vadd.f32 %v3756, %v3868
      %v3870 = vpop.f32.mrf.mxu0
      %v3871 = vadd.f32 %v3758, %v3870
      %v3872 = vpop.f32.mrf.mxu0
      %v3873 = vadd.f32 %v3760, %v3872
      %v3874 = vpop.f32.mrf.mxu0
      %v3875 = vadd.f32 %v3762, %v3874
      %3876 = vmatprep.mubr.bf16.mxu0 %v3003
      %3877 = vmatmul.mubr.bf16.gmra.mxu0 %v3002
      %v3878 = vpop.f32.mrf.mxu0
      %v3879 = vadd.f32 %v3766, %v3878
      %v3880 = vpop.f32.mrf.mxu0
      %v3881 = vadd.f32 %v3768, %v3880
      %v3882 = vpop.f32.mrf.mxu0
      %v3883 = vadd.f32 %v3770, %v3882
      %v3884 = vpop.f32.mrf.mxu0
      %v3885 = vadd.f32 %v3772, %v3884
      %3886 = vdwg.mxu0
      %3887 = vmatprep.subr.bf16.mxu0 0
      %3888 = vmatpush1.bf16.msra.mxu0 %v3492
      %3889 = vmatprep.subr.bf16.mxu0 0
      %3890 = vmatpush1.bf16.msra.mxu0 %v3489
      %3891 = vmatprep.subr.bf16.mxu0 0
      %3892 = vmatpush1.bf16.msra.mxu0 %v3486
      %3893 = vmatprep.subr.bf16.mxu0 0
      %3894 = vmatpush1.bf16.msra.mxu0 %v3483
      %3895 = vmatprep.subr.bf16.mxu0 0
      %3896 = vmatpush1.bf16.msra.mxu0 %v3480
      %3897 = vmatprep.subr.bf16.mxu0 0
      %3898 = vmatpush1.bf16.msra.mxu0 %v3477
      %3899 = vmatprep.subr.bf16.mxu0 0
      %3900 = vmatpush1.bf16.msra.mxu0 %v3474
      %3901 = vmatprep.subr.bf16.mxu0 0
      %3902 = vmatpush1.bf16.msra.mxu0 %v3471
      %3903 = vmatprep.subr.bf16.mxu0 0
      %3904 = vmatpush2.bf16.msra.mxu0 %v3516
      %3905 = vmatprep.subr.bf16.mxu0 0
      %3906 = vmatpush2.bf16.msra.mxu0 %v3513
      %3907 = vmatprep.subr.bf16.mxu0 0
      %3908 = vmatpush2.bf16.msra.mxu0 %v3510
      %3909 = vmatprep.subr.bf16.mxu0 0
      %3910 = vmatpush2.bf16.msra.mxu0 %v3507
      %3911 = vmatprep.subr.bf16.mxu0 0
      %3912 = vmatpush2.bf16.msra.mxu0 %v3504
      %3913 = vmatprep.subr.bf16.mxu0 0
      %3914 = vmatpush2.bf16.msra.mxu0 %v3501
      %3915 = vmatprep.subr.bf16.mxu0 0
      %3916 = vmatpush2.bf16.msra.mxu0 %v3498
      %3917 = vmatprep.subr.bf16.mxu0 0
      %3918 = vmatpush2.bf16.msra.mxu0 %v3495
      %3919 = vmatprep.mubr.bf16.mxu0 %v2973
      %3920 = vmatmul.mubr.bf16.gmra.mxu0 %v2972
      %v3921 = vpop.f32.mrf.mxu0
      %v3922 = vadd.f32 %v3145, %v3921
      %v3923 = vpop.f32.mrf.mxu0
      %v3924 = vpop.f32.mrf.mxu0
      %v3925 = vadd.f32 %v3145, %v3924
      %v3926 = vpop.f32.mrf.mxu0
      %3927 = vmatprep.mubr.bf16.mxu0 %v2977
      %3928 = vmatmul.mubr.bf16.gmra.mxu0 %v2976
      %v3929 = vpop.f32.mrf.mxu0
      %v3930 = vadd.f32 %v3145, %v3929
      %v3931 = vpop.f32.mrf.mxu0
      %v3932 = vpop.f32.mrf.mxu0
      %v3933 = vadd.f32 %v3145, %v3932
      %v3934 = vpop.f32.mrf.mxu0
      %3935 = vmatprep.mubr.bf16.mxu0 %v2981
      %3936 = vmatmul.mubr.bf16.gmra.mxu0 %v2980
      %v3937 = vpop.f32.mrf.mxu0
      %v3938 = vadd.f32 %v3145, %v3937
      %v3939 = vpop.f32.mrf.mxu0
      %v3940 = vpop.f32.mrf.mxu0
      %v3941 = vadd.f32 %v3145, %v3940
      %v3942 = vpop.f32.mrf.mxu0
      %3943 = vmatprep.mubr.bf16.mxu0 %v2985
      %3944 = vmatmul.mubr.bf16.gmra.mxu0 %v2984
      %v3945 = vpop.f32.mrf.mxu0
      %v3946 = vadd.f32 %v3145, %v3945
      %v3947 = vpop.f32.mrf.mxu0
      %v3948 = vpop.f32.mrf.mxu0
      %v3949 = vadd.f32 %v3145, %v3948
      %v3950 = vpop.f32.mrf.mxu0
      %3951 = vmatprep.mubr.bf16.mxu0 %v2989
      %3952 = vmatmul.mubr.bf16.gmra.mxu0 %v2988
      %v3953 = vpop.f32.mrf.mxu0
      %v3954 = vadd.f32 %v3145, %v3953
      %v3955 = vpop.f32.mrf.mxu0
      %v3956 = vpop.f32.mrf.mxu0
      %v3957 = vadd.f32 %v3145, %v3956
      %v3958 = vpop.f32.mrf.mxu0
      %3959 = vmatprep.mubr.bf16.mxu0 %v2993
      %3960 = vmatmul.mubr.bf16.gmra.mxu0 %v2992
      %v3961 = vpop.f32.mrf.mxu0
      %v3962 = vadd.f32 %v3145, %v3961
      %v3963 = vpop.f32.mrf.mxu0
      %v3964 = vpop.f32.mrf.mxu0
      %v3965 = vadd.f32 %v3145, %v3964
      %v3966 = vpop.f32.mrf.mxu0
      %3967 = vmatprep.mubr.bf16.mxu0 %v2997
      %3968 = vmatmul.mubr.bf16.gmra.mxu0 %v2996
      %v3969 = vpop.f32.mrf.mxu0
      %v3970 = vadd.f32 %v3145, %v3969
      %v3971 = vpop.f32.mrf.mxu0
      %v3972 = vpop.f32.mrf.mxu0
      %v3973 = vadd.f32 %v3145, %v3972
      %v3974 = vpop.f32.mrf.mxu0
      %3975 = vmatprep.mubr.bf16.mxu0 %v3001
      %3976 = vmatmul.mubr.bf16.gmra.mxu0 %v3000
      %v3977 = vpop.f32.mrf.mxu0
      %v3978 = vadd.f32 %v3145, %v3977
      %v3979 = vpop.f32.mrf.mxu0
      %v3980 = vpop.f32.mrf.mxu0
      %v3981 = vadd.f32 %v3145, %v3980
      %v3982 = vpop.f32.mrf.mxu0
      %3983 = vdwg.mxu0
      %3984 = vmatprep.subr.bf16.mxu0 0
      %3985 = vmatpush1.bf16.msra.mxu0 %v3540
      %3986 = vmatprep.subr.bf16.mxu0 0
      %3987 = vmatpush1.bf16.msra.mxu0 %v3537
      %3988 = vmatprep.subr.bf16.mxu0 0
      %3989 = vmatpush1.bf16.msra.mxu0 %v3534
      %3990 = vmatprep.subr.bf16.mxu0 0
      %3991 = vmatpush1.bf16.msra.mxu0 %v3531
      %3992 = vmatprep.subr.bf16.mxu0 0
      %3993 = vmatpush1.bf16.msra.mxu0 %v3528
      %3994 = vmatprep.subr.bf16.mxu0 0
      %3995 = vmatpush1.bf16.msra.mxu0 %v3525
      %3996 = vmatprep.subr.bf16.mxu0 0
      %3997 = vmatpush1.bf16.msra.mxu0 %v3522
      %3998 = vmatprep.subr.bf16.mxu0 0
      %3999 = vmatpush1.bf16.msra.mxu0 %v3519
      %4000 = vmatprep.subr.bf16.mxu0 0
      %4001 = vmatpush2.bf16.msra.mxu0 %v3564
      %4002 = vmatprep.subr.bf16.mxu0 0
      %4003 = vmatpush2.bf16.msra.mxu0 %v3561
      %4004 = vmatprep.subr.bf16.mxu0 0
      %4005 = vmatpush2.bf16.msra.mxu0 %v3558
      %4006 = vmatprep.subr.bf16.mxu0 0
      %4007 = vmatpush2.bf16.msra.mxu0 %v3555
      %4008 = vmatprep.subr.bf16.mxu0 0
      %4009 = vmatpush2.bf16.msra.mxu0 %v3552
      %4010 = vmatprep.subr.bf16.mxu0 0
      %4011 = vmatpush2.bf16.msra.mxu0 %v3549
      %4012 = vmatprep.subr.bf16.mxu0 0
      %4013 = vmatpush2.bf16.msra.mxu0 %v3546
      %4014 = vmatprep.subr.bf16.mxu0 0
      %4015 = vmatpush2.bf16.msra.mxu0 %v3543
      %4016 = vmatprep.mubr.bf16.mxu0 %v2975
      %4017 = vmatmul.mubr.bf16.gmra.mxu0 %v2974
      %v4018 = vpop.f32.mrf.mxu0
      %v4019 = vadd.f32 %v3922, %v4018
      %v4020 = vpop.f32.mrf.mxu0
      %v4021 = vpop.f32.mrf.mxu0
      %v4022 = vadd.f32 %v3925, %v4021
      %v4023 = vpop.f32.mrf.mxu0
      %4024 = vmatprep.mubr.bf16.mxu0 %v2979
      %4025 = vmatmul.mubr.bf16.gmra.mxu0 %v2978
      %v4026 = vpop.f32.mrf.mxu0
      %v4027 = vadd.f32 %v3930, %v4026
      %v4028 = vpop.f32.mrf.mxu0
      %v4029 = vpop.f32.mrf.mxu0
      %v4030 = vadd.f32 %v3933, %v4029
      %v4031 = vpop.f32.mrf.mxu0
      %4032 = vmatprep.mubr.bf16.mxu0 %v2983
      %4033 = vmatmul.mubr.bf16.gmra.mxu0 %v2982
      %v4034 = vpop.f32.mrf.mxu0
      %v4035 = vadd.f32 %v3938, %v4034
      %v4036 = vpop.f32.mrf.mxu0
      %v4037 = vpop.f32.mrf.mxu0
      %v4038 = vadd.f32 %v3941, %v4037
      %v4039 = vpop.f32.mrf.mxu0
      %4040 = vmatprep.mubr.bf16.mxu0 %v2987
      %4041 = vmatmul.mubr.bf16.gmra.mxu0 %v2986
      %v4042 = vpop.f32.mrf.mxu0
      %v4043 = vadd.f32 %v3946, %v4042
      %v4044 = vpop.f32.mrf.mxu0
      %v4045 = vpop.f32.mrf.mxu0
      %v4046 = vadd.f32 %v3949, %v4045
      %v4047 = vpop.f32.mrf.mxu0
      %4048 = vmatprep.mubr.bf16.mxu0 %v2991
      %4049 = vmatmul.mubr.bf16.gmra.mxu0 %v2990
      %v4050 = vpop.f32.mrf.mxu0
      %v4051 = vadd.f32 %v3954, %v4050
      %v4052 = vpop.f32.mrf.mxu0
      %v4053 = vpop.f32.mrf.mxu0
      %v4054 = vadd.f32 %v3957, %v4053
      %v4055 = vpop.f32.mrf.mxu0
      %4056 = vmatprep.mubr.bf16.mxu0 %v2995
      %4057 = vmatmul.mubr.bf16.gmra.mxu0 %v2994
      %v4058 = vpop.f32.mrf.mxu0
      %v4059 = vadd.f32 %v3962, %v4058
      %v4060 = vpop.f32.mrf.mxu0
      %v4061 = vpop.f32.mrf.mxu0
      %v4062 = vadd.f32 %v3965, %v4061
      %v4063 = vpop.f32.mrf.mxu0
      %4064 = vmatprep.mubr.bf16.mxu0 %v2999
      %4065 = vmatmul.mubr.bf16.gmra.mxu0 %v2998
      %v4066 = vpop.f32.mrf.mxu0
      %v4067 = vadd.f32 %v3970, %v4066
      %v4068 = vpop.f32.mrf.mxu0
      %v4069 = vpop.f32.mrf.mxu0
      %v4070 = vadd.f32 %v3973, %v4069
      %v4071 = vpop.f32.mrf.mxu0
      %4072 = vmatprep.mubr.bf16.mxu0 %v3003
      %4073 = vmatmul.mubr.bf16.gmra.mxu0 %v3002
      %v4074 = vpop.f32.mrf.mxu0
      %v4075 = vadd.f32 %v3978, %v4074
      %v4076 = vpop.f32.mrf.mxu0
      %v4077 = vpop.f32.mrf.mxu0
      %v4078 = vadd.f32 %v3981, %v4077
      %v4079 = vpop.f32.mrf.mxu0
      %4080 = vdwg.mxu0
      %v4081 = vmax.f32 %v3809, 0.0
      %v4082 = vmax.f32 %v3811, 0.0
      %v4083 = vmax.f32 %v4019, 0.0
      %v4084 = vmax.f32 %v3813, 0.0
      %v4085 = vmax.f32 %v3815, 0.0
      %v4086 = vmax.f32 %v4022, 0.0
      %v4087 = vmax.f32 %v3819, 0.0
      %v4088 = vmax.f32 %v3821, 0.0
      %v4089 = vmax.f32 %v4027, 0.0
      %v4090 = vmax.f32 %v3823, 0.0
      %v4091 = vmax.f32 %v3825, 0.0
      %v4092 = vmax.f32 %v4030, 0.0
      %v4093 = vmax.f32 %v3829, 0.0
      %v4094 = vmax.f32 %v3831, 0.0
      %v4095 = vmax.f32 %v4035, 0.0
      %v4096 = vmax.f32 %v3833, 0.0
      %v4097 = vmax.f32 %v3835, 0.0
      %v4098 = vmax.f32 %v4038, 0.0
      %v4099 = vmax.f32 %v3839, 0.0
      %v4100 = vmax.f32 %v3841, 0.0
      %v4101 = vmax.f32 %v4043, 0.0
      %v4102 = vmax.f32 %v3843, 0.0
      %v4103 = vmax.f32 %v3845, 0.0
      %v4104 = vmax.f32 %v4046, 0.0
      %v4105 = vmax.f32 %v3849, 0.0
      %v4106 = vmax.f32 %v3851, 0.0
      %v4107 = vmax.f32 %v4051, 0.0
      %v4108 = vmax.f32 %v3853, 0.0
      %v4109 = vmax.f32 %v3855, 0.0
      %v4110 = vmax.f32 %v4054, 0.0
      %v4111 = vmax.f32 %v3859, 0.0
      %v4112 = vmax.f32 %v3861, 0.0
      %v4113 = vmax.f32 %v4059, 0.0
      %v4114 = vmax.f32 %v3863, 0.0
      %v4115 = vmax.f32 %v3865, 0.0
      %v4116 = vmax.f32 %v4062, 0.0
      %v4117 = vmax.f32 %v3869, 0.0
      %v4118 = vmax.f32 %v3871, 0.0
      %v4119 = vmax.f32 %v4067, 0.0
      %v4120 = vmax.f32 %v3873, 0.0
      %v4121 = vmax.f32 %v3875, 0.0
      %v4122 = vmax.f32 %v4070, 0.0
      %v4123 = vmax.f32 %v3879, 0.0
      %v4124 = vmax.f32 %v3881, 0.0
      %v4125 = vmax.f32 %v4075, 0.0
      %v4126 = vmax.f32 %v3883, 0.0
      %v4127 = vmax.f32 %v3885, 0.0
      %v4128 = vmax.f32 %v4078, 0.0
      %v4129 = vpack.c.bf16 %v4084, %v4081
      %v4130 = vpack.c.bf16 %v4085, %v4082
      %v4131 = vpack.c.bf16 %v4086, %v4083
      %v4132 = vpack.c.bf16 %v4090, %v4087
      %v4133 = vpack.c.bf16 %v4091, %v4088
      %v4134 = vpack.c.bf16 %v4092, %v4089
      %v4135 = vpack.c.bf16 %v4096, %v4093
      %v4136 = vpack.c.bf16 %v4097, %v4094
      %v4137 = vpack.c.bf16 %v4098, %v4095
      %v4138 = vpack.c.bf16 %v4102, %v4099
      %v4139 = vpack.c.bf16 %v4103, %v4100
      %v4140 = vpack.c.bf16 %v4104, %v4101
      %v4141 = vpack.c.bf16 %v4108, %v4105
      %v4142 = vpack.c.bf16 %v4109, %v4106
      %v4143 = vpack.c.bf16 %v4110, %v4107
      %v4144 = vpack.c.bf16 %v4114, %v4111
      %v4145 = vpack.c.bf16 %v4115, %v4112
      %v4146 = vpack.c.bf16 %v4116, %v4113
      %v4147 = vpack.c.bf16 %v4120, %v4117
      %v4148 = vpack.c.bf16 %v4121, %v4118
      %v4149 = vpack.c.bf16 %v4122, %v4119
      %v4150 = vpack.c.bf16 %v4126, %v4123
      %v4151 = vpack.c.bf16 %v4127, %v4124
      %v4152 = vpack.c.bf16 %v4128, %v4125
      %v4153 = vld [vmem:[%s5] sm:$0xf]
      %v4154 = vld [vmem:[%s5 + $0x4] sm:$0xf]
      %v4155 = vld [vmem:[%s5 + $0x8] sm:$0xf]
      %v4156 = vld [vmem:[%s5 + $0xc] sm:$0xf]
      %v4157 = vld [vmem:[%s5 + $0x10] sm:$0xf]
      %v4158 = vld [vmem:[%s5 + $0x14] sm:$0xf]
      %v4159 = vld [vmem:[%s5 + $0x18] sm:$0xf]
      %v4160 = vld [vmem:[%s5 + $0x1c] sm:$0xf]
      %v4161 = vld [vmem:[%s5 + $0x20] sm:$0xf]
      %v4162 = vld [vmem:[%s5 + $0x24] sm:$0xf]
      %v4163 = vld [vmem:[%s5 + $0x28] sm:$0xf]
      %v4164 = vld [vmem:[%s5 + $0x2c] sm:$0xf]
      %v4165 = vld [vmem:[%s5 + $0x30] sm:$0xf]
      %v4166 = vld [vmem:[%s5 + $0x34] sm:$0xf]
      %v4167 = vld [vmem:[%s5 + $0x38] sm:$0xf]
      %v4168 = vld [vmem:[%s5 + $0x3c] sm:$0xf]
      %v4169 = vld [vmem:[%s5 + $0x40] sm:$0xf]
      %v4170 = vld [vmem:[%s5 + $0x44] sm:$0xf]
      %v4171 = vld [vmem:[%s5 + $0x48] sm:$0xf]
      %v4172 = vld [vmem:[%s5 + $0x4c] sm:$0xf]
      %v4173 = vld [vmem:[%s5 + $0x50] sm:$0xf]
      %v4174 = vld [vmem:[%s5 + $0x54] sm:$0xf]
      %v4175 = vld [vmem:[%s5 + $0x58] sm:$0xf]
      %v4176 = vld [vmem:[%s5 + $0x5c] sm:$0xf]
      %v4177 = vld [vmem:[%s5 + $0x60] sm:$0xf]
      %v4178 = vld [vmem:[%s5 + $0x64] sm:$0xf]
      %v4179 = vld [vmem:[%s5 + $0x68] sm:$0xf]
      %v4180 = vld [vmem:[%s5 + $0x6c] sm:$0xf]
      %v4181 = vld [vmem:[%s5 + $0x70] sm:$0xf]
      %v4182 = vld [vmem:[%s5 + $0x74] sm:$0xf]
      %v4183 = vld [vmem:[%s5 + $0x78] sm:$0xf]
      %v4184 = vld [vmem:[%s5 + $0x7c] sm:$0xf]
      %v4185 = vld [vmem:[%s5 + $0x80] sm:$0xf]
      %v4186 = vld [vmem:[%s5 + $0x84] sm:$0xf]
      %v4187 = vld [vmem:[%s5 + $0x88] sm:$0xf]
      %v4188 = vld [vmem:[%s5 + $0x8c] sm:$0xf]
      %v4189 = vld [vmem:[%s5 + $0x90] sm:$0xf]
      %v4190 = vld [vmem:[%s5 + $0x94] sm:$0xf]
      %v4191 = vld [vmem:[%s5 + $0x98] sm:$0xf]
      %v4192 = vld [vmem:[%s5 + $0x9c] sm:$0xf]
      %v4193 = vld [vmem:[%s5 + $0xa0] sm:$0xf]
      %v4194 = vld [vmem:[%s5 + $0xa4] sm:$0xf]
      %v4195 = vld [vmem:[%s5 + $0xa8] sm:$0xf]
      %v4196 = vld [vmem:[%s5 + $0xac] sm:$0xf]
      %v4197 = vld [vmem:[%s5 + $0xb0] sm:$0xf]
      %v4198 = vld [vmem:[%s5 + $0xb4] sm:$0xf]
      %v4199 = vld [vmem:[%s5 + $0xb8] sm:$0xf]
      %v4200 = vld [vmem:[%s5 + $0xbc] sm:$0xf]
      %v4201 = vld [vmem:[%s6] sm:$0x1]
      %v4203 = vlaneseq
      %v4204 = vshrl.u32 %v4203, 7
      %v4205 = vsub.s32 0, %v4204
      %v4206 = vrot.slane %v4201, %v4205
      %v4256 = vunpack.c.l.b16 %v4153
      %v4257 = vunpack.c.l.b16 %v4154
      %v4258 = vunpack.c.l.b16 %v4155
      %v4259 = vunpack.c.l.b16 %v4156
      %v4260 = vunpack.c.l.b16 %v4157
      %v4261 = vunpack.c.l.b16 %v4158
      %v4262 = vunpack.c.l.b16 %v4159
      %v4263 = vunpack.c.l.b16 %v4160
      %v4264 = vunpack.c.l.b16 %v4161
      %v4265 = vunpack.c.l.b16 %v4162
      %v4266 = vunpack.c.l.b16 %v4163
      %v4267 = vunpack.c.l.b16 %v4164
      %v4268 = vunpack.c.l.b16 %v4165
      %v4269 = vunpack.c.l.b16 %v4166
      %v4270 = vunpack.c.l.b16 %v4167
      %v4271 = vunpack.c.l.b16 %v4168
      %v4272 = vunpack.c.l.b16 %v4169
      %v4273 = vunpack.c.l.b16 %v4170
      %v4274 = vunpack.c.l.b16 %v4171
      %v4275 = vunpack.c.l.b16 %v4172
      %v4276 = vunpack.c.l.b16 %v4173
      %v4277 = vunpack.c.l.b16 %v4174
      %v4278 = vunpack.c.l.b16 %v4175
      %v4279 = vunpack.c.l.b16 %v4176
      %v4280 = vunpack.c.l.b16 %v4177
      %v4281 = vunpack.c.l.b16 %v4178
      %v4282 = vunpack.c.l.b16 %v4179
      %v4283 = vunpack.c.l.b16 %v4180
      %v4284 = vunpack.c.l.b16 %v4181
      %v4285 = vunpack.c.l.b16 %v4182
      %v4286 = vunpack.c.l.b16 %v4183
      %v4287 = vunpack.c.l.b16 %v4184
      %v4288 = vunpack.c.l.b16 %v4185
      %v4289 = vunpack.c.l.b16 %v4186
      %v4290 = vunpack.c.l.b16 %v4187
      %v4291 = vunpack.c.l.b16 %v4188
      %v4292 = vunpack.c.l.b16 %v4189
      %v4293 = vunpack.c.l.b16 %v4190
      %v4294 = vunpack.c.l.b16 %v4191
      %v4295 = vunpack.c.l.b16 %v4192
      %v4296 = vunpack.c.l.b16 %v4193
      %v4297 = vunpack.c.l.b16 %v4194
      %v4298 = vunpack.c.l.b16 %v4195
      %v4299 = vunpack.c.l.b16 %v4196
      %v4300 = vunpack.c.l.b16 %v4197
      %v4301 = vunpack.c.l.b16 %v4198
      %v4302 = vunpack.c.l.b16 %v4199
      %v4303 = vunpack.c.l.b16 %v4200
      %v4304 = vpack.c.b16 %v4257, %v4256
      %v4305 = vpack.c.b16 %v4259, %v4258
      %v4306 = vpack.c.b16 %v4261, %v4260
      %v4307 = vpack.c.b16 %v4263, %v4262
      %v4308 = vpack.c.b16 %v4265, %v4264
      %v4309 = vpack.c.b16 %v4267, %v4266
      %v4310 = vpack.c.b16 %v4269, %v4268
      %v4311 = vpack.c.b16 %v4271, %v4270
      %v4312 = vpack.c.b16 %v4273, %v4272
      %v4313 = vpack.c.b16 %v4275, %v4274
      %v4314 = vpack.c.b16 %v4277, %v4276
      %v4315 = vpack.c.b16 %v4279, %v4278
      %v4316 = vpack.c.b16 %v4281, %v4280
      %v4317 = vpack.c.b16 %v4283, %v4282
      %v4318 = vpack.c.b16 %v4285, %v4284
      %v4319 = vpack.c.b16 %v4287, %v4286
      %v4320 = vpack.c.b16 %v4289, %v4288
      %v4321 = vpack.c.b16 %v4291, %v4290
      %v4322 = vpack.c.b16 %v4293, %v4292
      %v4323 = vpack.c.b16 %v4295, %v4294
      %v4324 = vpack.c.b16 %v4297, %v4296
      %v4325 = vpack.c.b16 %v4299, %v4298
      %v4326 = vpack.c.b16 %v4301, %v4300
      %v4327 = vpack.c.b16 %v4303, %v4302
      %4352 = vmatprep.subr.bf16.mxu0 0
      %4353 = vmatpush1.bf16.msra.mxu0 %v4311
      %4354 = vmatprep.subr.bf16.mxu0 0
      %4355 = vmatpush1.bf16.msra.mxu0 %v4310
      %4356 = vmatprep.subr.bf16.mxu0 0
      %4357 = vmatpush1.bf16.msra.mxu0 %v4309
      %4358 = vmatprep.subr.bf16.mxu0 0
      %4359 = vmatpush1.bf16.msra.mxu0 %v4308
      %4360 = vmatprep.subr.bf16.mxu0 0
      %4361 = vmatpush1.bf16.msra.mxu0 %v4307
      %4362 = vmatprep.subr.bf16.mxu0 0
      %4363 = vmatpush1.bf16.msra.mxu0 %v4306
      %4364 = vmatprep.subr.bf16.mxu0 0
      %4365 = vmatpush1.bf16.msra.mxu0 %v4305
      %4366 = vmatprep.subr.bf16.mxu0 0
      %4367 = vmatpush1.bf16.msra.mxu0 %v4304
      %4368 = vmatprep.subr.bf16.mxu0 0
      %4369 = vmatpush2.bf16.msra.mxu0 %v4319
      %4370 = vmatprep.subr.bf16.mxu0 0
      %4371 = vmatpush2.bf16.msra.mxu0 %v4318
      %4372 = vmatprep.subr.bf16.mxu0 0
      %4373 = vmatpush2.bf16.msra.mxu0 %v4317
      %4374 = vmatprep.subr.bf16.mxu0 0
      %4375 = vmatpush2.bf16.msra.mxu0 %v4316
      %4376 = vmatprep.subr.bf16.mxu0 0
      %4377 = vmatpush2.bf16.msra.mxu0 %v4315
      %4378 = vmatprep.subr.bf16.mxu0 0
      %4379 = vmatpush2.bf16.msra.mxu0 %v4314
      %4380 = vmatprep.subr.bf16.mxu0 0
      %4381 = vmatpush2.bf16.msra.mxu0 %v4313
      %4382 = vmatprep.subr.bf16.mxu0 0
      %4383 = vmatpush2.bf16.msra.mxu0 %v4312
      %4384 = vmatprep.mubr.bf16.mxu0 %v4130
      %4385 = vmatmul.mubr.bf16.gmra.mxu0 %v4129
      %v4386 = vpop.f32.mrf.mxu0
      %v4387 = vadd.f32 %v4206, %v4386
      %v4388 = vpop.f32.mrf.mxu0
      %v4389 = vpop.f32.mrf.mxu0
      %v4390 = vadd.f32 %v4206, %v4389
      %v4391 = vpop.f32.mrf.mxu0
      %4392 = vmatprep.mubr.bf16.mxu0 %v4133
      %4393 = vmatmul.mubr.bf16.gmra.mxu0 %v4132
      %v4394 = vpop.f32.mrf.mxu0
      %v4395 = vadd.f32 %v4206, %v4394
      %v4396 = vpop.f32.mrf.mxu0
      %v4397 = vpop.f32.mrf.mxu0
      %v4398 = vadd.f32 %v4206, %v4397
      %v4399 = vpop.f32.mrf.mxu0
      %4400 = vmatprep.mubr.bf16.mxu0 %v4136
      %4401 = vmatmul.mubr.bf16.gmra.mxu0 %v4135
      %v4402 = vpop.f32.mrf.mxu0
      %v4403 = vadd.f32 %v4206, %v4402
      %v4404 = vpop.f32.mrf.mxu0
      %v4405 = vpop.f32.mrf.mxu0
      %v4406 = vadd.f32 %v4206, %v4405
      %v4407 = vpop.f32.mrf.mxu0
      %4408 = vmatprep.mubr.bf16.mxu0 %v4139
      %4409 = vmatmul.mubr.bf16.gmra.mxu0 %v4138
      %v4410 = vpop.f32.mrf.mxu0
      %v4411 = vadd.f32 %v4206, %v4410
      %v4412 = vpop.f32.mrf.mxu0
      %v4413 = vpop.f32.mrf.mxu0
      %v4414 = vadd.f32 %v4206, %v4413
      %v4415 = vpop.f32.mrf.mxu0
      %4416 = vmatprep.mubr.bf16.mxu0 %v4142
      %4417 = vmatmul.mubr.bf16.gmra.mxu0 %v4141
      %v4418 = vpop.f32.mrf.mxu0
      %v4419 = vadd.f32 %v4206, %v4418
      %v4420 = vpop.f32.mrf.mxu0
      %v4421 = vpop.f32.mrf.mxu0
      %v4422 = vadd.f32 %v4206, %v4421
      %v4423 = vpop.f32.mrf.mxu0
      %4424 = vmatprep.mubr.bf16.mxu0 %v4145
      %4425 = vmatmul.mubr.bf16.gmra.mxu0 %v4144
      %v4426 = vpop.f32.mrf.mxu0
      %v4427 = vadd.f32 %v4206, %v4426
      %v4428 = vpop.f32.mrf.mxu0
      %v4429 = vpop.f32.mrf.mxu0
      %v4430 = vadd.f32 %v4206, %v4429
      %v4431 = vpop.f32.mrf.mxu0
      %4432 = vmatprep.mubr.bf16.mxu0 %v4148
      %4433 = vmatmul.mubr.bf16.gmra.mxu0 %v4147
      %v4434 = vpop.f32.mrf.mxu0
      %v4435 = vadd.f32 %v4206, %v4434
      %v4436 = vpop.f32.mrf.mxu0
      %v4437 = vpop.f32.mrf.mxu0
      %v4438 = vadd.f32 %v4206, %v4437
      %v4439 = vpop.f32.mrf.mxu0
      %4440 = vmatprep.mubr.bf16.mxu0 %v4151
      %4441 = vmatmul.mubr.bf16.gmra.mxu0 %v4150
      %v4442 = vpop.f32.mrf.mxu0
      %v4443 = vadd.f32 %v4206, %v4442
      %v4444 = vpop.f32.mrf.mxu0
      %v4445 = vpop.f32.mrf.mxu0
      %v4446 = vadd.f32 %v4206, %v4445
      %v4447 = vpop.f32.mrf.mxu0
      %4448 = vdwg.mxu0
      %4449 = vmatprep.subr.bf16.mxu0 0
      %4450 = vmatpush1.bf16.msra.mxu0 %v4327
      %4451 = vmatprep.subr.bf16.mxu0 0
      %4452 = vmatpush1.bf16.msra.mxu0 %v4326
      %4453 = vmatprep.subr.bf16.mxu0 0
      %4454 = vmatpush1.bf16.msra.mxu0 %v4325
      %4455 = vmatprep.subr.bf16.mxu0 0
      %4456 = vmatpush1.bf16.msra.mxu0 %v4324
      %4457 = vmatprep.subr.bf16.mxu0 0
      %4458 = vmatpush1.bf16.msra.mxu0 %v4323
      %4459 = vmatprep.subr.bf16.mxu0 0
      %4460 = vmatpush1.bf16.msra.mxu0 %v4322
      %4461 = vmatprep.subr.bf16.mxu0 0
      %4462 = vmatpush1.bf16.msra.mxu0 %v4321
      %4463 = vmatprep.subr.bf16.mxu0 0
      %4464 = vmatpush1.bf16.msra.mxu0 %v4320
      %4465 = vmatprep.subr.bf16.mxu0 0
      %4466 = vmatpush2.bf16.msra.mxu0 0
      %4467 = vmatprep.subr.bf16.mxu0 0
      %4468 = vmatpush2.bf16.msra.mxu0 0
      %4469 = vmatprep.subr.bf16.mxu0 0
      %4470 = vmatpush2.bf16.msra.mxu0 0
      %4471 = vmatprep.subr.bf16.mxu0 0
      %4472 = vmatpush2.bf16.msra.mxu0 0
      %4473 = vmatprep.subr.bf16.mxu0 0
      %4474 = vmatpush2.bf16.msra.mxu0 0
      %4475 = vmatprep.subr.bf16.mxu0 0
      %4476 = vmatpush2.bf16.msra.mxu0 0
      %4477 = vmatprep.subr.bf16.mxu0 0
      %4478 = vmatpush2.bf16.msra.mxu0 0
      %4479 = vmatprep.subr.bf16.mxu0 0
      %4480 = vmatpush2.bf16.msra.mxu0 0
      %4481 = vmatprep.mubr.bf16.mxu0 0
      %4482 = vmatmul.mubr.bf16.gmra.mxu0 %v4131
      %v4483 = vpop.f32.mrf.mxu0
      %v4484 = vadd.f32 %v4387, %v4483
      %v4485 = vpop.f32.mrf.mxu0
      %v4486 = vpop.f32.mrf.mxu0
      %v4487 = vadd.f32 %v4390, %v4486
      %v4488 = vpop.f32.mrf.mxu0
      %4489 = vmatprep.mubr.bf16.mxu0 0
      %4490 = vmatmul.mubr.bf16.gmra.mxu0 %v4134
      %v4491 = vpop.f32.mrf.mxu0
      %v4492 = vadd.f32 %v4395, %v4491
      %v4493 = vpop.f32.mrf.mxu0
      %v4494 = vpop.f32.mrf.mxu0
      %v4495 = vadd.f32 %v4398, %v4494
      %v4496 = vpop.f32.mrf.mxu0
      %4497 = vmatprep.mubr.bf16.mxu0 0
      %4498 = vmatmul.mubr.bf16.gmra.mxu0 %v4137
      %v4499 = vpop.f32.mrf.mxu0
      %v4500 = vadd.f32 %v4403, %v4499
      %v4501 = vpop.f32.mrf.mxu0
      %v4502 = vpop.f32.mrf.mxu0
      %v4503 = vadd.f32 %v4406, %v4502
      %v4504 = vpop.f32.mrf.mxu0
      %4505 = vmatprep.mubr.bf16.mxu0 0
      %4506 = vmatmul.mubr.bf16.gmra.mxu0 %v4140
      %v4507 = vpop.f32.mrf.mxu0
      %v4508 = vadd.f32 %v4411, %v4507
      %v4509 = vpop.f32.mrf.mxu0
      %v4510 = vpop.f32.mrf.mxu0
      %v4511 = vadd.f32 %v4414, %v4510
      %v4512 = vpop.f32.mrf.mxu0
      %4513 = vmatprep.mubr.bf16.mxu0 0
      %4514 = vmatmul.mubr.bf16.gmra.mxu0 %v4143
      %v4515 = vpop.f32.mrf.mxu0
      %v4516 = vadd.f32 %v4419, %v4515
      %v4517 = vpop.f32.mrf.mxu0
      %v4518 = vpop.f32.mrf.mxu0
      %v4519 = vadd.f32 %v4422, %v4518
      %v4520 = vpop.f32.mrf.mxu0
      %4521 = vmatprep.mubr.bf16.mxu0 0
      %4522 = vmatmul.mubr.bf16.gmra.mxu0 %v4146
      %v4523 = vpop.f32.mrf.mxu0
      %v4524 = vadd.f32 %v4427, %v4523
      %v4525 = vpop.f32.mrf.mxu0
      %v4526 = vpop.f32.mrf.mxu0
      %v4527 = vadd.f32 %v4430, %v4526
      %v4528 = vpop.f32.mrf.mxu0
      %4529 = vmatprep.mubr.bf16.mxu0 0
      %4530 = vmatmul.mubr.bf16.gmra.mxu0 %v4149
      %v4531 = vpop.f32.mrf.mxu0
      %v4532 = vadd.f32 %v4435, %v4531
      %v4533 = vpop.f32.mrf.mxu0
      %v4534 = vpop.f32.mrf.mxu0
      %v4535 = vadd.f32 %v4438, %v4534
      %v4536 = vpop.f32.mrf.mxu0
      %4537 = vmatprep.mubr.bf16.mxu0 0
      %4538 = vmatmul.mubr.bf16.gmra.mxu0 %v4152
      %v4539 = vpop.f32.mrf.mxu0
      %v4540 = vadd.f32 %v4443, %v4539
      %v4541 = vpop.f32.mrf.mxu0
      %v4542 = vpop.f32.mrf.mxu0
      %v4543 = vadd.f32 %v4446, %v4542
      %v4544 = vpop.f32.mrf.mxu0
      %4545 = vdwg.mxu0
      %4546 = vst [vmem:[%s283] sm:$0xff] %v4484
      %4547 = vst [vmem:[%s283 + $0x8] sm:$0xff] %v4487
      %4548 = vst [vmem:[%s283 + $0x10] sm:$0xff] %v4492
      %4549 = vst [vmem:[%s283 + $0x18] sm:$0xff] %v4495
      %4550 = vst [vmem:[%s283 + $0x20] sm:$0xff] %v4500
      %4551 = vst [vmem:[%s283 + $0x28] sm:$0xff] %v4503
      %4552 = vst [vmem:[%s283 + $0x30] sm:$0xff] %v4508
      %4553 = vst [vmem:[%s283 + $0x38] sm:$0xff] %v4511
      %4554 = vst [vmem:[%s283 + $0x40] sm:$0xff] %v4516
      %4555 = vst [vmem:[%s283 + $0x48] sm:$0xff] %v4519
      %4556 = vst [vmem:[%s283 + $0x50] sm:$0xff] %v4524
      %4557 = vst [vmem:[%s283 + $0x58] sm:$0xff] %v4527
      %4558 = vst [vmem:[%s283 + $0x60] sm:$0xff] %v4532
      %4559 = vst [vmem:[%s283 + $0x68] sm:$0xff] %v4535
      %4560 = vst [vmem:[%s283 + $0x70] sm:$0xff] %v4540
      %4561 = vst [vmem:[%s283 + $0x78] sm:$0xff] %v4543
      %s4562 = smul.u32 16, %s18
      %p4563 = scmp.lt.s32.totalorder %s4562, 31
      %s4564 = scalar_select %p4563, %s4562, 31
      %s4565 = smul.addr %s4564, 8
      %s4566 = scalar_lea.vmem %s7, %s4565
      // Predicated region
      $region49: #{neural_net_forward.1} parent=47 // pred_check
        %p4567 = pneg %p188
      $region50: #{neural_net_forward.1} parent=47 // pred_check_branch
        %4569 = sbr.rel (%p4567) target = $region52
      $region51: #{neural_net_forward.1} parent=47 // pred_region
        %s4570 = smul.u32 16, %s18
      $region52: #{neural_net_forward.1} parent=47 // pred_fallthru
        _
    $region48: #{neural_net_forward.1} parent=5 // pred_fallthru
      _
    %p4571 = scmp.le.s32.totalorder 2, %s13
    // Predicated region
    $region53: #{neural_net_forward.1} parent=5 // pred_check
      %p4572 = pneg %p4571
    $region54: #{neural_net_forward.1} parent=5 // pred_check_branch
      %4574 = sbr.rel (%p4572) target = $region56
    $region55: #{neural_net_forward.1} parent=5 // pred_region
      %s4575 = ssub.s32 %s13, 2
      // Predicated region
      $region57: #{neural_net_forward.1} parent=55 // pred_check
        %p4576 = pneg %p194
      $region58: #{neural_net_forward.1} parent=55 // pred_check_branch
        %4578 = sbr.rel (%p4576) target = $region60
      $region59: #{neural_net_forward.1} parent=55 // pred_region
        %s4579 = smul.u32 16, %s19
        %p4580 = scmp.lt.s32.totalorder %s4579, 31
        %s4581 = scalar_select %p4580, %s4579, 31
        %s4582 = smul.addr %s4581, 8
        %s4583 = scalar_lea.vmem %s7, %s4582
      $region60: #{neural_net_forward.1} parent=55 // pred_fallthru
        _
    $region56: #{neural_net_forward.1} parent=5 // pred_fallthru
      _
  $region6: #{neural_net_forward.1} parent=0 // loop_footer
    %s17 = sadd.s32 1, %s13
  $region7: #{neural_net_forward.1} parent=0 // loop_footer_branch
    %12 = sbr.rel target = $region3
  $region8: #{neural_net_forward.1} parent=0 // loop_exit
    _

</llo_original>
